<compile_context>
chip_gen: v7x
topology: tpu7x:2x2x1
jax: 0.10.0
libtpu: 0.0.40
codegen_flags: <defaults>
</compile_context>

<pallas_src>
import functools

import jax
import jax.numpy as jnp
from jax.experimental import pallas as pl
from jax.experimental.pallas import tpu as pltpu


def cbam_kernel(x_ref, w1_ref, b1_ref, w2_ref, b2_ref, sp_ref, o_ref,
                pad_ref, maps_ref, attn_ref, *, Bt, H, W):
    # x_ref block: (Bt, C, H*W) float32 (lane-dense)
    HW = H * W

    # ---- SE channel attention: per-image squeeze, FCs batched over the block ----
    sqs = [jnp.mean(x_ref[b], axis=1, keepdims=True) for b in range(Bt)]  # Bt x (C, 1)
    S = sqs[0] if Bt == 1 else jnp.concatenate(sqs, axis=1)               # (C, Bt)
    h = jnp.dot(w1_ref[...], S, preferred_element_type=jnp.float32) + b1_ref[...]  # (CR, Bt)
    h = jnp.maximum(h, 0.0)
    E = jax.nn.sigmoid(
        jnp.dot(w2_ref[...], h, preferred_element_type=jnp.float32) + b2_ref[...])  # (C, Bt)

    # ---- spatial-attention inputs: channel mean / max of the channel-scaled tensor ----
    # computed lane-dense, staged into maps_ref = (2, Bt, 1, HW)
    for b in range(Bt):
        e_b = E[:, b:b + 1]                               # (C, 1)
        xca_b = x_ref[b] * e_b                            # (C, HW)
        maps_ref[0, b] = jnp.mean(xca_b, axis=0, keepdims=True)   # (1, HW)
        maps_ref[1, b] = jnp.max(xca_b, axis=0, keepdims=True)    # (1, HW)

    # ---- zero-padded (pad=3) conv staging buffer, filled via row copies ----
    # Re-zeroed every grid step so the border stays valid even when the batch
    # axis is sharded across TensorCores ("parallel" on v7x).
    pad_ref[...] = jnp.zeros_like(pad_ref)
    for y in range(H):
        pad_ref[:, :, 3 + y:4 + y, 3:3 + W] = maps_ref[:, :, :, y * W:(y + 1) * W]

    # ---- explicit 7x7 conv: kx (lane) shift hoisted out of the ky loop ----
    attn = jnp.full((Bt, H, W), sp_ref[2 * 49], dtype=jnp.float32)   # conv bias
    for cin in range(2):
        for kx in range(7):
            strip = pad_ref[cin, :, :, kx:kx + W]          # (Bt, PH, W): one lane-offset load
            for ky in range(7):
                wgt = sp_ref[cin * 49 + ky * 7 + kx]
                attn = attn + wgt * strip[:, ky:ky + H, :]  # sublane slice + VPU FMA

    # flatten attention map back to the lane-dense domain via scratch row copies
    for y in range(H):
        attn_ref[:, :, y * W:(y + 1) * W] = attn[:, y:y + 1, :]

    # ---- final: (x * channel_excitation) * spatial_attention ----
    # NOTE: the PyTorch module multiplies by the raw conv output (no sigmoid).
    for b in range(Bt):
        e_b = E[:, b:b + 1]                               # (C, 1)
        o_ref[b] = ((x_ref[b] * e_b) * attn_ref[b]).astype(o_ref.dtype)


def cbam_forward(x, w1, b1, w2, b2, w_sp, b_sp):
    """x: (B, C, H, W).  w1: (C//r, C), b1: (C//r,), w2: (C, C//r), b2: (C,),
    w_sp: (1, 2, 7, 7), b_sp: (1,)."""
    B, C, H, W = x.shape
    CR = w1.shape[0]
    HW = H * W

    xf = x.astype(jnp.float32).reshape(B, C, HW)          # lane-dense view
    w1f = w1.astype(jnp.float32)
    w2f = w2.astype(jnp.float32)
    b1c = b1.reshape(CR, 1).astype(jnp.float32)
    b2c = b2.reshape(C, 1).astype(jnp.float32)
    # spatial conv params flattened: 98 weights + 1 bias -> SMEM
    sp = jnp.concatenate([w_sp.reshape(-1), b_sp.reshape(-1)]).astype(jnp.float32)

    # images per grid step: largest divisor of B that is <= 8
    Bt = min(B, 8)
    while B % Bt:
        Bt -= 1

    # padded conv staging tile: (>= H+6, >= W+6) rounded up to (8, 128) multiples
    PH = max(8, -(-(H + 6) // 8) * 8)
    PW = max(128, -(-(W + 6) // 128) * 128)

    kernel = functools.partial(cbam_kernel, Bt=Bt, H=H, W=W)

    out = pl.pallas_call(
        kernel,
        out_shape=jax.ShapeDtypeStruct((B, C, HW), jnp.float32),
        grid_spec=pltpu.PrefetchScalarGridSpec(
            num_scalar_prefetch=0,
            grid=(B // Bt,),
            in_specs=[
                pl.BlockSpec((Bt, C, HW), lambda g: (g, 0, 0)),     # x (lane-dense)
                pl.BlockSpec((CR, C), lambda g: (0, 0)),            # fc1 weight
                pl.BlockSpec((CR, 1), lambda g: (0, 0)),            # fc1 bias (column)
                pl.BlockSpec((C, CR), lambda g: (0, 0)),            # fc2 weight
                pl.BlockSpec((C, 1), lambda g: (0, 0)),             # fc2 bias (column)
                pl.BlockSpec(memory_space=pltpu.MemorySpace.SMEM),  # conv w+b flat
            ],
            out_specs=pl.BlockSpec((Bt, C, HW), lambda g: (g, 0, 0)),
            scratch_shapes=[
                pltpu.VMEM((2, Bt, PH, PW), jnp.float32),   # zero-padded conv input
                pltpu.VMEM((2, Bt, 1, HW), jnp.float32),    # flat avg / max maps
                pltpu.VMEM((Bt, 1, HW), jnp.float32),       # flat attention map
            ]),
        compiler_params=pltpu.CompilerParams(
            dimension_semantics=("parallel",)),   # batch blocks independent -> 2 TCs on v7x
    )(xf, w1f, b1c, w2f, b2c, sp)
    return out.reshape(B, C, H, W)


def cbam_reference(x, w1, b1, w2, b2, w_sp, b_sp):
    """Pure-JAX reference mirroring the PyTorch forward."""
    sq = jnp.mean(x, axis=(2, 3))                          # (B, C)
    h = jax.nn.relu(sq @ w1.T + b1)
    e = jax.nn.sigmoid(h @ w2.T + b2)
    x_ca = x * e[:, :, None, None]
    avg = jnp.mean(x_ca, axis=1, keepdims=True)
    mx = jnp.max(x_ca, axis=1, keepdims=True)
    sp_in = jnp.concatenate([avg, mx], axis=1)             # (B, 2, H, W)
    attn = jax.lax.conv_general_dilated(
        sp_in, w_sp, window_strides=(1, 1), padding=((3, 3), (3, 3)),
        dimension_numbers=("NCHW", "OIHW", "NCHW")) + b_sp.reshape(1, 1, 1, 1)
    return x_ca * attn


if __name__ == "__main__":
    B, C, H, W = 2, 32, 16, 16
    reduction = 16
    CR = C // reduction  # = 2

    key = jax.random.PRNGKey(0)
    k1, k2, k3, k4, k5, k6, k7 = jax.random.split(key, 7)
    w1 = jax.random.normal(k1, (CR, C), jnp.float32) * 0.1    # nn.Linear(C, C//r).weight
    b1 = jax.random.normal(k2, (CR,), jnp.float32) * 0.1
    w2 = jax.random.normal(k3, (C, CR), jnp.float32) * 0.1    # nn.Linear(C//r, C).weight
    b2 = jax.random.normal(k4, (C,), jnp.float32) * 0.1
    w_sp = jax.random.normal(k5, (1, 2, 7, 7), jnp.float32) * 0.1  # Conv2d(2,1,7,pad=3).weight
    b_sp = jax.random.normal(k6, (1,), jnp.float32) * 0.1
    x = jax.random.normal(k7, (B, C, H, W), jnp.float32)

    out = cbam_forward(x, w1, b1, w2, b2, w_sp, b_sp)
    out = jax.block_until_ready(out)

    ref = jax.block_until_ready(cbam_reference(x, w1, b1, w2, b2, w_sp, b_sp))
    assert out.shape == (B, C, H, W)
    assert jnp.allclose(out, ref, rtol=1e-4, atol=1e-5), float(jnp.max(jnp.abs(out - ref)))

    print("KERNEL_OK")
</pallas_src>

<mosaic_0001>
module attributes {stable_mosaic.version = 11 : i64} {
  func.func @cbam_kernel(%arg0: i32, %arg1: memref<2x32x256xf32, #tpu.memory_space<vmem>>, %arg2: memref<2x32xf32, #tpu.memory_space<vmem>>, %arg3: memref<2x1xf32, #tpu.memory_space<vmem>>, %arg4: memref<32x2xf32, #tpu.memory_space<vmem>>, %arg5: memref<32x1xf32, #tpu.memory_space<vmem>>, %arg6: memref<99xf32, #tpu.memory_space<smem>>, %arg7: memref<2x32x256xf32, #tpu.memory_space<vmem>>, %arg8: memref<2x2x24x128xf32, #tpu.memory_space<vmem>>, %arg9: memref<2x2x1x256xf32, #tpu.memory_space<vmem>>, %arg10: memref<2x1x256xf32, #tpu.memory_space<vmem>>) attributes {dimension_semantics = [#tpu.dimension_semantics<parallel>], iteration_bounds = array<i64: 1>, scalar_prefetch = 0 : i64, scratch_operands = 3 : i64, tpu.core_type = #tpu.core_type<tc>, window_params = [{transform_indices = @transform_0, window_bounds = array<i64: 2, 32, 256>}, {pipeline_mode = #tpu.pipeline_mode<synchronous>, transform_indices = @transform_1, window_bounds = array<i64: 2, 32>}, {pipeline_mode = #tpu.pipeline_mode<synchronous>, transform_indices = @transform_2, window_bounds = array<i64: 2, 1>}, {pipeline_mode = #tpu.pipeline_mode<synchronous>, transform_indices = @transform_3, window_bounds = array<i64: 32, 2>}, {pipeline_mode = #tpu.pipeline_mode<synchronous>, transform_indices = @transform_4, window_bounds = array<i64: 32, 1>}, {transform_indices = @transform_5, window_bounds = array<i64: 99>}, {transform_indices = @transform_6, window_bounds = array<i64: 2, 32, 256>}]} {
    %c0 = arith.constant 0 : index
    %c0_0 = arith.constant 0 : index
    %c0_1 = arith.constant 0 : index
    %0 = vector.load %arg1[%c0, %c0_0, %c0_1] : memref<2x32x256xf32, #tpu.memory_space<vmem>>, vector<1x32x256xf32>
    %1 = vector.shape_cast %0 : vector<1x32x256xf32> to vector<32x256xf32>
    %cst = arith.constant dense<0.000000e+00> : vector<32xf32>
    %2 = vector.multi_reduction <add>, %1, %cst [1] : vector<32x256xf32> to vector<32xf32>
    %3 = vector.shape_cast %2 : vector<32xf32> to vector<32x1xf32>
    %cst_2 = arith.constant 2.560000e+02 : f32
    %4 = vector.broadcast %cst_2 : f32 to vector<32x1xf32>
    %5 = arith.divf %3, %4 : vector<32x1xf32>
    %c1 = arith.constant 1 : index
    %c0_3 = arith.constant 0 : index
    %c0_4 = arith.constant 0 : index
    %6 = vector.load %arg1[%c1, %c0_3, %c0_4] : memref<2x32x256xf32, #tpu.memory_space<vmem>>, vector<1x32x256xf32>
    %7 = vector.shape_cast %6 : vector<1x32x256xf32> to vector<32x256xf32>
    %cst_5 = arith.constant dense<0.000000e+00> : vector<32xf32>
    %8 = vector.multi_reduction <add>, %7, %cst_5 [1] : vector<32x256xf32> to vector<32xf32>
    %9 = vector.shape_cast %8 : vector<32xf32> to vector<32x1xf32>
    %cst_6 = arith.constant 2.560000e+02 : f32
    %10 = vector.broadcast %cst_6 : f32 to vector<32x1xf32>
    %11 = arith.divf %9, %10 : vector<32x1xf32>
    %12 = tpu.concatenate %5, %11 in 1 : vector<32x1xf32>, vector<32x1xf32> -> vector<32x2xf32>
    %c0_7 = arith.constant 0 : index
    %c0_8 = arith.constant 0 : index
    %13 = vector.load %arg2[%c0_7, %c0_8] : memref<2x32xf32, #tpu.memory_space<vmem>>, vector<2x32xf32>
    %cst_9 = arith.constant dense<0.000000e+00> : vector<2x2xf32>
    %14 = tpu.matmul %13, %12, %cst_9 {dimension_numbers = #tpu.dot_dimension_numbers<[1], [0], [0], [1], [0, 0, 1, 1], [], []>} : vector<2x32xf32>, vector<32x2xf32>, vector<2x2xf32> -> vector<2x2xf32>
    %c0_10 = arith.constant 0 : index
    %c0_11 = arith.constant 0 : index
    %15 = vector.load %arg3[%c0_10, %c0_11] : memref<2x1xf32, #tpu.memory_space<vmem>>, vector<2x1xf32>
    %16 = vector.broadcast %15 : vector<2x1xf32> to vector<2x2xf32>
    %17 = arith.addf %14, %16 : vector<2x2xf32>
    %cst_12 = arith.constant 0.000000e+00 : f32
    %18 = vector.broadcast %cst_12 : f32 to vector<2x2xf32>
    %19 = arith.maximumf %17, %18 : vector<2x2xf32>
    %c0_13 = arith.constant 0 : index
    %c0_14 = arith.constant 0 : index
    %20 = vector.load %arg4[%c0_13, %c0_14] : memref<32x2xf32, #tpu.memory_space<vmem>>, vector<32x2xf32>
    %cst_15 = arith.constant dense<0.000000e+00> : vector<32x2xf32>
    %21 = tpu.matmul %20, %19, %cst_15 {dimension_numbers = #tpu.dot_dimension_numbers<[1], [0], [0], [1], [0, 0, 1, 1], [], []>} : vector<32x2xf32>, vector<2x2xf32>, vector<32x2xf32> -> vector<32x2xf32>
    %c0_16 = arith.constant 0 : index
    %c0_17 = arith.constant 0 : index
    %22 = vector.load %arg5[%c0_16, %c0_17] : memref<32x1xf32, #tpu.memory_space<vmem>>, vector<32x1xf32>
    %23 = vector.broadcast %22 : vector<32x1xf32> to vector<32x2xf32>
    %24 = arith.addf %21, %23 : vector<32x2xf32>
    %25 = arith.negf %24 : vector<32x2xf32>
    %26 = math.exp %25 : vector<32x2xf32>
    %cst_18 = arith.constant 1.000000e+00 : f32
    %27 = vector.broadcast %cst_18 : f32 to vector<32x2xf32>
    %28 = arith.addf %27, %26 : vector<32x2xf32>
    %29 = arith.divf %27, %28 : vector<32x2xf32>
    %30 = vector.extract_strided_slice %29 {offsets = [0, 0], sizes = [32, 1], strides = [1, 1]} : vector<32x2xf32> to vector<32x1xf32>
    %c0_19 = arith.constant 0 : index
    %c0_20 = arith.constant 0 : index
    %c0_21 = arith.constant 0 : index
    %31 = vector.load %arg1[%c0_19, %c0_20, %c0_21] : memref<2x32x256xf32, #tpu.memory_space<vmem>>, vector<1x32x256xf32>
    %32 = vector.shape_cast %31 : vector<1x32x256xf32> to vector<32x256xf32>
    %33 = vector.broadcast %30 : vector<32x1xf32> to vector<32x256xf32>
    %34 = arith.mulf %32, %33 : vector<32x256xf32>
    %cst_22 = arith.constant dense<0.000000e+00> : vector<256xf32>
    %35 = vector.multi_reduction <add>, %34, %cst_22 [0] : vector<32x256xf32> to vector<256xf32>
    %36 = vector.shape_cast %35 : vector<256xf32> to vector<1x256xf32>
    %cst_23 = arith.constant 3.200000e+01 : f32
    %37 = vector.broadcast %cst_23 : f32 to vector<1x256xf32>
    %38 = arith.divf %36, %37 : vector<1x256xf32>
    %c0_24 = arith.constant 0 : index
    %c0_25 = arith.constant 0 : index
    %c0_26 = arith.constant 0 : index
    %c0_27 = arith.constant 0 : index
    %39 = vector.load %arg9[%c0_24, %c0_25, %c0_26, %c0_27] : memref<2x2x1x256xf32, #tpu.memory_space<vmem>>, vector<1x1x1x256xf32>
    %40 = vector.shape_cast %39 : vector<1x1x1x256xf32> to vector<1x256xf32>
    %41 = vector.shape_cast %38 : vector<1x256xf32> to vector<1x1x1x256xf32>
    tpu.vector_store %arg9[%c0_24, %c0_25, %c0_26, %c0_27], %41 {strides = array<i32>} : memref<2x2x1x256xf32, #tpu.memory_space<vmem>>, vector<1x1x1x256xf32>,
    %cst_28 = arith.constant dense<0xFF800000> : vector<256xf32>
    %42 = vector.multi_reduction <maximumf>, %34, %cst_28 [0] : vector<32x256xf32> to vector<256xf32>
    %43 = vector.shape_cast %42 : vector<256xf32> to vector<1x256xf32>
    %c1_29 = arith.constant 1 : index
    %c0_30 = arith.constant 0 : index
    %c0_31 = arith.constant 0 : index
    %c0_32 = arith.constant 0 : index
    %44 = vector.load %arg9[%c1_29, %c0_30, %c0_31, %c0_32] : memref<2x2x1x256xf32, #tpu.memory_space<vmem>>, vector<1x1x1x256xf32>
    %45 = vector.shape_cast %44 : vector<1x1x1x256xf32> to vector<1x256xf32>
    %46 = vector.shape_cast %43 : vector<1x256xf32> to vector<1x1x1x256xf32>
    tpu.vector_store %arg9[%c1_29, %c0_30, %c0_31, %c0_32], %46 {strides = array<i32>} : memref<2x2x1x256xf32, #tpu.memory_space<vmem>>, vector<1x1x1x256xf32>,
    %47 = vector.extract_strided_slice %29 {offsets = [0, 1], sizes = [32, 1], strides = [1, 1]} : vector<32x2xf32> to vector<32x1xf32>
    %c1_33 = arith.constant 1 : index
    %c0_34 = arith.constant 0 : index
    %c0_35 = arith.constant 0 : index
    %48 = vector.load %arg1[%c1_33, %c0_34, %c0_35] : memref<2x32x256xf32, #tpu.memory_space<vmem>>, vector<1x32x256xf32>
    %49 = vector.shape_cast %48 : vector<1x32x256xf32> to vector<32x256xf32>
    %50 = vector.broadcast %47 : vector<32x1xf32> to vector<32x256xf32>
    %51 = arith.mulf %49, %50 : vector<32x256xf32>
    %cst_36 = arith.constant dense<0.000000e+00> : vector<256xf32>
    %52 = vector.multi_reduction <add>, %51, %cst_36 [0] : vector<32x256xf32> to vector<256xf32>
    %53 = vector.shape_cast %52 : vector<256xf32> to vector<1x256xf32>
    %cst_37 = arith.constant 3.200000e+01 : f32
    %54 = vector.broadcast %cst_37 : f32 to vector<1x256xf32>
    %55 = arith.divf %53, %54 : vector<1x256xf32>
    %c0_38 = arith.constant 0 : index
    %c1_39 = arith.constant 1 : index
    %c0_40 = arith.constant 0 : index
    %c0_41 = arith.constant 0 : index
    %56 = vector.load %arg9[%c0_38, %c1_39, %c0_40, %c0_41] : memref<2x2x1x256xf32, #tpu.memory_space<vmem>>, vector<1x1x1x256xf32>
    %57 = vector.shape_cast %56 : vector<1x1x1x256xf32> to vector<1x256xf32>
    %58 = vector.shape_cast %55 : vector<1x256xf32> to vector<1x1x1x256xf32>
    tpu.vector_store %arg9[%c0_38, %c1_39, %c0_40, %c0_41], %58 {strides = array<i32>} : memref<2x2x1x256xf32, #tpu.memory_space<vmem>>, vector<1x1x1x256xf32>,
    %cst_42 = arith.constant dense<0xFF800000> : vector<256xf32>
    %59 = vector.multi_reduction <maximumf>, %51, %cst_42 [0] : vector<32x256xf32> to vector<256xf32>
    %60 = vector.shape_cast %59 : vector<256xf32> to vector<1x256xf32>
    %c1_43 = arith.constant 1 : index
    %c1_44 = arith.constant 1 : index
    %c0_45 = arith.constant 0 : index
    %c0_46 = arith.constant 0 : index
    %61 = vector.load %arg9[%c1_43, %c1_44, %c0_45, %c0_46] : memref<2x2x1x256xf32, #tpu.memory_space<vmem>>, vector<1x1x1x256xf32>
    %62 = vector.shape_cast %61 : vector<1x1x1x256xf32> to vector<1x256xf32>
    %63 = vector.shape_cast %60 : vector<1x256xf32> to vector<1x1x1x256xf32>
    tpu.vector_store %arg9[%c1_43, %c1_44, %c0_45, %c0_46], %63 {strides = array<i32>} : memref<2x2x1x256xf32, #tpu.memory_space<vmem>>, vector<1x1x1x256xf32>,
    %cst_47 = arith.constant 0.000000e+00 : f32
    %64 = vector.broadcast %cst_47 : f32 to vector<2x2x24x128xf32>
    %c0_48 = arith.constant 0 : index
    %c0_49 = arith.constant 0 : index
    %c0_50 = arith.constant 0 : index
    %c0_51 = arith.constant 0 : index
    %65 = vector.load %arg8[%c0_48, %c0_49, %c0_50, %c0_51] : memref<2x2x24x128xf32, #tpu.memory_space<vmem>>, vector<2x2x24x128xf32>
    tpu.vector_store %arg8[%c0_48, %c0_49, %c0_50, %c0_51], %64 {strides = array<i32>} : memref<2x2x24x128xf32, #tpu.memory_space<vmem>>, vector<2x2x24x128xf32>,
    %c0_52 = arith.constant 0 : index
    %c0_53 = arith.constant 0 : index
    %c0_54 = arith.constant 0 : index
    %c0_55 = arith.constant 0 : index
    %66 = vector.load %arg9[%c0_52, %c0_53, %c0_54, %c0_55] : memref<2x2x1x256xf32, #tpu.memory_space<vmem>>, vector<2x2x1x16xf32>
    %c0_56 = arith.constant 0 : index
    %c0_57 = arith.constant 0 : index
    %c3 = arith.constant 3 : index
    %c3_58 = arith.constant 3 : index
    %67 = vector.load %arg8[%c0_56, %c0_57, %c3, %c3_58] : memref<2x2x24x128xf32, #tpu.memory_space<vmem>>, vector<2x2x1x16xf32>
    tpu.vector_store %arg8[%c0_56, %c0_57, %c3, %c3_58], %66 {strides = array<i32>} : memref<2x2x24x128xf32, #tpu.memory_space<vmem>>, vector<2x2x1x16xf32>,
    %c0_59 = arith.constant 0 : index
    %c0_60 = arith.constant 0 : index
    %c0_61 = arith.constant 0 : index
    %c16 = arith.constant 16 : index
    %68 = vector.load %arg9[%c0_59, %c0_60, %c0_61, %c16] : memref<2x2x1x256xf32, #tpu.memory_space<vmem>>, vector<2x2x1x16xf32>
    %c0_62 = arith.constant 0 : index
    %c0_63 = arith.constant 0 : index
    %c4 = arith.constant 4 : index
    %c3_64 = arith.constant 3 : index
    %69 = vector.load %arg8[%c0_62, %c0_63, %c4, %c3_64] : memref<2x2x24x128xf32, #tpu.memory_space<vmem>>, vector<2x2x1x16xf32>
    tpu.vector_store %arg8[%c0_62, %c0_63, %c4, %c3_64], %68 {strides = array<i32>} : memref<2x2x24x128xf32, #tpu.memory_space<vmem>>, vector<2x2x1x16xf32>,
    %c0_65 = arith.constant 0 : index
    %c0_66 = arith.constant 0 : index
    %c0_67 = arith.constant 0 : index
    %c32 = arith.constant 32 : index
    %70 = vector.load %arg9[%c0_65, %c0_66, %c0_67, %c32] : memref<2x2x1x256xf32, #tpu.memory_space<vmem>>, vector<2x2x1x16xf32>
    %c0_68 = arith.constant 0 : index
    %c0_69 = arith.constant 0 : index
    %c5 = arith.constant 5 : index
    %c3_70 = arith.constant 3 : index
    %71 = vector.load %arg8[%c0_68, %c0_69, %c5, %c3_70] : memref<2x2x24x128xf32, #tpu.memory_space<vmem>>, vector<2x2x1x16xf32>
    tpu.vector_store %arg8[%c0_68, %c0_69, %c5, %c3_70], %70 {strides = array<i32>} : memref<2x2x24x128xf32, #tpu.memory_space<vmem>>, vector<2x2x1x16xf32>,
    %c0_71 = arith.constant 0 : index
    %c0_72 = arith.constant 0 : index
    %c0_73 = arith.constant 0 : index
    %c48 = arith.constant 48 : index
    %72 = vector.load %arg9[%c0_71, %c0_72, %c0_73, %c48] : memref<2x2x1x256xf32, #tpu.memory_space<vmem>>, vector<2x2x1x16xf32>
    %c0_74 = arith.constant 0 : index
    %c0_75 = arith.constant 0 : index
    %c6 = arith.constant 6 : index
    %c3_76 = arith.constant 3 : index
    %73 = vector.load %arg8[%c0_74, %c0_75, %c6, %c3_76] : memref<2x2x24x128xf32, #tpu.memory_space<vmem>>, vector<2x2x1x16xf32>
    tpu.vector_store %arg8[%c0_74, %c0_75, %c6, %c3_76], %72 {strides = array<i32>} : memref<2x2x24x128xf32, #tpu.memory_space<vmem>>, vector<2x2x1x16xf32>,
    %c0_77 = arith.constant 0 : index
    %c0_78 = arith.constant 0 : index
    %c0_79 = arith.constant 0 : index
    %c64 = arith.constant 64 : index
    %74 = vector.load %arg9[%c0_77, %c0_78, %c0_79, %c64] : memref<2x2x1x256xf32, #tpu.memory_space<vmem>>, vector<2x2x1x16xf32>
    %c0_80 = arith.constant 0 : index
    %c0_81 = arith.constant 0 : index
    %c7 = arith.constant 7 : index
    %c3_82 = arith.constant 3 : index
    %75 = vector.load %arg8[%c0_80, %c0_81, %c7, %c3_82] : memref<2x2x24x128xf32, #tpu.memory_space<vmem>>, vector<2x2x1x16xf32>
    tpu.vector_store %arg8[%c0_80, %c0_81, %c7, %c3_82], %74 {strides = array<i32>} : memref<2x2x24x128xf32, #tpu.memory_space<vmem>>, vector<2x2x1x16xf32>,
    %c0_83 = arith.constant 0 : index
    %c0_84 = arith.constant 0 : index
    %c0_85 = arith.constant 0 : index
    %c80 = arith.constant 80 : index
    %76 = vector.load %arg9[%c0_83, %c0_84, %c0_85, %c80] : memref<2x2x1x256xf32, #tpu.memory_space<vmem>>, vector<2x2x1x16xf32>
    %c0_86 = arith.constant 0 : index
    %c0_87 = arith.constant 0 : index
    %c8 = arith.constant 8 : index
    %c3_88 = arith.constant 3 : index
    %77 = vector.load %arg8[%c0_86, %c0_87, %c8, %c3_88] : memref<2x2x24x128xf32, #tpu.memory_space<vmem>>, vector<2x2x1x16xf32>
    tpu.vector_store %arg8[%c0_86, %c0_87, %c8, %c3_88], %76 {strides = array<i32>} : memref<2x2x24x128xf32, #tpu.memory_space<vmem>>, vector<2x2x1x16xf32>,
    %c0_89 = arith.constant 0 : index
    %c0_90 = arith.constant 0 : index
    %c0_91 = arith.constant 0 : index
    %c96 = arith.constant 96 : index
    %78 = vector.load %arg9[%c0_89, %c0_90, %c0_91, %c96] : memref<2x2x1x256xf32, #tpu.memory_space<vmem>>, vector<2x2x1x16xf32>
    %c0_92 = arith.constant 0 : index
    %c0_93 = arith.constant 0 : index
    %c9 = arith.constant 9 : index
    %c3_94 = arith.constant 3 : index
    %79 = vector.load %arg8[%c0_92, %c0_93, %c9, %c3_94] : memref<2x2x24x128xf32, #tpu.memory_space<vmem>>, vector<2x2x1x16xf32>
    tpu.vector_store %arg8[%c0_92, %c0_93, %c9, %c3_94], %78 {strides = array<i32>} : memref<2x2x24x128xf32, #tpu.memory_space<vmem>>, vector<2x2x1x16xf32>,
    %c0_95 = arith.constant 0 : index
    %c0_96 = arith.constant 0 : index
    %c0_97 = arith.constant 0 : index
    %c112 = arith.constant 112 : index
    %80 = vector.load %arg9[%c0_95, %c0_96, %c0_97, %c112] : memref<2x2x1x256xf32, #tpu.memory_space<vmem>>, vector<2x2x1x16xf32>
    %c0_98 = arith.constant 0 : index
    %c0_99 = arith.constant 0 : index
    %c10 = arith.constant 10 : index
    %c3_100 = arith.constant 3 : index
    %81 = vector.load %arg8[%c0_98, %c0_99, %c10, %c3_100] : memref<2x2x24x128xf32, #tpu.memory_space<vmem>>, vector<2x2x1x16xf32>
    tpu.vector_store %arg8[%c0_98, %c0_99, %c10, %c3_100], %80 {strides = array<i32>} : memref<2x2x24x128xf32, #tpu.memory_space<vmem>>, vector<2x2x1x16xf32>,
    %c0_101 = arith.constant 0 : index
    %c0_102 = arith.constant 0 : index
    %c0_103 = arith.constant 0 : index
    %c128 = arith.constant 128 : index
    %82 = vector.load %arg9[%c0_101, %c0_102, %c0_103, %c128] : memref<2x2x1x256xf32, #tpu.memory_space<vmem>>, vector<2x2x1x16xf32>
    %c0_104 = arith.constant 0 : index
    %c0_105 = arith.constant 0 : index
    %c11 = arith.constant 11 : index
    %c3_106 = arith.constant 3 : index
    %83 = vector.load %arg8[%c0_104, %c0_105, %c11, %c3_106] : memref<2x2x24x128xf32, #tpu.memory_space<vmem>>, vector<2x2x1x16xf32>
    tpu.vector_store %arg8[%c0_104, %c0_105, %c11, %c3_106], %82 {strides = array<i32>} : memref<2x2x24x128xf32, #tpu.memory_space<vmem>>, vector<2x2x1x16xf32>,
    %c0_107 = arith.constant 0 : index
    %c0_108 = arith.constant 0 : index
    %c0_109 = arith.constant 0 : index
    %c144 = arith.constant 144 : index
    %84 = vector.load %arg9[%c0_107, %c0_108, %c0_109, %c144] : memref<2x2x1x256xf32, #tpu.memory_space<vmem>>, vector<2x2x1x16xf32>
    %c0_110 = arith.constant 0 : index
    %c0_111 = arith.constant 0 : index
    %c12 = arith.constant 12 : index
    %c3_112 = arith.constant 3 : index
    %85 = vector.load %arg8[%c0_110, %c0_111, %c12, %c3_112] : memref<2x2x24x128xf32, #tpu.memory_space<vmem>>, vector<2x2x1x16xf32>
    tpu.vector_store %arg8[%c0_110, %c0_111, %c12, %c3_112], %84 {strides = array<i32>} : memref<2x2x24x128xf32, #tpu.memory_space<vmem>>, vector<2x2x1x16xf32>,
    %c0_113 = arith.constant 0 : index
    %c0_114 = arith.constant 0 : index
    %c0_115 = arith.constant 0 : index
    %c160 = arith.constant 160 : index
    %86 = vector.load %arg9[%c0_113, %c0_114, %c0_115, %c160] : memref<2x2x1x256xf32, #tpu.memory_space<vmem>>, vector<2x2x1x16xf32>
    %c0_116 = arith.constant 0 : index
    %c0_117 = arith.constant 0 : index
    %c13 = arith.constant 13 : index
    %c3_118 = arith.constant 3 : index
    %87 = vector.load %arg8[%c0_116, %c0_117, %c13, %c3_118] : memref<2x2x24x128xf32, #tpu.memory_space<vmem>>, vector<2x2x1x16xf32>
    tpu.vector_store %arg8[%c0_116, %c0_117, %c13, %c3_118], %86 {strides = array<i32>} : memref<2x2x24x128xf32, #tpu.memory_space<vmem>>, vector<2x2x1x16xf32>,
    %c0_119 = arith.constant 0 : index
    %c0_120 = arith.constant 0 : index
    %c0_121 = arith.constant 0 : index
    %c176 = arith.constant 176 : index
    %88 = vector.load %arg9[%c0_119, %c0_120, %c0_121, %c176] : memref<2x2x1x256xf32, #tpu.memory_space<vmem>>, vector<2x2x1x16xf32>
    %c0_122 = arith.constant 0 : index
    %c0_123 = arith.constant 0 : index
    %c14 = arith.constant 14 : index
    %c3_124 = arith.constant 3 : index
    %89 = vector.load %arg8[%c0_122, %c0_123, %c14, %c3_124] : memref<2x2x24x128xf32, #tpu.memory_space<vmem>>, vector<2x2x1x16xf32>
    tpu.vector_store %arg8[%c0_122, %c0_123, %c14, %c3_124], %88 {strides = array<i32>} : memref<2x2x24x128xf32, #tpu.memory_space<vmem>>, vector<2x2x1x16xf32>,
    %c0_125 = arith.constant 0 : index
    %c0_126 = arith.constant 0 : index
    %c0_127 = arith.constant 0 : index
    %c192 = arith.constant 192 : index
    %90 = vector.load %arg9[%c0_125, %c0_126, %c0_127, %c192] : memref<2x2x1x256xf32, #tpu.memory_space<vmem>>, vector<2x2x1x16xf32>
    %c0_128 = arith.constant 0 : index
    %c0_129 = arith.constant 0 : index
    %c15 = arith.constant 15 : index
    %c3_130 = arith.constant 3 : index
    %91 = vector.load %arg8[%c0_128, %c0_129, %c15, %c3_130] : memref<2x2x24x128xf32, #tpu.memory_space<vmem>>, vector<2x2x1x16xf32>
    tpu.vector_store %arg8[%c0_128, %c0_129, %c15, %c3_130], %90 {strides = array<i32>} : memref<2x2x24x128xf32, #tpu.memory_space<vmem>>, vector<2x2x1x16xf32>,
    %c0_131 = arith.constant 0 : index
    %c0_132 = arith.constant 0 : index
    %c0_133 = arith.constant 0 : index
    %c208 = arith.constant 208 : index
    %92 = vector.load %arg9[%c0_131, %c0_132, %c0_133, %c208] : memref<2x2x1x256xf32, #tpu.memory_space<vmem>>, vector<2x2x1x16xf32>
    %c0_134 = arith.constant 0 : index
    %c0_135 = arith.constant 0 : index
    %c16_136 = arith.constant 16 : index
    %c3_137 = arith.constant 3 : index
    %93 = vector.load %arg8[%c0_134, %c0_135, %c16_136, %c3_137] : memref<2x2x24x128xf32, #tpu.memory_space<vmem>>, vector<2x2x1x16xf32>
    tpu.vector_store %arg8[%c0_134, %c0_135, %c16_136, %c3_137], %92 {strides = array<i32>} : memref<2x2x24x128xf32, #tpu.memory_space<vmem>>, vector<2x2x1x16xf32>,
    %c0_138 = arith.constant 0 : index
    %c0_139 = arith.constant 0 : index
    %c0_140 = arith.constant 0 : index
    %c224 = arith.constant 224 : index
    %94 = vector.load %arg9[%c0_138, %c0_139, %c0_140, %c224] : memref<2x2x1x256xf32, #tpu.memory_space<vmem>>, vector<2x2x1x16xf32>
    %c0_141 = arith.constant 0 : index
    %c0_142 = arith.constant 0 : index
    %c17 = arith.constant 17 : index
    %c3_143 = arith.constant 3 : index
    %95 = vector.load %arg8[%c0_141, %c0_142, %c17, %c3_143] : memref<2x2x24x128xf32, #tpu.memory_space<vmem>>, vector<2x2x1x16xf32>
    tpu.vector_store %arg8[%c0_141, %c0_142, %c17, %c3_143], %94 {strides = array<i32>} : memref<2x2x24x128xf32, #tpu.memory_space<vmem>>, vector<2x2x1x16xf32>,
    %c0_144 = arith.constant 0 : index
    %c0_145 = arith.constant 0 : index
    %c0_146 = arith.constant 0 : index
    %c240 = arith.constant 240 : index
    %96 = vector.load %arg9[%c0_144, %c0_145, %c0_146, %c240] : memref<2x2x1x256xf32, #tpu.memory_space<vmem>>, vector<2x2x1x16xf32>
    %c0_147 = arith.constant 0 : index
    %c0_148 = arith.constant 0 : index
    %c18 = arith.constant 18 : index
    %c3_149 = arith.constant 3 : index
    %97 = vector.load %arg8[%c0_147, %c0_148, %c18, %c3_149] : memref<2x2x24x128xf32, #tpu.memory_space<vmem>>, vector<2x2x1x16xf32>
    tpu.vector_store %arg8[%c0_147, %c0_148, %c18, %c3_149], %96 {strides = array<i32>} : memref<2x2x24x128xf32, #tpu.memory_space<vmem>>, vector<2x2x1x16xf32>,
    %c98 = arith.constant 98 : index
    %98 = memref.load %arg6[%c98] : memref<99xf32, #tpu.memory_space<smem>>
    %99 = vector.broadcast %98 : f32 to vector<2x16x16xf32>
    %c0_150 = arith.constant 0 : index
    %c0_151 = arith.constant 0 : index
    %c0_152 = arith.constant 0 : index
    %c0_153 = arith.constant 0 : index
    %100 = vector.load %arg8[%c0_150, %c0_151, %c0_152, %c0_153] : memref<2x2x24x128xf32, #tpu.memory_space<vmem>>, vector<1x2x24x16xf32>
    %101 = vector.shape_cast %100 : vector<1x2x24x16xf32> to vector<2x24x16xf32>
    %c0_154 = arith.constant 0 : index
    %102 = memref.load %arg6[%c0_154] : memref<99xf32, #tpu.memory_space<smem>>
    %103 = vector.extract_strided_slice %101 {offsets = [0, 0, 0], sizes = [2, 16, 16], strides = [1, 1, 1]} : vector<2x24x16xf32> to vector<2x16x16xf32>
    %104 = vector.broadcast %102 : f32 to vector<2x16x16xf32>
    %105 = arith.mulf %104, %103 : vector<2x16x16xf32>
    %106 = arith.addf %99, %105 : vector<2x16x16xf32>
    %c7_155 = arith.constant 7 : index
    %107 = memref.load %arg6[%c7_155] : memref<99xf32, #tpu.memory_space<smem>>
    %108 = vector.extract_strided_slice %101 {offsets = [0, 1, 0], sizes = [2, 16, 16], strides = [1, 1, 1]} : vector<2x24x16xf32> to vector<2x16x16xf32>
    %109 = vector.broadcast %107 : f32 to vector<2x16x16xf32>
    %110 = arith.mulf %109, %108 : vector<2x16x16xf32>
    %111 = arith.addf %106, %110 : vector<2x16x16xf32>
    %c14_156 = arith.constant 14 : index
    %112 = memref.load %arg6[%c14_156] : memref<99xf32, #tpu.memory_space<smem>>
    %113 = vector.extract_strided_slice %101 {offsets = [0, 2, 0], sizes = [2, 16, 16], strides = [1, 1, 1]} : vector<2x24x16xf32> to vector<2x16x16xf32>
    %114 = vector.broadcast %112 : f32 to vector<2x16x16xf32>
    %115 = arith.mulf %114, %113 : vector<2x16x16xf32>
    %116 = arith.addf %111, %115 : vector<2x16x16xf32>
    %c21 = arith.constant 21 : index
    %117 = memref.load %arg6[%c21] : memref<99xf32, #tpu.memory_space<smem>>
    %118 = vector.extract_strided_slice %101 {offsets = [0, 3, 0], sizes = [2, 16, 16], strides = [1, 1, 1]} : vector<2x24x16xf32> to vector<2x16x16xf32>
    %119 = vector.broadcast %117 : f32 to vector<2x16x16xf32>
    %120 = arith.mulf %119, %118 : vector<2x16x16xf32>
    %121 = arith.addf %116, %120 : vector<2x16x16xf32>
    %c28 = arith.constant 28 : index
    %122 = memref.load %arg6[%c28] : memref<99xf32, #tpu.memory_space<smem>>
    %123 = vector.extract_strided_slice %101 {offsets = [0, 4, 0], sizes = [2, 16, 16], strides = [1, 1, 1]} : vector<2x24x16xf32> to vector<2x16x16xf32>
    %124 = vector.broadcast %122 : f32 to vector<2x16x16xf32>
    %125 = arith.mulf %124, %123 : vector<2x16x16xf32>
    %126 = arith.addf %121, %125 : vector<2x16x16xf32>
    %c35 = arith.constant 35 : index
    %127 = memref.load %arg6[%c35] : memref<99xf32, #tpu.memory_space<smem>>
    %128 = vector.extract_strided_slice %101 {offsets = [0, 5, 0], sizes = [2, 16, 16], strides = [1, 1, 1]} : vector<2x24x16xf32> to vector<2x16x16xf32>
    %129 = vector.broadcast %127 : f32 to vector<2x16x16xf32>
    %130 = arith.mulf %129, %128 : vector<2x16x16xf32>
    %131 = arith.addf %126, %130 : vector<2x16x16xf32>
    %c42 = arith.constant 42 : index
    %132 = memref.load %arg6[%c42] : memref<99xf32, #tpu.memory_space<smem>>
    %133 = vector.extract_strided_slice %101 {offsets = [0, 6, 0], sizes = [2, 16, 16], strides = [1, 1, 1]} : vector<2x24x16xf32> to vector<2x16x16xf32>
    %134 = vector.broadcast %132 : f32 to vector<2x16x16xf32>
    %135 = arith.mulf %134, %133 : vector<2x16x16xf32>
    %136 = arith.addf %131, %135 : vector<2x16x16xf32>
    %c0_157 = arith.constant 0 : index
    %c0_158 = arith.constant 0 : index
    %c0_159 = arith.constant 0 : index
    %c1_160 = arith.constant 1 : index
    %137 = vector.load %arg8[%c0_157, %c0_158, %c0_159, %c1_160] : memref<2x2x24x128xf32, #tpu.memory_space<vmem>>, vector<1x2x24x16xf32>
    %138 = vector.shape_cast %137 : vector<1x2x24x16xf32> to vector<2x24x16xf32>
    %c1_161 = arith.constant 1 : index
    %139 = memref.load %arg6[%c1_161] : memref<99xf32, #tpu.memory_space<smem>>
    %140 = vector.extract_strided_slice %138 {offsets = [0, 0, 0], sizes = [2, 16, 16], strides = [1, 1, 1]} : vector<2x24x16xf32> to vector<2x16x16xf32>
    %141 = vector.broadcast %139 : f32 to vector<2x16x16xf32>
    %142 = arith.mulf %141, %140 : vector<2x16x16xf32>
    %143 = arith.addf %136, %142 : vector<2x16x16xf32>
    %c8_162 = arith.constant 8 : index
    %144 = memref.load %arg6[%c8_162] : memref<99xf32, #tpu.memory_space<smem>>
    %145 = vector.extract_strided_slice %138 {offsets = [0, 1, 0], sizes = [2, 16, 16], strides = [1, 1, 1]} : vector<2x24x16xf32> to vector<2x16x16xf32>
    %146 = vector.broadcast %144 : f32 to vector<2x16x16xf32>
    %147 = arith.mulf %146, %145 : vector<2x16x16xf32>
    %148 = arith.addf %143, %147 : vector<2x16x16xf32>
    %c15_163 = arith.constant 15 : index
    %149 = memref.load %arg6[%c15_163] : memref<99xf32, #tpu.memory_space<smem>>
    %150 = vector.extract_strided_slice %138 {offsets = [0, 2, 0], sizes = [2, 16, 16], strides = [1, 1, 1]} : vector<2x24x16xf32> to vector<2x16x16xf32>
    %151 = vector.broadcast %149 : f32 to vector<2x16x16xf32>
    %152 = arith.mulf %151, %150 : vector<2x16x16xf32>
    %153 = arith.addf %148, %152 : vector<2x16x16xf32>
    %c22 = arith.constant 22 : index
    %154 = memref.load %arg6[%c22] : memref<99xf32, #tpu.memory_space<smem>>
    %155 = vector.extract_strided_slice %138 {offsets = [0, 3, 0], sizes = [2, 16, 16], strides = [1, 1, 1]} : vector<2x24x16xf32> to vector<2x16x16xf32>
    %156 = vector.broadcast %154 : f32 to vector<2x16x16xf32>
    %157 = arith.mulf %156, %155 : vector<2x16x16xf32>
    %158 = arith.addf %153, %157 : vector<2x16x16xf32>
    %c29 = arith.constant 29 : index
    %159 = memref.load %arg6[%c29] : memref<99xf32, #tpu.memory_space<smem>>
    %160 = vector.extract_strided_slice %138 {offsets = [0, 4, 0], sizes = [2, 16, 16], strides = [1, 1, 1]} : vector<2x24x16xf32> to vector<2x16x16xf32>
    %161 = vector.broadcast %159 : f32 to vector<2x16x16xf32>
    %162 = arith.mulf %161, %160 : vector<2x16x16xf32>
    %163 = arith.addf %158, %162 : vector<2x16x16xf32>
    %c36 = arith.constant 36 : index
    %164 = memref.load %arg6[%c36] : memref<99xf32, #tpu.memory_space<smem>>
    %165 = vector.extract_strided_slice %138 {offsets = [0, 5, 0], sizes = [2, 16, 16], strides = [1, 1, 1]} : vector<2x24x16xf32> to vector<2x16x16xf32>
    %166 = vector.broadcast %164 : f32 to vector<2x16x16xf32>
    %167 = arith.mulf %166, %165 : vector<2x16x16xf32>
    %168 = arith.addf %163, %167 : vector<2x16x16xf32>
    %c43 = arith.constant 43 : index
    %169 = memref.load %arg6[%c43] : memref<99xf32, #tpu.memory_space<smem>>
    %170 = vector.extract_strided_slice %138 {offsets = [0, 6, 0], sizes = [2, 16, 16], strides = [1, 1, 1]} : vector<2x24x16xf32> to vector<2x16x16xf32>
    %171 = vector.broadcast %169 : f32 to vector<2x16x16xf32>
    %172 = arith.mulf %171, %170 : vector<2x16x16xf32>
    %173 = arith.addf %168, %172 : vector<2x16x16xf32>
    %c0_164 = arith.constant 0 : index
    %c0_165 = arith.constant 0 : index
    %c0_166 = arith.constant 0 : index
    %c2 = arith.constant 2 : index
    %174 = vector.load %arg8[%c0_164, %c0_165, %c0_166, %c2] : memref<2x2x24x128xf32, #tpu.memory_space<vmem>>, vector<1x2x24x16xf32>
    %175 = vector.shape_cast %174 : vector<1x2x24x16xf32> to vector<2x24x16xf32>
    %c2_167 = arith.constant 2 : index
    %176 = memref.load %arg6[%c2_167] : memref<99xf32, #tpu.memory_space<smem>>
    %177 = vector.extract_strided_slice %175 {offsets = [0, 0, 0], sizes = [2, 16, 16], strides = [1, 1, 1]} : vector<2x24x16xf32> to vector<2x16x16xf32>
    %178 = vector.broadcast %176 : f32 to vector<2x16x16xf32>
    %179 = arith.mulf %178, %177 : vector<2x16x16xf32>
    %180 = arith.addf %173, %179 : vector<2x16x16xf32>
    %c9_168 = arith.constant 9 : index
    %181 = memref.load %arg6[%c9_168] : memref<99xf32, #tpu.memory_space<smem>>
    %182 = vector.extract_strided_slice %175 {offsets = [0, 1, 0], sizes = [2, 16, 16], strides = [1, 1, 1]} : vector<2x24x16xf32> to vector<2x16x16xf32>
    %183 = vector.broadcast %181 : f32 to vector<2x16x16xf32>
    %184 = arith.mulf %183, %182 : vector<2x16x16xf32>
    %185 = arith.addf %180, %184 : vector<2x16x16xf32>
    %c16_169 = arith.constant 16 : index
    %186 = memref.load %arg6[%c16_169] : memref<99xf32, #tpu.memory_space<smem>>
    %187 = vector.extract_strided_slice %175 {offsets = [0, 2, 0], sizes = [2, 16, 16], strides = [1, 1, 1]} : vector<2x24x16xf32> to vector<2x16x16xf32>
    %188 = vector.broadcast %186 : f32 to vector<2x16x16xf32>
    %189 = arith.mulf %188, %187 : vector<2x16x16xf32>
    %190 = arith.addf %185, %189 : vector<2x16x16xf32>
    %c23 = arith.constant 23 : index
    %191 = memref.load %arg6[%c23] : memref<99xf32, #tpu.memory_space<smem>>
    %192 = vector.extract_strided_slice %175 {offsets = [0, 3, 0], sizes = [2, 16, 16], strides = [1, 1, 1]} : vector<2x24x16xf32> to vector<2x16x16xf32>
    %193 = vector.broadcast %191 : f32 to vector<2x16x16xf32>
    %194 = arith.mulf %193, %192 : vector<2x16x16xf32>
    %195 = arith.addf %190, %194 : vector<2x16x16xf32>
    %c30 = arith.constant 30 : index
    %196 = memref.load %arg6[%c30] : memref<99xf32, #tpu.memory_space<smem>>
    %197 = vector.extract_strided_slice %175 {offsets = [0, 4, 0], sizes = [2, 16, 16], strides = [1, 1, 1]} : vector<2x24x16xf32> to vector<2x16x16xf32>
    %198 = vector.broadcast %196 : f32 to vector<2x16x16xf32>
    %199 = arith.mulf %198, %197 : vector<2x16x16xf32>
    %200 = arith.addf %195, %199 : vector<2x16x16xf32>
    %c37 = arith.constant 37 : index
    %201 = memref.load %arg6[%c37] : memref<99xf32, #tpu.memory_space<smem>>
    %202 = vector.extract_strided_slice %175 {offsets = [0, 5, 0], sizes = [2, 16, 16], strides = [1, 1, 1]} : vector<2x24x16xf32> to vector<2x16x16xf32>
    %203 = vector.broadcast %201 : f32 to vector<2x16x16xf32>
    %204 = arith.mulf %203, %202 : vector<2x16x16xf32>
    %205 = arith.addf %200, %204 : vector<2x16x16xf32>
    %c44 = arith.constant 44 : index
    %206 = memref.load %arg6[%c44] : memref<99xf32, #tpu.memory_space<smem>>
    %207 = vector.extract_strided_slice %175 {offsets = [0, 6, 0], sizes = [2, 16, 16], strides = [1, 1, 1]} : vector<2x24x16xf32> to vector<2x16x16xf32>
    %208 = vector.broadcast %206 : f32 to vector<2x16x16xf32>
    %209 = arith.mulf %208, %207 : vector<2x16x16xf32>
    %210 = arith.addf %205, %209 : vector<2x16x16xf32>
    %c0_170 = arith.constant 0 : index
    %c0_171 = arith.constant 0 : index
    %c0_172 = arith.constant 0 : index
    %c3_173 = arith.constant 3 : index
    %211 = vector.load %arg8[%c0_170, %c0_171, %c0_172, %c3_173] : memref<2x2x24x128xf32, #tpu.memory_space<vmem>>, vector<1x2x24x16xf32>
    %212 = vector.shape_cast %211 : vector<1x2x24x16xf32> to vector<2x24x16xf32>
    %c3_174 = arith.constant 3 : index
    %213 = memref.load %arg6[%c3_174] : memref<99xf32, #tpu.memory_space<smem>>
    %214 = vector.extract_strided_slice %212 {offsets = [0, 0, 0], sizes = [2, 16, 16], strides = [1, 1, 1]} : vector<2x24x16xf32> to vector<2x16x16xf32>
    %215 = vector.broadcast %213 : f32 to vector<2x16x16xf32>
    %216 = arith.mulf %215, %214 : vector<2x16x16xf32>
    %217 = arith.addf %210, %216 : vector<2x16x16xf32>
    %c10_175 = arith.constant 10 : index
    %218 = memref.load %arg6[%c10_175] : memref<99xf32, #tpu.memory_space<smem>>
    %219 = vector.extract_strided_slice %212 {offsets = [0, 1, 0], sizes = [2, 16, 16], strides = [1, 1, 1]} : vector<2x24x16xf32> to vector<2x16x16xf32>
    %220 = vector.broadcast %218 : f32 to vector<2x16x16xf32>
    %221 = arith.mulf %220, %219 : vector<2x16x16xf32>
    %222 = arith.addf %217, %221 : vector<2x16x16xf32>
    %c17_176 = arith.constant 17 : index
    %223 = memref.load %arg6[%c17_176] : memref<99xf32, #tpu.memory_space<smem>>
    %224 = vector.extract_strided_slice %212 {offsets = [0, 2, 0], sizes = [2, 16, 16], strides = [1, 1, 1]} : vector<2x24x16xf32> to vector<2x16x16xf32>
    %225 = vector.broadcast %223 : f32 to vector<2x16x16xf32>
    %226 = arith.mulf %225, %224 : vector<2x16x16xf32>
    %227 = arith.addf %222, %226 : vector<2x16x16xf32>
    %c24 = arith.constant 24 : index
    %228 = memref.load %arg6[%c24] : memref<99xf32, #tpu.memory_space<smem>>
    %229 = vector.extract_strided_slice %212 {offsets = [0, 3, 0], sizes = [2, 16, 16], strides = [1, 1, 1]} : vector<2x24x16xf32> to vector<2x16x16xf32>
    %230 = vector.broadcast %228 : f32 to vector<2x16x16xf32>
    %231 = arith.mulf %230, %229 : vector<2x16x16xf32>
    %232 = arith.addf %227, %231 : vector<2x16x16xf32>
    %c31 = arith.constant 31 : index
    %233 = memref.load %arg6[%c31] : memref<99xf32, #tpu.memory_space<smem>>
    %234 = vector.extract_strided_slice %212 {offsets = [0, 4, 0], sizes = [2, 16, 16], strides = [1, 1, 1]} : vector<2x24x16xf32> to vector<2x16x16xf32>
    %235 = vector.broadcast %233 : f32 to vector<2x16x16xf32>
    %236 = arith.mulf %235, %234 : vector<2x16x16xf32>
    %237 = arith.addf %232, %236 : vector<2x16x16xf32>
    %c38 = arith.constant 38 : index
    %238 = memref.load %arg6[%c38] : memref<99xf32, #tpu.memory_space<smem>>
    %239 = vector.extract_strided_slice %212 {offsets = [0, 5, 0], sizes = [2, 16, 16], strides = [1, 1, 1]} : vector<2x24x16xf32> to vector<2x16x16xf32>
    %240 = vector.broadcast %238 : f32 to vector<2x16x16xf32>
    %241 = arith.mulf %240, %239 : vector<2x16x16xf32>
    %242 = arith.addf %237, %241 : vector<2x16x16xf32>
    %c45 = arith.constant 45 : index
    %243 = memref.load %arg6[%c45] : memref<99xf32, #tpu.memory_space<smem>>
    %244 = vector.extract_strided_slice %212 {offsets = [0, 6, 0], sizes = [2, 16, 16], strides = [1, 1, 1]} : vector<2x24x16xf32> to vector<2x16x16xf32>
    %245 = vector.broadcast %243 : f32 to vector<2x16x16xf32>
    %246 = arith.mulf %245, %244 : vector<2x16x16xf32>
    %247 = arith.addf %242, %246 : vector<2x16x16xf32>
    %c0_177 = arith.constant 0 : index
    %c0_178 = arith.constant 0 : index
    %c0_179 = arith.constant 0 : index
    %c4_180 = arith.constant 4 : index
    %248 = vector.load %arg8[%c0_177, %c0_178, %c0_179, %c4_180] : memref<2x2x24x128xf32, #tpu.memory_space<vmem>>, vector<1x2x24x16xf32>
    %249 = vector.shape_cast %248 : vector<1x2x24x16xf32> to vector<2x24x16xf32>
    %c4_181 = arith.constant 4 : index
    %250 = memref.load %arg6[%c4_181] : memref<99xf32, #tpu.memory_space<smem>>
    %251 = vector.extract_strided_slice %249 {offsets = [0, 0, 0], sizes = [2, 16, 16], strides = [1, 1, 1]} : vector<2x24x16xf32> to vector<2x16x16xf32>
    %252 = vector.broadcast %250 : f32 to vector<2x16x16xf32>
    %253 = arith.mulf %252, %251 : vector<2x16x16xf32>
    %254 = arith.addf %247, %253 : vector<2x16x16xf32>
    %c11_182 = arith.constant 11 : index
    %255 = memref.load %arg6[%c11_182] : memref<99xf32, #tpu.memory_space<smem>>
    %256 = vector.extract_strided_slice %249 {offsets = [0, 1, 0], sizes = [2, 16, 16], strides = [1, 1, 1]} : vector<2x24x16xf32> to vector<2x16x16xf32>
    %257 = vector.broadcast %255 : f32 to vector<2x16x16xf32>
    %258 = arith.mulf %257, %256 : vector<2x16x16xf32>
    %259 = arith.addf %254, %258 : vector<2x16x16xf32>
    %c18_183 = arith.constant 18 : index
    %260 = memref.load %arg6[%c18_183] : memref<99xf32, #tpu.memory_space<smem>>
    %261 = vector.extract_strided_slice %249 {offsets = [0, 2, 0], sizes = [2, 16, 16], strides = [1, 1, 1]} : vector<2x24x16xf32> to vector<2x16x16xf32>
    %262 = vector.broadcast %260 : f32 to vector<2x16x16xf32>
    %263 = arith.mulf %262, %261 : vector<2x16x16xf32>
    %264 = arith.addf %259, %263 : vector<2x16x16xf32>
    %c25 = arith.constant 25 : index
    %265 = memref.load %arg6[%c25] : memref<99xf32, #tpu.memory_space<smem>>
    %266 = vector.extract_strided_slice %249 {offsets = [0, 3, 0], sizes = [2, 16, 16], strides = [1, 1, 1]} : vector<2x24x16xf32> to vector<2x16x16xf32>
    %267 = vector.broadcast %265 : f32 to vector<2x16x16xf32>
    %268 = arith.mulf %267, %266 : vector<2x16x16xf32>
    %269 = arith.addf %264, %268 : vector<2x16x16xf32>
    %c32_184 = arith.constant 32 : index
    %270 = memref.load %arg6[%c32_184] : memref<99xf32, #tpu.memory_space<smem>>
    %271 = vector.extract_strided_slice %249 {offsets = [0, 4, 0], sizes = [2, 16, 16], strides = [1, 1, 1]} : vector<2x24x16xf32> to vector<2x16x16xf32>
    %272 = vector.broadcast %270 : f32 to vector<2x16x16xf32>
    %273 = arith.mulf %272, %271 : vector<2x16x16xf32>
    %274 = arith.addf %269, %273 : vector<2x16x16xf32>
    %c39 = arith.constant 39 : index
    %275 = memref.load %arg6[%c39] : memref<99xf32, #tpu.memory_space<smem>>
    %276 = vector.extract_strided_slice %249 {offsets = [0, 5, 0], sizes = [2, 16, 16], strides = [1, 1, 1]} : vector<2x24x16xf32> to vector<2x16x16xf32>
    %277 = vector.broadcast %275 : f32 to vector<2x16x16xf32>
    %278 = arith.mulf %277, %276 : vector<2x16x16xf32>
    %279 = arith.addf %274, %278 : vector<2x16x16xf32>
    %c46 = arith.constant 46 : index
    %280 = memref.load %arg6[%c46] : memref<99xf32, #tpu.memory_space<smem>>
    %281 = vector.extract_strided_slice %249 {offsets = [0, 6, 0], sizes = [2, 16, 16], strides = [1, 1, 1]} : vector<2x24x16xf32> to vector<2x16x16xf32>
    %282 = vector.broadcast %280 : f32 to vector<2x16x16xf32>
    %283 = arith.mulf %282, %281 : vector<2x16x16xf32>
    %284 = arith.addf %279, %283 : vector<2x16x16xf32>
    %c0_185 = arith.constant 0 : index
    %c0_186 = arith.constant 0 : index
    %c0_187 = arith.constant 0 : index
    %c5_188 = arith.constant 5 : index
    %285 = vector.load %arg8[%c0_185, %c0_186, %c0_187, %c5_188] : memref<2x2x24x128xf32, #tpu.memory_space<vmem>>, vector<1x2x24x16xf32>
    %286 = vector.shape_cast %285 : vector<1x2x24x16xf32> to vector<2x24x16xf32>
    %c5_189 = arith.constant 5 : index
    %287 = memref.load %arg6[%c5_189] : memref<99xf32, #tpu.memory_space<smem>>
    %288 = vector.extract_strided_slice %286 {offsets = [0, 0, 0], sizes = [2, 16, 16], strides = [1, 1, 1]} : vector<2x24x16xf32> to vector<2x16x16xf32>
    %289 = vector.broadcast %287 : f32 to vector<2x16x16xf32>
    %290 = arith.mulf %289, %288 : vector<2x16x16xf32>
    %291 = arith.addf %284, %290 : vector<2x16x16xf32>
    %c12_190 = arith.constant 12 : index
    %292 = memref.load %arg6[%c12_190] : memref<99xf32, #tpu.memory_space<smem>>
    %293 = vector.extract_strided_slice %286 {offsets = [0, 1, 0], sizes = [2, 16, 16], strides = [1, 1, 1]} : vector<2x24x16xf32> to vector<2x16x16xf32>
    %294 = vector.broadcast %292 : f32 to vector<2x16x16xf32>
    %295 = arith.mulf %294, %293 : vector<2x16x16xf32>
    %296 = arith.addf %291, %295 : vector<2x16x16xf32>
    %c19 = arith.constant 19 : index
    %297 = memref.load %arg6[%c19] : memref<99xf32, #tpu.memory_space<smem>>
    %298 = vector.extract_strided_slice %286 {offsets = [0, 2, 0], sizes = [2, 16, 16], strides = [1, 1, 1]} : vector<2x24x16xf32> to vector<2x16x16xf32>
    %299 = vector.broadcast %297 : f32 to vector<2x16x16xf32>
    %300 = arith.mulf %299, %298 : vector<2x16x16xf32>
    %301 = arith.addf %296, %300 : vector<2x16x16xf32>
    %c26 = arith.constant 26 : index
    %302 = memref.load %arg6[%c26] : memref<99xf32, #tpu.memory_space<smem>>
    %303 = vector.extract_strided_slice %286 {offsets = [0, 3, 0], sizes = [2, 16, 16], strides = [1, 1, 1]} : vector<2x24x16xf32> to vector<2x16x16xf32>
    %304 = vector.broadcast %302 : f32 to vector<2x16x16xf32>
    %305 = arith.mulf %304, %303 : vector<2x16x16xf32>
    %306 = arith.addf %301, %305 : vector<2x16x16xf32>
    %c33 = arith.constant 33 : index
    %307 = memref.load %arg6[%c33] : memref<99xf32, #tpu.memory_space<smem>>
    %308 = vector.extract_strided_slice %286 {offsets = [0, 4, 0], sizes = [2, 16, 16], strides = [1, 1, 1]} : vector<2x24x16xf32> to vector<2x16x16xf32>
    %309 = vector.broadcast %307 : f32 to vector<2x16x16xf32>
    %310 = arith.mulf %309, %308 : vector<2x16x16xf32>
    %311 = arith.addf %306, %310 : vector<2x16x16xf32>
    %c40 = arith.constant 40 : index
    %312 = memref.load %arg6[%c40] : memref<99xf32, #tpu.memory_space<smem>>
    %313 = vector.extract_strided_slice %286 {offsets = [0, 5, 0], sizes = [2, 16, 16], strides = [1, 1, 1]} : vector<2x24x16xf32> to vector<2x16x16xf32>
    %314 = vector.broadcast %312 : f32 to vector<2x16x16xf32>
    %315 = arith.mulf %314, %313 : vector<2x16x16xf32>
    %316 = arith.addf %311, %315 : vector<2x16x16xf32>
    %c47 = arith.constant 47 : index
    %317 = memref.load %arg6[%c47] : memref<99xf32, #tpu.memory_space<smem>>
    %318 = vector.extract_strided_slice %286 {offsets = [0, 6, 0], sizes = [2, 16, 16], strides = [1, 1, 1]} : vector<2x24x16xf32> to vector<2x16x16xf32>
    %319 = vector.broadcast %317 : f32 to vector<2x16x16xf32>
    %320 = arith.mulf %319, %318 : vector<2x16x16xf32>
    %321 = arith.addf %316, %320 : vector<2x16x16xf32>
    %c0_191 = arith.constant 0 : index
    %c0_192 = arith.constant 0 : index
    %c0_193 = arith.constant 0 : index
    %c6_194 = arith.constant 6 : index
    %322 = vector.load %arg8[%c0_191, %c0_192, %c0_193, %c6_194] : memref<2x2x24x128xf32, #tpu.memory_space<vmem>>, vector<1x2x24x16xf32>
    %323 = vector.shape_cast %322 : vector<1x2x24x16xf32> to vector<2x24x16xf32>
    %c6_195 = arith.constant 6 : index
    %324 = memref.load %arg6[%c6_195] : memref<99xf32, #tpu.memory_space<smem>>
    %325 = vector.extract_strided_slice %323 {offsets = [0, 0, 0], sizes = [2, 16, 16], strides = [1, 1, 1]} : vector<2x24x16xf32> to vector<2x16x16xf32>
    %326 = vector.broadcast %324 : f32 to vector<2x16x16xf32>
    %327 = arith.mulf %326, %325 : vector<2x16x16xf32>
    %328 = arith.addf %321, %327 : vector<2x16x16xf32>
    %c13_196 = arith.constant 13 : index
    %329 = memref.load %arg6[%c13_196] : memref<99xf32, #tpu.memory_space<smem>>
    %330 = vector.extract_strided_slice %323 {offsets = [0, 1, 0], sizes = [2, 16, 16], strides = [1, 1, 1]} : vector<2x24x16xf32> to vector<2x16x16xf32>
    %331 = vector.broadcast %329 : f32 to vector<2x16x16xf32>
    %332 = arith.mulf %331, %330 : vector<2x16x16xf32>
    %333 = arith.addf %328, %332 : vector<2x16x16xf32>
    %c20 = arith.constant 20 : index
    %334 = memref.load %arg6[%c20] : memref<99xf32, #tpu.memory_space<smem>>
    %335 = vector.extract_strided_slice %323 {offsets = [0, 2, 0], sizes = [2, 16, 16], strides = [1, 1, 1]} : vector<2x24x16xf32> to vector<2x16x16xf32>
    %336 = vector.broadcast %334 : f32 to vector<2x16x16xf32>
    %337 = arith.mulf %336, %335 : vector<2x16x16xf32>
    %338 = arith.addf %333, %337 : vector<2x16x16xf32>
    %c27 = arith.constant 27 : index
    %339 = memref.load %arg6[%c27] : memref<99xf32, #tpu.memory_space<smem>>
    %340 = vector.extract_strided_slice %323 {offsets = [0, 3, 0], sizes = [2, 16, 16], strides = [1, 1, 1]} : vector<2x24x16xf32> to vector<2x16x16xf32>
    %341 = vector.broadcast %339 : f32 to vector<2x16x16xf32>
    %342 = arith.mulf %341, %340 : vector<2x16x16xf32>
    %343 = arith.addf %338, %342 : vector<2x16x16xf32>
    %c34 = arith.constant 34 : index
    %344 = memref.load %arg6[%c34] : memref<99xf32, #tpu.memory_space<smem>>
    %345 = vector.extract_strided_slice %323 {offsets = [0, 4, 0], sizes = [2, 16, 16], strides = [1, 1, 1]} : vector<2x24x16xf32> to vector<2x16x16xf32>
    %346 = vector.broadcast %344 : f32 to vector<2x16x16xf32>
    %347 = arith.mulf %346, %345 : vector<2x16x16xf32>
    %348 = arith.addf %343, %347 : vector<2x16x16xf32>
    %c41 = arith.constant 41 : index
    %349 = memref.load %arg6[%c41] : memref<99xf32, #tpu.memory_space<smem>>
    %350 = vector.extract_strided_slice %323 {offsets = [0, 5, 0], sizes = [2, 16, 16], strides = [1, 1, 1]} : vector<2x24x16xf32> to vector<2x16x16xf32>
    %351 = vector.broadcast %349 : f32 to vector<2x16x16xf32>
    %352 = arith.mulf %351, %350 : vector<2x16x16xf32>
    %353 = arith.addf %348, %352 : vector<2x16x16xf32>
    %c48_197 = arith.constant 48 : index
    %354 = memref.load %arg6[%c48_197] : memref<99xf32, #tpu.memory_space<smem>>
    %355 = vector.extract_strided_slice %323 {offsets = [0, 6, 0], sizes = [2, 16, 16], strides = [1, 1, 1]} : vector<2x24x16xf32> to vector<2x16x16xf32>
    %356 = vector.broadcast %354 : f32 to vector<2x16x16xf32>
    %357 = arith.mulf %356, %355 : vector<2x16x16xf32>
    %358 = arith.addf %353, %357 : vector<2x16x16xf32>
    %c1_198 = arith.constant 1 : index
    %c0_199 = arith.constant 0 : index
    %c0_200 = arith.constant 0 : index
    %c0_201 = arith.constant 0 : index
    %359 = vector.load %arg8[%c1_198, %c0_199, %c0_200, %c0_201] : memref<2x2x24x128xf32, #tpu.memory_space<vmem>>, vector<1x2x24x16xf32>
    %360 = vector.shape_cast %359 : vector<1x2x24x16xf32> to vector<2x24x16xf32>
    %c49 = arith.constant 49 : index
    %361 = memref.load %arg6[%c49] : memref<99xf32, #tpu.memory_space<smem>>
    %362 = vector.extract_strided_slice %360 {offsets = [0, 0, 0], sizes = [2, 16, 16], strides = [1, 1, 1]} : vector<2x24x16xf32> to vector<2x16x16xf32>
    %363 = vector.broadcast %361 : f32 to vector<2x16x16xf32>
    %364 = arith.mulf %363, %362 : vector<2x16x16xf32>
    %365 = arith.addf %358, %364 : vector<2x16x16xf32>
    %c56 = arith.constant 56 : index
    %366 = memref.load %arg6[%c56] : memref<99xf32, #tpu.memory_space<smem>>
    %367 = vector.extract_strided_slice %360 {offsets = [0, 1, 0], sizes = [2, 16, 16], strides = [1, 1, 1]} : vector<2x24x16xf32> to vector<2x16x16xf32>
    %368 = vector.broadcast %366 : f32 to vector<2x16x16xf32>
    %369 = arith.mulf %368, %367 : vector<2x16x16xf32>
    %370 = arith.addf %365, %369 : vector<2x16x16xf32>
    %c63 = arith.constant 63 : index
    %371 = memref.load %arg6[%c63] : memref<99xf32, #tpu.memory_space<smem>>
    %372 = vector.extract_strided_slice %360 {offsets = [0, 2, 0], sizes = [2, 16, 16], strides = [1, 1, 1]} : vector<2x24x16xf32> to vector<2x16x16xf32>
    %373 = vector.broadcast %371 : f32 to vector<2x16x16xf32>
    %374 = arith.mulf %373, %372 : vector<2x16x16xf32>
    %375 = arith.addf %370, %374 : vector<2x16x16xf32>
    %c70 = arith.constant 70 : index
    %376 = memref.load %arg6[%c70] : memref<99xf32, #tpu.memory_space<smem>>
    %377 = vector.extract_strided_slice %360 {offsets = [0, 3, 0], sizes = [2, 16, 16], strides = [1, 1, 1]} : vector<2x24x16xf32> to vector<2x16x16xf32>
    %378 = vector.broadcast %376 : f32 to vector<2x16x16xf32>
    %379 = arith.mulf %378, %377 : vector<2x16x16xf32>
    %380 = arith.addf %375, %379 : vector<2x16x16xf32>
    %c77 = arith.constant 77 : index
    %381 = memref.load %arg6[%c77] : memref<99xf32, #tpu.memory_space<smem>>
    %382 = vector.extract_strided_slice %360 {offsets = [0, 4, 0], sizes = [2, 16, 16], strides = [1, 1, 1]} : vector<2x24x16xf32> to vector<2x16x16xf32>
    %383 = vector.broadcast %381 : f32 to vector<2x16x16xf32>
    %384 = arith.mulf %383, %382 : vector<2x16x16xf32>
    %385 = arith.addf %380, %384 : vector<2x16x16xf32>
    %c84 = arith.constant 84 : index
    %386 = memref.load %arg6[%c84] : memref<99xf32, #tpu.memory_space<smem>>
    %387 = vector.extract_strided_slice %360 {offsets = [0, 5, 0], sizes = [2, 16, 16], strides = [1, 1, 1]} : vector<2x24x16xf32> to vector<2x16x16xf32>
    %388 = vector.broadcast %386 : f32 to vector<2x16x16xf32>
    %389 = arith.mulf %388, %387 : vector<2x16x16xf32>
    %390 = arith.addf %385, %389 : vector<2x16x16xf32>
    %c91 = arith.constant 91 : index
    %391 = memref.load %arg6[%c91] : memref<99xf32, #tpu.memory_space<smem>>
    %392 = vector.extract_strided_slice %360 {offsets = [0, 6, 0], sizes = [2, 16, 16], strides = [1, 1, 1]} : vector<2x24x16xf32> to vector<2x16x16xf32>
    %393 = vector.broadcast %391 : f32 to vector<2x16x16xf32>
    %394 = arith.mulf %393, %392 : vector<2x16x16xf32>
    %395 = arith.addf %390, %394 : vector<2x16x16xf32>
    %c1_202 = arith.constant 1 : index
    %c0_203 = arith.constant 0 : index
    %c0_204 = arith.constant 0 : index
    %c1_205 = arith.constant 1 : index
    %396 = vector.load %arg8[%c1_202, %c0_203, %c0_204, %c1_205] : memref<2x2x24x128xf32, #tpu.memory_space<vmem>>, vector<1x2x24x16xf32>
    %397 = vector.shape_cast %396 : vector<1x2x24x16xf32> to vector<2x24x16xf32>
    %c50 = arith.constant 50 : index
    %398 = memref.load %arg6[%c50] : memref<99xf32, #tpu.memory_space<smem>>
    %399 = vector.extract_strided_slice %397 {offsets = [0, 0, 0], sizes = [2, 16, 16], strides = [1, 1, 1]} : vector<2x24x16xf32> to vector<2x16x16xf32>
    %400 = vector.broadcast %398 : f32 to vector<2x16x16xf32>
    %401 = arith.mulf %400, %399 : vector<2x16x16xf32>
    %402 = arith.addf %395, %401 : vector<2x16x16xf32>
    %c57 = arith.constant 57 : index
    %403 = memref.load %arg6[%c57] : memref<99xf32, #tpu.memory_space<smem>>
    %404 = vector.extract_strided_slice %397 {offsets = [0, 1, 0], sizes = [2, 16, 16], strides = [1, 1, 1]} : vector<2x24x16xf32> to vector<2x16x16xf32>
    %405 = vector.broadcast %403 : f32 to vector<2x16x16xf32>
    %406 = arith.mulf %405, %404 : vector<2x16x16xf32>
    %407 = arith.addf %402, %406 : vector<2x16x16xf32>
    %c64_206 = arith.constant 64 : index
    %408 = memref.load %arg6[%c64_206] : memref<99xf32, #tpu.memory_space<smem>>
    %409 = vector.extract_strided_slice %397 {offsets = [0, 2, 0], sizes = [2, 16, 16], strides = [1, 1, 1]} : vector<2x24x16xf32> to vector<2x16x16xf32>
    %410 = vector.broadcast %408 : f32 to vector<2x16x16xf32>
    %411 = arith.mulf %410, %409 : vector<2x16x16xf32>
    %412 = arith.addf %407, %411 : vector<2x16x16xf32>
    %c71 = arith.constant 71 : index
    %413 = memref.load %arg6[%c71] : memref<99xf32, #tpu.memory_space<smem>>
    %414 = vector.extract_strided_slice %397 {offsets = [0, 3, 0], sizes = [2, 16, 16], strides = [1, 1, 1]} : vector<2x24x16xf32> to vector<2x16x16xf32>
    %415 = vector.broadcast %413 : f32 to vector<2x16x16xf32>
    %416 = arith.mulf %415, %414 : vector<2x16x16xf32>
    %417 = arith.addf %412, %416 : vector<2x16x16xf32>
    %c78 = arith.constant 78 : index
    %418 = memref.load %arg6[%c78] : memref<99xf32, #tpu.memory_space<smem>>
    %419 = vector.extract_strided_slice %397 {offsets = [0, 4, 0], sizes = [2, 16, 16], strides = [1, 1, 1]} : vector<2x24x16xf32> to vector<2x16x16xf32>
    %420 = vector.broadcast %418 : f32 to vector<2x16x16xf32>
    %421 = arith.mulf %420, %419 : vector<2x16x16xf32>
    %422 = arith.addf %417, %421 : vector<2x16x16xf32>
    %c85 = arith.constant 85 : index
    %423 = memref.load %arg6[%c85] : memref<99xf32, #tpu.memory_space<smem>>
    %424 = vector.extract_strided_slice %397 {offsets = [0, 5, 0], sizes = [2, 16, 16], strides = [1, 1, 1]} : vector<2x24x16xf32> to vector<2x16x16xf32>
    %425 = vector.broadcast %423 : f32 to vector<2x16x16xf32>
    %426 = arith.mulf %425, %424 : vector<2x16x16xf32>
    %427 = arith.addf %422, %426 : vector<2x16x16xf32>
    %c92 = arith.constant 92 : index
    %428 = memref.load %arg6[%c92] : memref<99xf32, #tpu.memory_space<smem>>
    %429 = vector.extract_strided_slice %397 {offsets = [0, 6, 0], sizes = [2, 16, 16], strides = [1, 1, 1]} : vector<2x24x16xf32> to vector<2x16x16xf32>
    %430 = vector.broadcast %428 : f32 to vector<2x16x16xf32>
    %431 = arith.mulf %430, %429 : vector<2x16x16xf32>
    %432 = arith.addf %427, %431 : vector<2x16x16xf32>
    %c1_207 = arith.constant 1 : index
    %c0_208 = arith.constant 0 : index
    %c0_209 = arith.constant 0 : index
    %c2_210 = arith.constant 2 : index
    %433 = vector.load %arg8[%c1_207, %c0_208, %c0_209, %c2_210] : memref<2x2x24x128xf32, #tpu.memory_space<vmem>>, vector<1x2x24x16xf32>
    %434 = vector.shape_cast %433 : vector<1x2x24x16xf32> to vector<2x24x16xf32>
    %c51 = arith.constant 51 : index
    %435 = memref.load %arg6[%c51] : memref<99xf32, #tpu.memory_space<smem>>
    %436 = vector.extract_strided_slice %434 {offsets = [0, 0, 0], sizes = [2, 16, 16], strides = [1, 1, 1]} : vector<2x24x16xf32> to vector<2x16x16xf32>
    %437 = vector.broadcast %435 : f32 to vector<2x16x16xf32>
    %438 = arith.mulf %437, %436 : vector<2x16x16xf32>
    %439 = arith.addf %432, %438 : vector<2x16x16xf32>
    %c58 = arith.constant 58 : index
    %440 = memref.load %arg6[%c58] : memref<99xf32, #tpu.memory_space<smem>>
    %441 = vector.extract_strided_slice %434 {offsets = [0, 1, 0], sizes = [2, 16, 16], strides = [1, 1, 1]} : vector<2x24x16xf32> to vector<2x16x16xf32>
    %442 = vector.broadcast %440 : f32 to vector<2x16x16xf32>
    %443 = arith.mulf %442, %441 : vector<2x16x16xf32>
    %444 = arith.addf %439, %443 : vector<2x16x16xf32>
    %c65 = arith.constant 65 : index
    %445 = memref.load %arg6[%c65] : memref<99xf32, #tpu.memory_space<smem>>
    %446 = vector.extract_strided_slice %434 {offsets = [0, 2, 0], sizes = [2, 16, 16], strides = [1, 1, 1]} : vector<2x24x16xf32> to vector<2x16x16xf32>
    %447 = vector.broadcast %445 : f32 to vector<2x16x16xf32>
    %448 = arith.mulf %447, %446 : vector<2x16x16xf32>
    %449 = arith.addf %444, %448 : vector<2x16x16xf32>
    %c72 = arith.constant 72 : index
    %450 = memref.load %arg6[%c72] : memref<99xf32, #tpu.memory_space<smem>>
    %451 = vector.extract_strided_slice %434 {offsets = [0, 3, 0], sizes = [2, 16, 16], strides = [1, 1, 1]} : vector<2x24x16xf32> to vector<2x16x16xf32>
    %452 = vector.broadcast %450 : f32 to vector<2x16x16xf32>
    %453 = arith.mulf %452, %451 : vector<2x16x16xf32>
    %454 = arith.addf %449, %453 : vector<2x16x16xf32>
    %c79 = arith.constant 79 : index
    %455 = memref.load %arg6[%c79] : memref<99xf32, #tpu.memory_space<smem>>
    %456 = vector.extract_strided_slice %434 {offsets = [0, 4, 0], sizes = [2, 16, 16], strides = [1, 1, 1]} : vector<2x24x16xf32> to vector<2x16x16xf32>
    %457 = vector.broadcast %455 : f32 to vector<2x16x16xf32>
    %458 = arith.mulf %457, %456 : vector<2x16x16xf32>
    %459 = arith.addf %454, %458 : vector<2x16x16xf32>
    %c86 = arith.constant 86 : index
    %460 = memref.load %arg6[%c86] : memref<99xf32, #tpu.memory_space<smem>>
    %461 = vector.extract_strided_slice %434 {offsets = [0, 5, 0], sizes = [2, 16, 16], strides = [1, 1, 1]} : vector<2x24x16xf32> to vector<2x16x16xf32>
    %462 = vector.broadcast %460 : f32 to vector<2x16x16xf32>
    %463 = arith.mulf %462, %461 : vector<2x16x16xf32>
    %464 = arith.addf %459, %463 : vector<2x16x16xf32>
    %c93 = arith.constant 93 : index
    %465 = memref.load %arg6[%c93] : memref<99xf32, #tpu.memory_space<smem>>
    %466 = vector.extract_strided_slice %434 {offsets = [0, 6, 0], sizes = [2, 16, 16], strides = [1, 1, 1]} : vector<2x24x16xf32> to vector<2x16x16xf32>
    %467 = vector.broadcast %465 : f32 to vector<2x16x16xf32>
    %468 = arith.mulf %467, %466 : vector<2x16x16xf32>
    %469 = arith.addf %464, %468 : vector<2x16x16xf32>
    %c1_211 = arith.constant 1 : index
    %c0_212 = arith.constant 0 : index
    %c0_213 = arith.constant 0 : index
    %c3_214 = arith.constant 3 : index
    %470 = vector.load %arg8[%c1_211, %c0_212, %c0_213, %c3_214] : memref<2x2x24x128xf32, #tpu.memory_space<vmem>>, vector<1x2x24x16xf32>
    %471 = vector.shape_cast %470 : vector<1x2x24x16xf32> to vector<2x24x16xf32>
    %c52 = arith.constant 52 : index
    %472 = memref.load %arg6[%c52] : memref<99xf32, #tpu.memory_space<smem>>
    %473 = vector.extract_strided_slice %471 {offsets = [0, 0, 0], sizes = [2, 16, 16], strides = [1, 1, 1]} : vector<2x24x16xf32> to vector<2x16x16xf32>
    %474 = vector.broadcast %472 : f32 to vector<2x16x16xf32>
    %475 = arith.mulf %474, %473 : vector<2x16x16xf32>
    %476 = arith.addf %469, %475 : vector<2x16x16xf32>
    %c59 = arith.constant 59 : index
    %477 = memref.load %arg6[%c59] : memref<99xf32, #tpu.memory_space<smem>>
    %478 = vector.extract_strided_slice %471 {offsets = [0, 1, 0], sizes = [2, 16, 16], strides = [1, 1, 1]} : vector<2x24x16xf32> to vector<2x16x16xf32>
    %479 = vector.broadcast %477 : f32 to vector<2x16x16xf32>
    %480 = arith.mulf %479, %478 : vector<2x16x16xf32>
    %481 = arith.addf %476, %480 : vector<2x16x16xf32>
    %c66 = arith.constant 66 : index
    %482 = memref.load %arg6[%c66] : memref<99xf32, #tpu.memory_space<smem>>
    %483 = vector.extract_strided_slice %471 {offsets = [0, 2, 0], sizes = [2, 16, 16], strides = [1, 1, 1]} : vector<2x24x16xf32> to vector<2x16x16xf32>
    %484 = vector.broadcast %482 : f32 to vector<2x16x16xf32>
    %485 = arith.mulf %484, %483 : vector<2x16x16xf32>
    %486 = arith.addf %481, %485 : vector<2x16x16xf32>
    %c73 = arith.constant 73 : index
    %487 = memref.load %arg6[%c73] : memref<99xf32, #tpu.memory_space<smem>>
    %488 = vector.extract_strided_slice %471 {offsets = [0, 3, 0], sizes = [2, 16, 16], strides = [1, 1, 1]} : vector<2x24x16xf32> to vector<2x16x16xf32>
    %489 = vector.broadcast %487 : f32 to vector<2x16x16xf32>
    %490 = arith.mulf %489, %488 : vector<2x16x16xf32>
    %491 = arith.addf %486, %490 : vector<2x16x16xf32>
    %c80_215 = arith.constant 80 : index
    %492 = memref.load %arg6[%c80_215] : memref<99xf32, #tpu.memory_space<smem>>
    %493 = vector.extract_strided_slice %471 {offsets = [0, 4, 0], sizes = [2, 16, 16], strides = [1, 1, 1]} : vector<2x24x16xf32> to vector<2x16x16xf32>
    %494 = vector.broadcast %492 : f32 to vector<2x16x16xf32>
    %495 = arith.mulf %494, %493 : vector<2x16x16xf32>
    %496 = arith.addf %491, %495 : vector<2x16x16xf32>
    %c87 = arith.constant 87 : index
    %497 = memref.load %arg6[%c87] : memref<99xf32, #tpu.memory_space<smem>>
    %498 = vector.extract_strided_slice %471 {offsets = [0, 5, 0], sizes = [2, 16, 16], strides = [1, 1, 1]} : vector<2x24x16xf32> to vector<2x16x16xf32>
    %499 = vector.broadcast %497 : f32 to vector<2x16x16xf32>
    %500 = arith.mulf %499, %498 : vector<2x16x16xf32>
    %501 = arith.addf %496, %500 : vector<2x16x16xf32>
    %c94 = arith.constant 94 : index
    %502 = memref.load %arg6[%c94] : memref<99xf32, #tpu.memory_space<smem>>
    %503 = vector.extract_strided_slice %471 {offsets = [0, 6, 0], sizes = [2, 16, 16], strides = [1, 1, 1]} : vector<2x24x16xf32> to vector<2x16x16xf32>
    %504 = vector.broadcast %502 : f32 to vector<2x16x16xf32>
    %505 = arith.mulf %504, %503 : vector<2x16x16xf32>
    %506 = arith.addf %501, %505 : vector<2x16x16xf32>
    %c1_216 = arith.constant 1 : index
    %c0_217 = arith.constant 0 : index
    %c0_218 = arith.constant 0 : index
    %c4_219 = arith.constant 4 : index
    %507 = vector.load %arg8[%c1_216, %c0_217, %c0_218, %c4_219] : memref<2x2x24x128xf32, #tpu.memory_space<vmem>>, vector<1x2x24x16xf32>
    %508 = vector.shape_cast %507 : vector<1x2x24x16xf32> to vector<2x24x16xf32>
    %c53 = arith.constant 53 : index
    %509 = memref.load %arg6[%c53] : memref<99xf32, #tpu.memory_space<smem>>
    %510 = vector.extract_strided_slice %508 {offsets = [0, 0, 0], sizes = [2, 16, 16], strides = [1, 1, 1]} : vector<2x24x16xf32> to vector<2x16x16xf32>
    %511 = vector.broadcast %509 : f32 to vector<2x16x16xf32>
    %512 = arith.mulf %511, %510 : vector<2x16x16xf32>
    %513 = arith.addf %506, %512 : vector<2x16x16xf32>
    %c60 = arith.constant 60 : index
    %514 = memref.load %arg6[%c60] : memref<99xf32, #tpu.memory_space<smem>>
    %515 = vector.extract_strided_slice %508 {offsets = [0, 1, 0], sizes = [2, 16, 16], strides = [1, 1, 1]} : vector<2x24x16xf32> to vector<2x16x16xf32>
    %516 = vector.broadcast %514 : f32 to vector<2x16x16xf32>
    %517 = arith.mulf %516, %515 : vector<2x16x16xf32>
    %518 = arith.addf %513, %517 : vector<2x16x16xf32>
    %c67 = arith.constant 67 : index
    %519 = memref.load %arg6[%c67] : memref<99xf32, #tpu.memory_space<smem>>
    %520 = vector.extract_strided_slice %508 {offsets = [0, 2, 0], sizes = [2, 16, 16], strides = [1, 1, 1]} : vector<2x24x16xf32> to vector<2x16x16xf32>
    %521 = vector.broadcast %519 : f32 to vector<2x16x16xf32>
    %522 = arith.mulf %521, %520 : vector<2x16x16xf32>
    %523 = arith.addf %518, %522 : vector<2x16x16xf32>
    %c74 = arith.constant 74 : index
    %524 = memref.load %arg6[%c74] : memref<99xf32, #tpu.memory_space<smem>>
    %525 = vector.extract_strided_slice %508 {offsets = [0, 3, 0], sizes = [2, 16, 16], strides = [1, 1, 1]} : vector<2x24x16xf32> to vector<2x16x16xf32>
    %526 = vector.broadcast %524 : f32 to vector<2x16x16xf32>
    %527 = arith.mulf %526, %525 : vector<2x16x16xf32>
    %528 = arith.addf %523, %527 : vector<2x16x16xf32>
    %c81 = arith.constant 81 : index
    %529 = memref.load %arg6[%c81] : memref<99xf32, #tpu.memory_space<smem>>
    %530 = vector.extract_strided_slice %508 {offsets = [0, 4, 0], sizes = [2, 16, 16], strides = [1, 1, 1]} : vector<2x24x16xf32> to vector<2x16x16xf32>
    %531 = vector.broadcast %529 : f32 to vector<2x16x16xf32>
    %532 = arith.mulf %531, %530 : vector<2x16x16xf32>
    %533 = arith.addf %528, %532 : vector<2x16x16xf32>
    %c88 = arith.constant 88 : index
    %534 = memref.load %arg6[%c88] : memref<99xf32, #tpu.memory_space<smem>>
    %535 = vector.extract_strided_slice %508 {offsets = [0, 5, 0], sizes = [2, 16, 16], strides = [1, 1, 1]} : vector<2x24x16xf32> to vector<2x16x16xf32>
    %536 = vector.broadcast %534 : f32 to vector<2x16x16xf32>
    %537 = arith.mulf %536, %535 : vector<2x16x16xf32>
    %538 = arith.addf %533, %537 : vector<2x16x16xf32>
    %c95 = arith.constant 95 : index
    %539 = memref.load %arg6[%c95] : memref<99xf32, #tpu.memory_space<smem>>
    %540 = vector.extract_strided_slice %508 {offsets = [0, 6, 0], sizes = [2, 16, 16], strides = [1, 1, 1]} : vector<2x24x16xf32> to vector<2x16x16xf32>
    %541 = vector.broadcast %539 : f32 to vector<2x16x16xf32>
    %542 = arith.mulf %541, %540 : vector<2x16x16xf32>
    %543 = arith.addf %538, %542 : vector<2x16x16xf32>
    %c1_220 = arith.constant 1 : index
    %c0_221 = arith.constant 0 : index
    %c0_222 = arith.constant 0 : index
    %c5_223 = arith.constant 5 : index
    %544 = vector.load %arg8[%c1_220, %c0_221, %c0_222, %c5_223] : memref<2x2x24x128xf32, #tpu.memory_space<vmem>>, vector<1x2x24x16xf32>
    %545 = vector.shape_cast %544 : vector<1x2x24x16xf32> to vector<2x24x16xf32>
    %c54 = arith.constant 54 : index
    %546 = memref.load %arg6[%c54] : memref<99xf32, #tpu.memory_space<smem>>
    %547 = vector.extract_strided_slice %545 {offsets = [0, 0, 0], sizes = [2, 16, 16], strides = [1, 1, 1]} : vector<2x24x16xf32> to vector<2x16x16xf32>
    %548 = vector.broadcast %546 : f32 to vector<2x16x16xf32>
    %549 = arith.mulf %548, %547 : vector<2x16x16xf32>
    %550 = arith.addf %543, %549 : vector<2x16x16xf32>
    %c61 = arith.constant 61 : index
    %551 = memref.load %arg6[%c61] : memref<99xf32, #tpu.memory_space<smem>>
    %552 = vector.extract_strided_slice %545 {offsets = [0, 1, 0], sizes = [2, 16, 16], strides = [1, 1, 1]} : vector<2x24x16xf32> to vector<2x16x16xf32>
    %553 = vector.broadcast %551 : f32 to vector<2x16x16xf32>
    %554 = arith.mulf %553, %552 : vector<2x16x16xf32>
    %555 = arith.addf %550, %554 : vector<2x16x16xf32>
    %c68 = arith.constant 68 : index
    %556 = memref.load %arg6[%c68] : memref<99xf32, #tpu.memory_space<smem>>
    %557 = vector.extract_strided_slice %545 {offsets = [0, 2, 0], sizes = [2, 16, 16], strides = [1, 1, 1]} : vector<2x24x16xf32> to vector<2x16x16xf32>
    %558 = vector.broadcast %556 : f32 to vector<2x16x16xf32>
    %559 = arith.mulf %558, %557 : vector<2x16x16xf32>
    %560 = arith.addf %555, %559 : vector<2x16x16xf32>
    %c75 = arith.constant 75 : index
    %561 = memref.load %arg6[%c75] : memref<99xf32, #tpu.memory_space<smem>>
    %562 = vector.extract_strided_slice %545 {offsets = [0, 3, 0], sizes = [2, 16, 16], strides = [1, 1, 1]} : vector<2x24x16xf32> to vector<2x16x16xf32>
    %563 = vector.broadcast %561 : f32 to vector<2x16x16xf32>
    %564 = arith.mulf %563, %562 : vector<2x16x16xf32>
    %565 = arith.addf %560, %564 : vector<2x16x16xf32>
    %c82 = arith.constant 82 : index
    %566 = memref.load %arg6[%c82] : memref<99xf32, #tpu.memory_space<smem>>
    %567 = vector.extract_strided_slice %545 {offsets = [0, 4, 0], sizes = [2, 16, 16], strides = [1, 1, 1]} : vector<2x24x16xf32> to vector<2x16x16xf32>
    %568 = vector.broadcast %566 : f32 to vector<2x16x16xf32>
    %569 = arith.mulf %568, %567 : vector<2x16x16xf32>
    %570 = arith.addf %565, %569 : vector<2x16x16xf32>
    %c89 = arith.constant 89 : index
    %571 = memref.load %arg6[%c89] : memref<99xf32, #tpu.memory_space<smem>>
    %572 = vector.extract_strided_slice %545 {offsets = [0, 5, 0], sizes = [2, 16, 16], strides = [1, 1, 1]} : vector<2x24x16xf32> to vector<2x16x16xf32>
    %573 = vector.broadcast %571 : f32 to vector<2x16x16xf32>
    %574 = arith.mulf %573, %572 : vector<2x16x16xf32>
    %575 = arith.addf %570, %574 : vector<2x16x16xf32>
    %c96_224 = arith.constant 96 : index
    %576 = memref.load %arg6[%c96_224] : memref<99xf32, #tpu.memory_space<smem>>
    %577 = vector.extract_strided_slice %545 {offsets = [0, 6, 0], sizes = [2, 16, 16], strides = [1, 1, 1]} : vector<2x24x16xf32> to vector<2x16x16xf32>
    %578 = vector.broadcast %576 : f32 to vector<2x16x16xf32>
    %579 = arith.mulf %578, %577 : vector<2x16x16xf32>
    %580 = arith.addf %575, %579 : vector<2x16x16xf32>
    %c1_225 = arith.constant 1 : index
    %c0_226 = arith.constant 0 : index
    %c0_227 = arith.constant 0 : index
    %c6_228 = arith.constant 6 : index
    %581 = vector.load %arg8[%c1_225, %c0_226, %c0_227, %c6_228] : memref<2x2x24x128xf32, #tpu.memory_space<vmem>>, vector<1x2x24x16xf32>
    %582 = vector.shape_cast %581 : vector<1x2x24x16xf32> to vector<2x24x16xf32>
    %c55 = arith.constant 55 : index
    %583 = memref.load %arg6[%c55] : memref<99xf32, #tpu.memory_space<smem>>
    %584 = vector.extract_strided_slice %582 {offsets = [0, 0, 0], sizes = [2, 16, 16], strides = [1, 1, 1]} : vector<2x24x16xf32> to vector<2x16x16xf32>
    %585 = vector.broadcast %583 : f32 to vector<2x16x16xf32>
    %586 = arith.mulf %585, %584 : vector<2x16x16xf32>
    %587 = arith.addf %580, %586 : vector<2x16x16xf32>
    %c62 = arith.constant 62 : index
    %588 = memref.load %arg6[%c62] : memref<99xf32, #tpu.memory_space<smem>>
    %589 = vector.extract_strided_slice %582 {offsets = [0, 1, 0], sizes = [2, 16, 16], strides = [1, 1, 1]} : vector<2x24x16xf32> to vector<2x16x16xf32>
    %590 = vector.broadcast %588 : f32 to vector<2x16x16xf32>
    %591 = arith.mulf %590, %589 : vector<2x16x16xf32>
    %592 = arith.addf %587, %591 : vector<2x16x16xf32>
    %c69 = arith.constant 69 : index
    %593 = memref.load %arg6[%c69] : memref<99xf32, #tpu.memory_space<smem>>
    %594 = vector.extract_strided_slice %582 {offsets = [0, 2, 0], sizes = [2, 16, 16], strides = [1, 1, 1]} : vector<2x24x16xf32> to vector<2x16x16xf32>
    %595 = vector.broadcast %593 : f32 to vector<2x16x16xf32>
    %596 = arith.mulf %595, %594 : vector<2x16x16xf32>
    %597 = arith.addf %592, %596 : vector<2x16x16xf32>
    %c76 = arith.constant 76 : index
    %598 = memref.load %arg6[%c76] : memref<99xf32, #tpu.memory_space<smem>>
    %599 = vector.extract_strided_slice %582 {offsets = [0, 3, 0], sizes = [2, 16, 16], strides = [1, 1, 1]} : vector<2x24x16xf32> to vector<2x16x16xf32>
    %600 = vector.broadcast %598 : f32 to vector<2x16x16xf32>
    %601 = arith.mulf %600, %599 : vector<2x16x16xf32>
    %602 = arith.addf %597, %601 : vector<2x16x16xf32>
    %c83 = arith.constant 83 : index
    %603 = memref.load %arg6[%c83] : memref<99xf32, #tpu.memory_space<smem>>
    %604 = vector.extract_strided_slice %582 {offsets = [0, 4, 0], sizes = [2, 16, 16], strides = [1, 1, 1]} : vector<2x24x16xf32> to vector<2x16x16xf32>
    %605 = vector.broadcast %603 : f32 to vector<2x16x16xf32>
    %606 = arith.mulf %605, %604 : vector<2x16x16xf32>
    %607 = arith.addf %602, %606 : vector<2x16x16xf32>
    %c90 = arith.constant 90 : index
    %608 = memref.load %arg6[%c90] : memref<99xf32, #tpu.memory_space<smem>>
    %609 = vector.extract_strided_slice %582 {offsets = [0, 5, 0], sizes = [2, 16, 16], strides = [1, 1, 1]} : vector<2x24x16xf32> to vector<2x16x16xf32>
    %610 = vector.broadcast %608 : f32 to vector<2x16x16xf32>
    %611 = arith.mulf %610, %609 : vector<2x16x16xf32>
    %612 = arith.addf %607, %611 : vector<2x16x16xf32>
    %c97 = arith.constant 97 : index
    %613 = memref.load %arg6[%c97] : memref<99xf32, #tpu.memory_space<smem>>
    %614 = vector.extract_strided_slice %582 {offsets = [0, 6, 0], sizes = [2, 16, 16], strides = [1, 1, 1]} : vector<2x24x16xf32> to vector<2x16x16xf32>
    %615 = vector.broadcast %613 : f32 to vector<2x16x16xf32>
    %616 = arith.mulf %615, %614 : vector<2x16x16xf32>
    %617 = arith.addf %612, %616 : vector<2x16x16xf32>
    %618 = vector.extract_strided_slice %617 {offsets = [0, 0, 0], sizes = [2, 1, 16], strides = [1, 1, 1]} : vector<2x16x16xf32> to vector<2x1x16xf32>
    %c0_229 = arith.constant 0 : index
    %c0_230 = arith.constant 0 : index
    %c0_231 = arith.constant 0 : index
    %619 = vector.load %arg10[%c0_229, %c0_230, %c0_231] : memref<2x1x256xf32, #tpu.memory_space<vmem>>, vector<2x1x16xf32>
    tpu.vector_store %arg10[%c0_229, %c0_230, %c0_231], %618 {strides = array<i32>} : memref<2x1x256xf32, #tpu.memory_space<vmem>>, vector<2x1x16xf32>,
    %620 = vector.extract_strided_slice %617 {offsets = [0, 1, 0], sizes = [2, 1, 16], strides = [1, 1, 1]} : vector<2x16x16xf32> to vector<2x1x16xf32>
    %c0_232 = arith.constant 0 : index
    %c0_233 = arith.constant 0 : index
    %c16_234 = arith.constant 16 : index
    %621 = vector.load %arg10[%c0_232, %c0_233, %c16_234] : memref<2x1x256xf32, #tpu.memory_space<vmem>>, vector<2x1x16xf32>
    tpu.vector_store %arg10[%c0_232, %c0_233, %c16_234], %620 {strides = array<i32>} : memref<2x1x256xf32, #tpu.memory_space<vmem>>, vector<2x1x16xf32>,
    %622 = vector.extract_strided_slice %617 {offsets = [0, 2, 0], sizes = [2, 1, 16], strides = [1, 1, 1]} : vector<2x16x16xf32> to vector<2x1x16xf32>
    %c0_235 = arith.constant 0 : index
    %c0_236 = arith.constant 0 : index
    %c32_237 = arith.constant 32 : index
    %623 = vector.load %arg10[%c0_235, %c0_236, %c32_237] : memref<2x1x256xf32, #tpu.memory_space<vmem>>, vector<2x1x16xf32>
    tpu.vector_store %arg10[%c0_235, %c0_236, %c32_237], %622 {strides = array<i32>} : memref<2x1x256xf32, #tpu.memory_space<vmem>>, vector<2x1x16xf32>,
    %624 = vector.extract_strided_slice %617 {offsets = [0, 3, 0], sizes = [2, 1, 16], strides = [1, 1, 1]} : vector<2x16x16xf32> to vector<2x1x16xf32>
    %c0_238 = arith.constant 0 : index
    %c0_239 = arith.constant 0 : index
    %c48_240 = arith.constant 48 : index
    %625 = vector.load %arg10[%c0_238, %c0_239, %c48_240] : memref<2x1x256xf32, #tpu.memory_space<vmem>>, vector<2x1x16xf32>
    tpu.vector_store %arg10[%c0_238, %c0_239, %c48_240], %624 {strides = array<i32>} : memref<2x1x256xf32, #tpu.memory_space<vmem>>, vector<2x1x16xf32>,
    %626 = vector.extract_strided_slice %617 {offsets = [0, 4, 0], sizes = [2, 1, 16], strides = [1, 1, 1]} : vector<2x16x16xf32> to vector<2x1x16xf32>
    %c0_241 = arith.constant 0 : index
    %c0_242 = arith.constant 0 : index
    %c64_243 = arith.constant 64 : index
    %627 = vector.load %arg10[%c0_241, %c0_242, %c64_243] : memref<2x1x256xf32, #tpu.memory_space<vmem>>, vector<2x1x16xf32>
    tpu.vector_store %arg10[%c0_241, %c0_242, %c64_243], %626 {strides = array<i32>} : memref<2x1x256xf32, #tpu.memory_space<vmem>>, vector<2x1x16xf32>,
    %628 = vector.extract_strided_slice %617 {offsets = [0, 5, 0], sizes = [2, 1, 16], strides = [1, 1, 1]} : vector<2x16x16xf32> to vector<2x1x16xf32>
    %c0_244 = arith.constant 0 : index
    %c0_245 = arith.constant 0 : index
    %c80_246 = arith.constant 80 : index
    %629 = vector.load %arg10[%c0_244, %c0_245, %c80_246] : memref<2x1x256xf32, #tpu.memory_space<vmem>>, vector<2x1x16xf32>
    tpu.vector_store %arg10[%c0_244, %c0_245, %c80_246], %628 {strides = array<i32>} : memref<2x1x256xf32, #tpu.memory_space<vmem>>, vector<2x1x16xf32>,
    %630 = vector.extract_strided_slice %617 {offsets = [0, 6, 0], sizes = [2, 1, 16], strides = [1, 1, 1]} : vector<2x16x16xf32> to vector<2x1x16xf32>
    %c0_247 = arith.constant 0 : index
    %c0_248 = arith.constant 0 : index
    %c96_249 = arith.constant 96 : index
    %631 = vector.load %arg10[%c0_247, %c0_248, %c96_249] : memref<2x1x256xf32, #tpu.memory_space<vmem>>, vector<2x1x16xf32>
    tpu.vector_store %arg10[%c0_247, %c0_248, %c96_249], %630 {strides = array<i32>} : memref<2x1x256xf32, #tpu.memory_space<vmem>>, vector<2x1x16xf32>,
    %632 = vector.extract_strided_slice %617 {offsets = [0, 7, 0], sizes = [2, 1, 16], strides = [1, 1, 1]} : vector<2x16x16xf32> to vector<2x1x16xf32>
    %c0_250 = arith.constant 0 : index
    %c0_251 = arith.constant 0 : index
    %c112_252 = arith.constant 112 : index
    %633 = vector.load %arg10[%c0_250, %c0_251, %c112_252] : memref<2x1x256xf32, #tpu.memory_space<vmem>>, vector<2x1x16xf32>
    tpu.vector_store %arg10[%c0_250, %c0_251, %c112_252], %632 {strides = array<i32>} : memref<2x1x256xf32, #tpu.memory_space<vmem>>, vector<2x1x16xf32>,
    %634 = vector.extract_strided_slice %617 {offsets = [0, 8, 0], sizes = [2, 1, 16], strides = [1, 1, 1]} : vector<2x16x16xf32> to vector<2x1x16xf32>
    %c0_253 = arith.constant 0 : index
    %c0_254 = arith.constant 0 : index
    %c128_255 = arith.constant 128 : index
    %635 = vector.load %arg10[%c0_253, %c0_254, %c128_255] : memref<2x1x256xf32, #tpu.memory_space<vmem>>, vector<2x1x16xf32>
    tpu.vector_store %arg10[%c0_253, %c0_254, %c128_255], %634 {strides = array<i32>} : memref<2x1x256xf32, #tpu.memory_space<vmem>>, vector<2x1x16xf32>,
    %636 = vector.extract_strided_slice %617 {offsets = [0, 9, 0], sizes = [2, 1, 16], strides = [1, 1, 1]} : vector<2x16x16xf32> to vector<2x1x16xf32>
    %c0_256 = arith.constant 0 : index
    %c0_257 = arith.constant 0 : index
    %c144_258 = arith.constant 144 : index
    %637 = vector.load %arg10[%c0_256, %c0_257, %c144_258] : memref<2x1x256xf32, #tpu.memory_space<vmem>>, vector<2x1x16xf32>
    tpu.vector_store %arg10[%c0_256, %c0_257, %c144_258], %636 {strides = array<i32>} : memref<2x1x256xf32, #tpu.memory_space<vmem>>, vector<2x1x16xf32>,
    %638 = vector.extract_strided_slice %617 {offsets = [0, 10, 0], sizes = [2, 1, 16], strides = [1, 1, 1]} : vector<2x16x16xf32> to vector<2x1x16xf32>
    %c0_259 = arith.constant 0 : index
    %c0_260 = arith.constant 0 : index
    %c160_261 = arith.constant 160 : index
    %639 = vector.load %arg10[%c0_259, %c0_260, %c160_261] : memref<2x1x256xf32, #tpu.memory_space<vmem>>, vector<2x1x16xf32>
    tpu.vector_store %arg10[%c0_259, %c0_260, %c160_261], %638 {strides = array<i32>} : memref<2x1x256xf32, #tpu.memory_space<vmem>>, vector<2x1x16xf32>,
    %640 = vector.extract_strided_slice %617 {offsets = [0, 11, 0], sizes = [2, 1, 16], strides = [1, 1, 1]} : vector<2x16x16xf32> to vector<2x1x16xf32>
    %c0_262 = arith.constant 0 : index
    %c0_263 = arith.constant 0 : index
    %c176_264 = arith.constant 176 : index
    %641 = vector.load %arg10[%c0_262, %c0_263, %c176_264] : memref<2x1x256xf32, #tpu.memory_space<vmem>>, vector<2x1x16xf32>
    tpu.vector_store %arg10[%c0_262, %c0_263, %c176_264], %640 {strides = array<i32>} : memref<2x1x256xf32, #tpu.memory_space<vmem>>, vector<2x1x16xf32>,
    %642 = vector.extract_strided_slice %617 {offsets = [0, 12, 0], sizes = [2, 1, 16], strides = [1, 1, 1]} : vector<2x16x16xf32> to vector<2x1x16xf32>
    %c0_265 = arith.constant 0 : index
    %c0_266 = arith.constant 0 : index
    %c192_267 = arith.constant 192 : index
    %643 = vector.load %arg10[%c0_265, %c0_266, %c192_267] : memref<2x1x256xf32, #tpu.memory_space<vmem>>, vector<2x1x16xf32>
    tpu.vector_store %arg10[%c0_265, %c0_266, %c192_267], %642 {strides = array<i32>} : memref<2x1x256xf32, #tpu.memory_space<vmem>>, vector<2x1x16xf32>,
    %644 = vector.extract_strided_slice %617 {offsets = [0, 13, 0], sizes = [2, 1, 16], strides = [1, 1, 1]} : vector<2x16x16xf32> to vector<2x1x16xf32>
    %c0_268 = arith.constant 0 : index
    %c0_269 = arith.constant 0 : index
    %c208_270 = arith.constant 208 : index
    %645 = vector.load %arg10[%c0_268, %c0_269, %c208_270] : memref<2x1x256xf32, #tpu.memory_space<vmem>>, vector<2x1x16xf32>
    tpu.vector_store %arg10[%c0_268, %c0_269, %c208_270], %644 {strides = array<i32>} : memref<2x1x256xf32, #tpu.memory_space<vmem>>, vector<2x1x16xf32>,
    %646 = vector.extract_strided_slice %617 {offsets = [0, 14, 0], sizes = [2, 1, 16], strides = [1, 1, 1]} : vector<2x16x16xf32> to vector<2x1x16xf32>
    %c0_271 = arith.constant 0 : index
    %c0_272 = arith.constant 0 : index
    %c224_273 = arith.constant 224 : index
    %647 = vector.load %arg10[%c0_271, %c0_272, %c224_273] : memref<2x1x256xf32, #tpu.memory_space<vmem>>, vector<2x1x16xf32>
    tpu.vector_store %arg10[%c0_271, %c0_272, %c224_273], %646 {strides = array<i32>} : memref<2x1x256xf32, #tpu.memory_space<vmem>>, vector<2x1x16xf32>,
    %648 = vector.extract_strided_slice %617 {offsets = [0, 15, 0], sizes = [2, 1, 16], strides = [1, 1, 1]} : vector<2x16x16xf32> to vector<2x1x16xf32>
    %c0_274 = arith.constant 0 : index
    %c0_275 = arith.constant 0 : index
    %c240_276 = arith.constant 240 : index
    %649 = vector.load %arg10[%c0_274, %c0_275, %c240_276] : memref<2x1x256xf32, #tpu.memory_space<vmem>>, vector<2x1x16xf32>
    tpu.vector_store %arg10[%c0_274, %c0_275, %c240_276], %648 {strides = array<i32>} : memref<2x1x256xf32, #tpu.memory_space<vmem>>, vector<2x1x16xf32>,
    %650 = vector.extract_strided_slice %29 {offsets = [0, 0], sizes = [32, 1], strides = [1, 1]} : vector<32x2xf32> to vector<32x1xf32>
    %c0_277 = arith.constant 0 : index
    %c0_278 = arith.constant 0 : index
    %c0_279 = arith.constant 0 : index
    %651 = vector.load %arg1[%c0_277, %c0_278, %c0_279] : memref<2x32x256xf32, #tpu.memory_space<vmem>>, vector<1x32x256xf32>
    %652 = vector.shape_cast %651 : vector<1x32x256xf32> to vector<32x256xf32>
    %653 = vector.broadcast %650 : vector<32x1xf32> to vector<32x256xf32>
    %654 = arith.mulf %652, %653 : vector<32x256xf32>
    %c0_280 = arith.constant 0 : index
    %c0_281 = arith.constant 0 : index
    %c0_282 = arith.constant 0 : index
    %655 = vector.load %arg10[%c0_280, %c0_281, %c0_282] : memref<2x1x256xf32, #tpu.memory_space<vmem>>, vector<1x1x256xf32>
    %656 = vector.shape_cast %655 : vector<1x1x256xf32> to vector<1x256xf32>
    %657 = vector.broadcast %656 : vector<1x256xf32> to vector<32x256xf32>
    %658 = arith.mulf %654, %657 : vector<32x256xf32>
    %c0_283 = arith.constant 0 : index
    %c0_284 = arith.constant 0 : index
    %c0_285 = arith.constant 0 : index
    %659 = vector.load %arg7[%c0_283, %c0_284, %c0_285] : memref<2x32x256xf32, #tpu.memory_space<vmem>>, vector<1x32x256xf32>
    %660 = vector.shape_cast %659 : vector<1x32x256xf32> to vector<32x256xf32>
    %661 = vector.shape_cast %658 : vector<32x256xf32> to vector<1x32x256xf32>
    tpu.vector_store %arg7[%c0_283, %c0_284, %c0_285], %661 {strides = array<i32>} : memref<2x32x256xf32, #tpu.memory_space<vmem>>, vector<1x32x256xf32>,
    %662 = vector.extract_strided_slice %29 {offsets = [0, 1], sizes = [32, 1], strides = [1, 1]} : vector<32x2xf32> to vector<32x1xf32>
    %c1_286 = arith.constant 1 : index
    %c0_287 = arith.constant 0 : index
    %c0_288 = arith.constant 0 : index
    %663 = vector.load %arg1[%c1_286, %c0_287, %c0_288] : memref<2x32x256xf32, #tpu.memory_space<vmem>>, vector<1x32x256xf32>
    %664 = vector.shape_cast %663 : vector<1x32x256xf32> to vector<32x256xf32>
    %665 = vector.broadcast %662 : vector<32x1xf32> to vector<32x256xf32>
    %666 = arith.mulf %664, %665 : vector<32x256xf32>
    %c1_289 = arith.constant 1 : index
    %c0_290 = arith.constant 0 : index
    %c0_291 = arith.constant 0 : index
    %667 = vector.load %arg10[%c1_289, %c0_290, %c0_291] : memref<2x1x256xf32, #tpu.memory_space<vmem>>, vector<1x1x256xf32>
    %668 = vector.shape_cast %667 : vector<1x1x256xf32> to vector<1x256xf32>
    %669 = vector.broadcast %668 : vector<1x256xf32> to vector<32x256xf32>
    %670 = arith.mulf %666, %669 : vector<32x256xf32>
    %c1_292 = arith.constant 1 : index
    %c0_293 = arith.constant 0 : index
    %c0_294 = arith.constant 0 : index
    %671 = vector.load %arg7[%c1_292, %c0_293, %c0_294] : memref<2x32x256xf32, #tpu.memory_space<vmem>>, vector<1x32x256xf32>
    %672 = vector.shape_cast %671 : vector<1x32x256xf32> to vector<32x256xf32>
    %673 = vector.shape_cast %670 : vector<32x256xf32> to vector<1x32x256xf32>
    tpu.vector_store %arg7[%c1_292, %c0_293, %c0_294], %673 {strides = array<i32>} : memref<2x32x256xf32, #tpu.memory_space<vmem>>, vector<1x32x256xf32>,
    return
  }
  func.func @transform_0(%arg0: i32) -> (i32, i32, i32) {
    %c0_i32 = arith.constant 0 : i32
    %c0_i32_0 = arith.constant 0 : i32
    %c0_i32_1 = arith.constant 0 : i32
    return %arg0, %c0_i32, %c0_i32_0 : i32, i32, i32
  }
  func.func @transform_1(%arg0: i32) -> (i32, i32) {
    %c0_i32 = arith.constant 0 : i32
    %c0_i32_0 = arith.constant 0 : i32
    %c0_i32_1 = arith.constant 0 : i32
    return %c0_i32, %c0_i32_0 : i32, i32
  }
  func.func @transform_2(%arg0: i32) -> (i32, i32) {
    %c0_i32 = arith.constant 0 : i32
    %c0_i32_0 = arith.constant 0 : i32
    %c0_i32_1 = arith.constant 0 : i32
    return %c0_i32, %c0_i32_0 : i32, i32
  }
  func.func @transform_3(%arg0: i32) -> (i32, i32) {
    %c0_i32 = arith.constant 0 : i32
    %c0_i32_0 = arith.constant 0 : i32
    %c0_i32_1 = arith.constant 0 : i32
    return %c0_i32, %c0_i32_0 : i32, i32
  }
  func.func @transform_4(%arg0: i32) -> (i32, i32) {
    %c0_i32 = arith.constant 0 : i32
    %c0_i32_0 = arith.constant 0 : i32
    %c0_i32_1 = arith.constant 0 : i32
    return %c0_i32, %c0_i32_0 : i32, i32
  }
  func.func @transform_5(%arg0: i32) -> i32 {
    %c0_i32 = arith.constant 0 : i32
    %c0_i32_0 = arith.constant 0 : i32
    return %c0_i32 : i32
  }
  func.func @transform_6(%arg0: i32) -> (i32, i32, i32) {
    %c0_i32 = arith.constant 0 : i32
    %c0_i32_0 = arith.constant 0 : i32
    %c0_i32_1 = arith.constant 0 : i32
    return %arg0, %c0_i32, %c0_i32_0 : i32, i32, i32
  }
}

</mosaic_0001>

<llo_original>
// kernel: tpu_custom_call.1
$region0: #{tpu_custom_call.1}
  #allocation0 [shape = 'u32[]', space=smem, size = 0x4, offset = 0x4, fixed_abs, tag = 'smem constant byte address 0x4 - core index']
  #allocation1 [shape = 'u32[144,128]{1,0:T(1,128)}', space=vmem, size = 0x12000, scoped, tag = 'internal scratch']
  #allocation2 [shape = 'f32[2,2,24,128]{3,2,1,0:T(8,128)}', space=vmem, size = 0xc000, scoped, tag = 'scratch operand']
  #allocation3 [shape = 'f32[2,2,1,256]{3,2,1,0:T(1,128)}', space=vmem, size = 0x1000, scoped, tag = 'scratch operand']
  #allocation4 [shape = 'f32[2,1,256]{2,1,0:T(1,128)}', space=vmem, size = 0x800, scoped, tag = 'scratch operand']
  %s0 = inlined_call_operand.hbm [shape: f32[2,32,256], index: 0, kind: input, shape index: {}]
  %s1 = inlined_call_operand.vmem [shape: f32[2,32], index: 1, kind: input, shape index: {}]
  %s2 = inlined_call_operand.vmem [shape: f32[2,1], index: 2, kind: input, shape index: {}]
  %s3 = inlined_call_operand.vmem [shape: f32[32,2], index: 3, kind: input, shape index: {}]
  %s4 = inlined_call_operand.vmem [shape: f32[32,1], index: 4, kind: input, shape index: {}]
  %s5 = inlined_call_operand.vmem [shape: f32[99], index: 5, kind: input, shape index: {}]
  %s6 = inlined_call_operand.hbm [shape: f32[2,32,256], index: 6, kind: output, shape index: {}]
  %s7 = sld [smem:[#allocation0]]
  $region42: #{tpu_custom_call.1} parent=0
    _
  %s9 = ssub.s32 1, %s7
  %s10 = scalar_select 0, %s9, %s7
  $region1: #{tpu_custom_call.1} parent=0
    #allocation5 [shape = 'u8[65536]{0}', space=vmem, size = 0x10000, scoped, tag = 'input window, operand 0, single buffered']
    #allocation6 [shape = 's32[1]{0}', space=sflag, size = 0x4, scoped, tag = 'scoped memory for tpu_custom_call.1']
    #allocation7 [shape = 's32[1]{0}', space=sflag, size = 0x4, scoped, tag = 'scoped memory for tpu_custom_call.1']
    #allocation8 [shape = 's32[1]{0}', space=sflag, size = 0x4, scoped, tag = 'scoped memory for tpu_custom_call.1']
    #allocation9 [shape = 'u8[512]{0}', space=smem, size = 0x200, scoped, tag = 'input window, operand 5, single buffered']
    #allocation10 [shape = 'u8[65536]{0}', space=vmem, size = 0x10000, scoped, tag = 'output window, operand 0, single buffered']
    %11 = vsyncpa [#allocation6], 0
    %12 = vsyncpa [#allocation8], 0
    %13 = vsyncpa [#allocation7], 0
    // Predicated region
    $region2: #{tpu_custom_call.1} parent=1 // pred_check
      _
    $region3: #{tpu_custom_call.1} parent=1 // pred_check_branch
      %15 = sbr.rel (0) target = $region5
    $region4: #{tpu_custom_call.1} parent=1 // pred_region
      %s17 = ssub.s32 2048, 2048
      %18 = vsyncadd [#allocation6], %s17
      %s19 = sshll.u32 [#allocation5], 4
      %s20 = int_to_ptr.vmem [resolvable:$true] %s19
      %25 = dma.hbm_to_vmem [thread:$0]  %s0, 2048, %s20, [#allocation6], 256, 256, 16
    $region5: #{tpu_custom_call.1} parent=1 // pred_fallthru
      _
    // Predicated region
    $region6: #{tpu_custom_call.1} parent=1 // pred_check
      _
    $region7: #{tpu_custom_call.1} parent=1 // pred_check_branch
      %27 = sbr.rel (0) target = $region9
    $region8: #{tpu_custom_call.1} parent=1 // pred_region
      _
    $region9: #{tpu_custom_call.1} parent=1 // pred_fallthru
      _
    // Predicated region
    $region10: #{tpu_custom_call.1} parent=1 // pred_check
      _
    $region11: #{tpu_custom_call.1} parent=1 // pred_check_branch
      %29 = sbr.rel (0) target = $region13
    $region12: #{tpu_custom_call.1} parent=1 // pred_region
      _
    $region13: #{tpu_custom_call.1} parent=1 // pred_fallthru
      _
    // Predicated region
    $region14: #{tpu_custom_call.1} parent=1 // pred_check
      _
    $region15: #{tpu_custom_call.1} parent=1 // pred_check_branch
      %31 = sbr.rel (0) target = $region17
    $region16: #{tpu_custom_call.1} parent=1 // pred_region
      _
    $region17: #{tpu_custom_call.1} parent=1 // pred_fallthru
      _
    // Predicated region
    $region18: #{tpu_custom_call.1} parent=1 // pred_check
      _
    $region19: #{tpu_custom_call.1} parent=1 // pred_check_branch
      %33 = sbr.rel (0) target = $region21
    $region20: #{tpu_custom_call.1} parent=1 // pred_region
      _
    $region21: #{tpu_custom_call.1} parent=1 // pred_fallthru
      _
    // Predicated region
    $region22: #{tpu_custom_call.1} parent=1 // pred_check
      _
    $region23: #{tpu_custom_call.1} parent=1 // pred_check_branch
      %35 = sbr.rel (0) target = $region25
    $region24: #{tpu_custom_call.1} parent=1 // pred_region
      %s37 = ssub.s32 16, 16
      %38 = vsyncadd [#allocation8], %s37
      %s40 = sshll.u32 %s5, 4
      %s41 = int_to_ptr.vmem [resolvable:$true] %s40
      %43 = dma.vmem_to_smem %s41, 16, [#allocation9], [#allocation8]
    $region25: #{tpu_custom_call.1} parent=1 // pred_fallthru
      _
    // Predicated region
    $region26: #{tpu_custom_call.1} parent=1 // pred_check
      _
    $region27: #{tpu_custom_call.1} parent=1 // pred_check_branch
      %45 = sbr.rel (0) target = $region29
    $region28: #{tpu_custom_call.1} parent=1 // pred_region
      %46 = dma.done [#allocation6], 2048
    $region29: #{tpu_custom_call.1} parent=1 // pred_fallthru
      _
    // Predicated region
    $region30: #{tpu_custom_call.1} parent=1 // pred_check
      _
    $region31: #{tpu_custom_call.1} parent=1 // pred_check_branch
      %48 = sbr.rel (0) target = $region33
    $region32: #{tpu_custom_call.1} parent=1 // pred_region
      %49 = dma.done [#allocation8], 16
    $region33: #{tpu_custom_call.1} parent=1 // pred_fallthru
      _
    %50 = sfence
    %v51 = vld [vmem:[#allocation5] sm:$0xff]
    %v52 = vld [vmem:[#allocation5 + $0x8] sm:$0xff]
    %v53 = vld [vmem:[#allocation5 + $0x10] sm:$0xff]
    %v54 = vld [vmem:[#allocation5 + $0x18] sm:$0xff]
    %v55 = vld [vmem:[#allocation5 + $0x20] sm:$0xff]
    %v56 = vld [vmem:[#allocation5 + $0x28] sm:$0xff]
    %v57 = vld [vmem:[#allocation5 + $0x30] sm:$0xff]
    %v58 = vld [vmem:[#allocation5 + $0x38] sm:$0xff]
    %v59 = vadd.f32 %v51, %v52
    %60 = vadd.xlane.f32.xlu0 %v59
    %v61 = vpop.xlane.xlu0 %60
    %v62 = vadd.f32 %v53, %v54
    %63 = vadd.xlane.f32.xlu0 %v62
    %v64 = vpop.xlane.xlu0 %63
    %v65 = vadd.f32 %v55, %v56
    %66 = vadd.xlane.f32.xlu0 %v65
    %v67 = vpop.xlane.xlu0 %66
    %v68 = vadd.f32 %v57, %v58
    %69 = vadd.xlane.f32.xlu0 %v68
    %v70 = vpop.xlane.xlu0 %69
    %v71 = vrcp.pop 256.0
    %v72 = vmul.f32 %v61, %v71
    %v73 = vmul.f32 %v64, %v71
    %v74 = vmul.f32 %v67, %v71
    %v75 = vmul.f32 %v70, %v71
    %s76 = scalar_lea.vmem [#allocation5], 64
    %v77 = vld [vmem:[%s76] sm:$0xff]
    %v78 = vld [vmem:[%s76 + $0x8] sm:$0xff]
    %v79 = vld [vmem:[%s76 + $0x10] sm:$0xff]
    %v80 = vld [vmem:[%s76 + $0x18] sm:$0xff]
    %v81 = vld [vmem:[%s76 + $0x20] sm:$0xff]
    %v82 = vld [vmem:[%s76 + $0x28] sm:$0xff]
    %v83 = vld [vmem:[%s76 + $0x30] sm:$0xff]
    %v84 = vld [vmem:[%s76 + $0x38] sm:$0xff]
    %v85 = vadd.f32 %v77, %v78
    %86 = vadd.xlane.f32.xlu0 %v85
    %v87 = vpop.xlane.xlu0 %86
    %v88 = vadd.f32 %v79, %v80
    %89 = vadd.xlane.f32.xlu0 %v88
    %v90 = vpop.xlane.xlu0 %89
    %v91 = vadd.f32 %v81, %v82
    %92 = vadd.xlane.f32.xlu0 %v91
    %v93 = vpop.xlane.xlu0 %92
    %v94 = vadd.f32 %v83, %v84
    %95 = vadd.xlane.f32.xlu0 %v94
    %v96 = vpop.xlane.xlu0 %95
    %v97 = vmul.f32 %v87, %v71
    %v98 = vmul.f32 %v90, %v71
    %v99 = vmul.f32 %v93, %v71
    %v100 = vmul.f32 %v96, %v71
    %vm101 = vcmask 7168
    %v102 = vsel %vm101, %v72, %v97
    %v103 = vsel %vm101, %v73, %v98
    %v104 = vsel %vm101, %v74, %v99
    %v105 = vsel %vm101, %v75, %v100
    %v106 = vld [vmem:[%s1] sm:$0x3]
    %v107 = vld [vmem:[%s2] sm:$0x3]
    %109 = vset.pattern.permute.xlu0 0
    %110 = vperm.xlu0 %109, %v107
    %v111 = vpop.permute.xlu0 %110
    %vm113 = vcmask 261120
    %v115 = vsel %vm113, %v106, 0
    %117 = vmatprep.subr.mxu0 0.0
    %118 = vmatpush1.msra.mxu0 %v102
    %119 = vmatprep.subr.mxu0 0.0
    %120 = vmatpush1.msra.mxu0 %v103
    %121 = vmatprep.subr.mxu0 0.0
    %122 = vmatpush1.msra.mxu0 %v104
    %123 = vmatprep.subr.mxu0 0.0
    %124 = vmatpush1.msra.mxu0 %v105
    %125 = vmatprep.subr.mxu0 0.0
    %126 = vmatpush1.msra.mxu0 0.0
    %127 = vmatprep.subr.mxu0 0.0
    %128 = vmatpush1.msra.mxu0 0.0
    %129 = vmatprep.subr.mxu0 0.0
    %130 = vmatpush1.msra.mxu0 0.0
    %131 = vmatprep.subr.mxu0 0.0
    %132 = vmatpush1.msra.mxu0 0.0
    %133 = vmatprep.subr.mxu0 0.0
    %134 = vmatpush1.msra.mxu0 0.0
    %135 = vmatprep.subr.mxu0 0.0
    %136 = vmatpush1.msra.mxu0 0.0
    %137 = vmatprep.subr.mxu0 0.0
    %138 = vmatpush1.msra.mxu0 0.0
    %139 = vmatprep.subr.mxu0 0.0
    %140 = vmatpush1.msra.mxu0 0.0
    %141 = vmatprep.subr.mxu0 0.0
    %142 = vmatpush1.msra.mxu0 0.0
    %143 = vmatprep.subr.mxu0 0.0
    %144 = vmatpush1.msra.mxu0 0.0
    %145 = vmatprep.subr.mxu0 0.0
    %146 = vmatpush1.msra.mxu0 0.0
    %147 = vmatprep.subr.mxu0 0.0
    %148 = vmatpush1.msra.mxu0 0.0
    %149 = vmatprep.subr.mxu0 0.0
    %150 = vmatpush1.msra.mxu0 0.0
    %151 = vmatprep.subr.mxu0 0.0
    %152 = vmatpush1.msra.mxu0 0.0
    %153 = vmatprep.subr.mxu0 0.0
    %154 = vmatpush1.msra.mxu0 0.0
    %155 = vmatprep.subr.mxu0 0.0
    %156 = vmatpush1.msra.mxu0 0.0
    %157 = vmatprep.subr.mxu0 0.0
    %158 = vmatpush1.msra.mxu0 0.0
    %159 = vmatprep.subr.mxu0 0.0
    %160 = vmatpush1.msra.mxu0 0.0
    %161 = vmatprep.subr.mxu0 0.0
    %162 = vmatpush1.msra.mxu0 0.0
    %163 = vmatprep.subr.mxu0 0.0
    %164 = vmatpush1.msra.mxu0 0.0
    %165 = vmatprep.subr.mxu0 0.0
    %166 = vmatpush1.msra.mxu0 0.0
    %167 = vmatprep.subr.mxu0 0.0
    %168 = vmatpush1.msra.mxu0 0.0
    %169 = vmatprep.subr.mxu0 0.0
    %170 = vmatpush1.msra.mxu0 0.0
    %171 = vmatprep.subr.mxu0 0.0
    %172 = vmatpush1.msra.mxu0 0.0
    %173 = vmatprep.subr.mxu0 0.0
    %174 = vmatpush1.msra.mxu0 0.0
    %175 = vmatprep.subr.mxu0 0.0
    %176 = vmatpush1.msra.mxu0 0.0
    %177 = vmatprep.subr.mxu0 0.0
    %178 = vmatpush1.msra.mxu0 0.0
    %179 = vmatprep.subr.mxu0 0.0
    %180 = vmatpush1.msra.mxu0 0.0
    %181 = vmatprep.mubr.f32.mxu0 0.0
    %182 = vmatmul.mubr.f32.gmra.mrb[0].mxu0 %v115
    %v183 = vpop.f32.mrb[0].mxu0
    %v184 = vadd.f32 %v111, %v183
    %v185 = vpop.f32.mrb[0].mxu0
    %186 = vdwg.mxu0
    %v187 = vmax.f32 %v184, 0.0
    %v188 = vld [vmem:[%s3] sm:$0xff]
    %v189 = vld [vmem:[%s3 + $0x8] sm:$0xff]
    %v190 = vld [vmem:[%s3 + $0x10] sm:$0xff]
    %v191 = vld [vmem:[%s3 + $0x18] sm:$0xff]
    %v192 = vld [vmem:[%s4] sm:$0xff]
    %v193 = vld [vmem:[%s4 + $0x8] sm:$0xff]
    %v194 = vld [vmem:[%s4 + $0x10] sm:$0xff]
    %v195 = vld [vmem:[%s4 + $0x18] sm:$0xff]
    %197 = vset.pattern.permute.xlu0 0
    %198 = vperm.xlu0 %197, %v192
    %v199 = vpop.permute.xlu0 %198
    %202 = vset.pattern.permute.xlu0 0
    %203 = vperm.xlu0 %202, %v193
    %v204 = vpop.permute.xlu0 %203
    %207 = vset.pattern.permute.xlu0 0
    %208 = vperm.xlu0 %207, %v194
    %v209 = vpop.permute.xlu0 %208
    %212 = vset.pattern.permute.xlu0 0
    %213 = vperm.xlu0 %212, %v195
    %v214 = vpop.permute.xlu0 %213
    %vm216 = vcmask 15360
    %v218 = vsel %vm216, %v188, 0
    %v221 = vsel %vm216, %v189, 0
    %v224 = vsel %vm216, %v190, 0
    %v227 = vsel %vm216, %v191, 0
    %vm229 = vcmask 1041408
    %v231 = vsel %vm229, %v187, 0
    %233 = vmatprep.subr.mxu0 0.0
    %234 = vmatpush1.msra.mxu0 %v231
    %235 = vmatprep.subr.mxu0 0.0
    %236 = vmatpush1.msra.mxu0 0.0
    %237 = vmatprep.subr.mxu0 0.0
    %238 = vmatpush1.msra.mxu0 0.0
    %239 = vmatprep.subr.mxu0 0.0
    %240 = vmatpush1.msra.mxu0 0.0
    %241 = vmatprep.subr.mxu0 0.0
    %242 = vmatpush1.msra.mxu0 0.0
    %243 = vmatprep.subr.mxu0 0.0
    %244 = vmatpush1.msra.mxu0 0.0
    %245 = vmatprep.subr.mxu0 0.0
    %246 = vmatpush1.msra.mxu0 0.0
    %247 = vmatprep.subr.mxu0 0.0
    %248 = vmatpush1.msra.mxu0 0.0
    %249 = vmatprep.subr.mxu0 0.0
    %250 = vmatpush1.msra.mxu0 0.0
    %251 = vmatprep.subr.mxu0 0.0
    %252 = vmatpush1.msra.mxu0 0.0
    %253 = vmatprep.subr.mxu0 0.0
    %254 = vmatpush1.msra.mxu0 0.0
    %255 = vmatprep.subr.mxu0 0.0
    %256 = vmatpush1.msra.mxu0 0.0
    %257 = vmatprep.subr.mxu0 0.0
    %258 = vmatpush1.msra.mxu0 0.0
    %259 = vmatprep.subr.mxu0 0.0
    %260 = vmatpush1.msra.mxu0 0.0
    %261 = vmatprep.subr.mxu0 0.0
    %262 = vmatpush1.msra.mxu0 0.0
    %263 = vmatprep.subr.mxu0 0.0
    %264 = vmatpush1.msra.mxu0 0.0
    %265 = vmatprep.subr.mxu0 0.0
    %266 = vmatpush1.msra.mxu0 0.0
    %267 = vmatprep.subr.mxu0 0.0
    %268 = vmatpush1.msra.mxu0 0.0
    %269 = vmatprep.subr.mxu0 0.0
    %270 = vmatpush1.msra.mxu0 0.0
    %271 = vmatprep.subr.mxu0 0.0
    %272 = vmatpush1.msra.mxu0 0.0
    %273 = vmatprep.subr.mxu0 0.0
    %274 = vmatpush1.msra.mxu0 0.0
    %275 = vmatprep.subr.mxu0 0.0
    %276 = vmatpush1.msra.mxu0 0.0
    %277 = vmatprep.subr.mxu0 0.0
    %278 = vmatpush1.msra.mxu0 0.0
    %279 = vmatprep.subr.mxu0 0.0
    %280 = vmatpush1.msra.mxu0 0.0
    %281 = vmatprep.subr.mxu0 0.0
    %282 = vmatpush1.msra.mxu0 0.0
    %283 = vmatprep.subr.mxu0 0.0
    %284 = vmatpush1.msra.mxu0 0.0
    %285 = vmatprep.subr.mxu0 0.0
    %286 = vmatpush1.msra.mxu0 0.0
    %287 = vmatprep.subr.mxu0 0.0
    %288 = vmatpush1.msra.mxu0 0.0
    %289 = vmatprep.subr.mxu0 0.0
    %290 = vmatpush1.msra.mxu0 0.0
    %291 = vmatprep.subr.mxu0 0.0
    %292 = vmatpush1.msra.mxu0 0.0
    %293 = vmatprep.subr.mxu0 0.0
    %294 = vmatpush1.msra.mxu0 0.0
    %295 = vmatprep.subr.mxu0 0.0
    %296 = vmatpush1.msra.mxu0 0.0
    %297 = vmatprep.mubr.f32.mxu0 0.0
    %298 = vmatmul.mubr.f32.gmra.mrb[0].mxu0 %v218
    %v299 = vpop.f32.mrb[0].mxu0
    %v300 = vadd.f32 %v199, %v299
    %v301 = vpop.f32.mrb[0].mxu0
    %302 = vmatprep.mubr.f32.mxu0 0.0
    %303 = vmatmul.mubr.f32.gmra.mrb[0].mxu0 %v221
    %v304 = vpop.f32.mrb[0].mxu0
    %v305 = vadd.f32 %v204, %v304
    %v306 = vpop.f32.mrb[0].mxu0
    %307 = vmatprep.mubr.f32.mxu0 0.0
    %308 = vmatmul.mubr.f32.gmra.mrb[0].mxu0 %v224
    %v309 = vpop.f32.mrb[0].mxu0
    %v310 = vadd.f32 %v209, %v309
    %v311 = vpop.f32.mrb[0].mxu0
    %312 = vmatprep.mubr.f32.mxu0 0.0
    %313 = vmatmul.mubr.f32.gmra.mrb[0].mxu0 %v227
    %v314 = vpop.f32.mrb[0].mxu0
    %v315 = vadd.f32 %v214, %v314
    %v316 = vpop.f32.mrb[0].mxu0
    %317 = vdwg.mxu0
    %v318 = vxor.u32 %v300, 2147483648
    %v319 = vxor.u32 %v305, 2147483648
    %v320 = vxor.u32 %v310, 2147483648
    %v321 = vxor.u32 %v315, 2147483648
    %v322 = vmul.f32 %v318, 1.442695
    %v323 = vpow.pop %v322
    %v324 = vmul.f32 %v319, 1.442695
    %v325 = vpow.pop %v324
    %v326 = vmul.f32 %v320, 1.442695
    %v327 = vpow.pop %v326
    %v328 = vmul.f32 %v321, 1.442695
    %v329 = vpow.pop %v328
    %v330 = vadd.f32 %v323, 1.0
    %v331 = vadd.f32 %v325, 1.0
    %v332 = vadd.f32 %v327, 1.0
    %v333 = vadd.f32 %v329, 1.0
    %v334 = vrcp.pop %v330
    %v335 = vmul.f32 1.0, %v334
    %v336 = vrcp.pop %v331
    %v337 = vmul.f32 1.0, %v336
    %v338 = vrcp.pop %v332
    %v339 = vmul.f32 1.0, %v338
    %v340 = vrcp.pop %v333
    %v341 = vmul.f32 1.0, %v340
    %343 = vset.pattern.permute.xlu0 0
    %344 = vperm.xlu0 %343, %v335
    %v345 = vpop.permute.xlu0 %344
    %348 = vset.pattern.permute.xlu0 0
    %349 = vperm.xlu0 %348, %v337
    %v350 = vpop.permute.xlu0 %349
    %353 = vset.pattern.permute.xlu0 0
    %354 = vperm.xlu0 %353, %v339
    %v355 = vpop.permute.xlu0 %354
    %358 = vset.pattern.permute.xlu0 0
    %359 = vperm.xlu0 %358, %v341
    %v360 = vpop.permute.xlu0 %359
    %v362 = vmul.f32 %v51, %v345
    %v363 = vmul.f32 %v52, %v345
    %v364 = vmul.f32 %v53, %v350
    %v365 = vmul.f32 %v54, %v350
    %v366 = vmul.f32 %v55, %v355
    %v367 = vmul.f32 %v56, %v355
    %v368 = vmul.f32 %v57, %v360
    %v369 = vmul.f32 %v58, %v360
    %v370 = vadd.f32 %v362, %v364
    %v371 = vadd.f32 %v370, %v366
    %v372 = vadd.f32 %v371, %v368
    %v373 = vrot.slane %v372, 4
    %v374 = vadd.f32 %v372, %v373
    %v375 = vrot.slane %v374, 2
    %v376 = vadd.f32 %v374, %v375
    %v377 = vrot.slane %v376, 1
    %v378 = vadd.f32 %v376, %v377
    %v379 = vadd.f32 %v363, %v365
    %v380 = vadd.f32 %v379, %v367
    %v381 = vadd.f32 %v380, %v369
    %v382 = vrot.slane %v381, 4
    %v383 = vadd.f32 %v381, %v382
    %v384 = vrot.slane %v383, 2
    %v385 = vadd.f32 %v383, %v384
    %v386 = vrot.slane %v385, 1
    %v387 = vadd.f32 %v385, %v386
    %v388 = vrcp.pop 32.0
    %v389 = vmul.f32 %v378, %v388
    %v390 = vmul.f32 %v387, %v388
    %v393 = vcombine.low %v389, %v390
    %v395 = vunpack.c.l.s4 1966171168
    %v396 = vunpack.c.0.s8 %v395
    %v397 = vlaneseq
    %v398 = vshrl.u32 %v397, 7
    %v399 = vsub.s32 %v396, %v398
    %v400 = vrot.slane %v393, %v399
    %v402 = vunpack.c.l.s4 1966171168
    %v403 = vunpack.c.0.s8 %v402
    %v404 = vlaneseq
    %v405 = vshrl.u32 %v404, 7
    %v406 = vsub.s32 %v403, %v405
    %v407 = vrot.slane %v400, %v406
    %v409 = vlaneseq
    %vm410 = vcmp.ge.s32.totalorder %v409, 0
    %vm411 = vcmp.lt.s32.totalorder %v409, 256
    %vm412 = vmand %vm410, %vm411
    %413 = vst.msk [vmem:[#allocation3] sm:$0x3] %vm412, %v407
    %v414 = vmax.f32 %v362, %v366
    %v415 = vmax.f32 %v364, %v368
    %v416 = vmax.f32 %v414, %v415
    %v417 = vrot.slane %v416, 4
    %v418 = vmax.f32 %v416, %v417
    %v419 = vrot.slane %v418, 2
    %v420 = vmax.f32 %v418, %v419
    %v421 = vrot.slane %v420, 1
    %v422 = vmax.f32 %v420, %v421
    %v423 = vmax.f32 %v363, %v367
    %v424 = vmax.f32 %v365, %v369
    %v425 = vmax.f32 %v423, %v424
    %v426 = vrot.slane %v425, 4
    %v427 = vmax.f32 %v425, %v426
    %v428 = vrot.slane %v427, 2
    %v429 = vmax.f32 %v427, %v428
    %v430 = vrot.slane %v429, 1
    %v431 = vmax.f32 %v429, %v430
    %v434 = vcombine.low %v422, %v431
    %v436 = vunpack.c.l.s4 1966171168
    %v437 = vunpack.c.0.s8 %v436
    %v438 = vlaneseq
    %v439 = vshrl.u32 %v438, 7
    %v440 = vsub.s32 %v437, %v439
    %v441 = vrot.slane %v434, %v440
    %v443 = vunpack.c.l.s4 1966171168
    %v444 = vunpack.c.0.s8 %v443
    %v445 = vlaneseq
    %v446 = vshrl.u32 %v445, 7
    %v447 = vsub.s32 %v444, %v446
    %v448 = vrot.slane %v441, %v447
    %s450 = scalar_lea.vmem [#allocation3], 4
    %451 = vst.msk [vmem:[%s450] sm:$0x3] %vm412, %v448
    %v452 = vld [vmem:[%s76] sm:$0xff]
    %v453 = vld [vmem:[%s76 + $0x8] sm:$0xff]
    %v454 = vld [vmem:[%s76 + $0x10] sm:$0xff]
    %v455 = vld [vmem:[%s76 + $0x18] sm:$0xff]
    %v456 = vld [vmem:[%s76 + $0x20] sm:$0xff]
    %v457 = vld [vmem:[%s76 + $0x28] sm:$0xff]
    %v458 = vld [vmem:[%s76 + $0x30] sm:$0xff]
    %v459 = vld [vmem:[%s76 + $0x38] sm:$0xff]
    %460 = vset.pattern.permute.xlu0 1
    %461 = vperm.xlu0 %460, %v335
    %v462 = vpop.permute.xlu0 %461
    %464 = vset.pattern.permute.xlu0 1
    %465 = vperm.xlu0 %464, %v337
    %v466 = vpop.permute.xlu0 %465
    %468 = vset.pattern.permute.xlu0 1
    %469 = vperm.xlu0 %468, %v339
    %v470 = vpop.permute.xlu0 %469
    %472 = vset.pattern.permute.xlu0 1
    %473 = vperm.xlu0 %472, %v341
    %v474 = vpop.permute.xlu0 %473
    %v476 = vmul.f32 %v452, %v462
    %v477 = vmul.f32 %v453, %v462
    %v478 = vmul.f32 %v454, %v466
    %v479 = vmul.f32 %v455, %v466
    %v480 = vmul.f32 %v456, %v470
    %v481 = vmul.f32 %v457, %v470
    %v482 = vmul.f32 %v458, %v474
    %v483 = vmul.f32 %v459, %v474
    %v484 = vadd.f32 %v476, %v478
    %v485 = vadd.f32 %v484, %v480
    %v486 = vadd.f32 %v485, %v482
    %v487 = vrot.slane %v486, 4
    %v488 = vadd.f32 %v486, %v487
    %v489 = vrot.slane %v488, 2
    %v490 = vadd.f32 %v488, %v489
    %v491 = vrot.slane %v490, 1
    %v492 = vadd.f32 %v490, %v491
    %v493 = vadd.f32 %v477, %v479
    %v494 = vadd.f32 %v493, %v481
    %v495 = vadd.f32 %v494, %v483
    %v496 = vrot.slane %v495, 4
    %v497 = vadd.f32 %v495, %v496
    %v498 = vrot.slane %v497, 2
    %v499 = vadd.f32 %v497, %v498
    %v500 = vrot.slane %v499, 1
    %v501 = vadd.f32 %v499, %v500
    %v502 = vmul.f32 %v492, %v388
    %v503 = vmul.f32 %v501, %v388
    %v506 = vcombine.low %v502, %v503
    %v508 = vunpack.c.l.s4 1966171168
    %v509 = vunpack.c.0.s8 %v508
    %v510 = vlaneseq
    %v511 = vshrl.u32 %v510, 7
    %v512 = vsub.s32 %v509, %v511
    %v513 = vrot.slane %v506, %v512
    %v515 = vunpack.c.l.s4 1966171168
    %v516 = vunpack.c.0.s8 %v515
    %v517 = vlaneseq
    %v518 = vshrl.u32 %v517, 7
    %v519 = vsub.s32 %v516, %v518
    %v520 = vrot.slane %v513, %v519
    %s522 = scalar_lea.vmem [#allocation3], 2
    %523 = vst.msk [vmem:[%s522] sm:$0x3] %vm412, %v520
    %v524 = vmax.f32 %v476, %v480
    %v525 = vmax.f32 %v478, %v482
    %v526 = vmax.f32 %v524, %v525
    %v527 = vrot.slane %v526, 4
    %v528 = vmax.f32 %v526, %v527
    %v529 = vrot.slane %v528, 2
    %v530 = vmax.f32 %v528, %v529
    %v531 = vrot.slane %v530, 1
    %v532 = vmax.f32 %v530, %v531
    %v533 = vmax.f32 %v477, %v481
    %v534 = vmax.f32 %v479, %v483
    %v535 = vmax.f32 %v533, %v534
    %v536 = vrot.slane %v535, 4
    %v537 = vmax.f32 %v535, %v536
    %v538 = vrot.slane %v537, 2
    %v539 = vmax.f32 %v537, %v538
    %v540 = vrot.slane %v539, 1
    %v541 = vmax.f32 %v539, %v540
    %v544 = vcombine.low %v532, %v541
    %v546 = vunpack.c.l.s4 1966171168
    %v547 = vunpack.c.0.s8 %v546
    %v548 = vlaneseq
    %v549 = vshrl.u32 %v548, 7
    %v550 = vsub.s32 %v547, %v549
    %v551 = vrot.slane %v544, %v550
    %v553 = vunpack.c.l.s4 1966171168
    %v554 = vunpack.c.0.s8 %v553
    %v555 = vlaneseq
    %v556 = vshrl.u32 %v555, 7
    %v557 = vsub.s32 %v554, %v556
    %v558 = vrot.slane %v551, %v557
    %s560 = scalar_lea.vmem [#allocation3], 6
    %561 = vst.msk [vmem:[%s560] sm:$0x3] %vm412, %v558
    %562 = vst [vmem:[#allocation2] sm:$0xff] 0.0
    %563 = vst [vmem:[#allocation2 + $0x8] sm:$0xff] 0.0
    %564 = vst [vmem:[#allocation2 + $0x10] sm:$0xff] 0.0
    %565 = vst [vmem:[#allocation2 + $0x18] sm:$0xff] 0.0
    %566 = vst [vmem:[#allocation2 + $0x20] sm:$0xff] 0.0
    %567 = vst [vmem:[#allocation2 + $0x28] sm:$0xff] 0.0
    %568 = vst [vmem:[#allocation2 + $0x30] sm:$0xff] 0.0
    %569 = vst [vmem:[#allocation2 + $0x38] sm:$0xff] 0.0
    %570 = vst [vmem:[#allocation2 + $0x40] sm:$0xff] 0.0
    %571 = vst [vmem:[#allocation2 + $0x48] sm:$0xff] 0.0
    %572 = vst [vmem:[#allocation2 + $0x50] sm:$0xff] 0.0
    %573 = vst [vmem:[#allocation2 + $0x58] sm:$0xff] 0.0
    %v574 = vld [vmem:[#allocation3] sm:$0x1]
    %v575 = vld [vmem:[#allocation3 + $0x2] sm:$0x1]
    %v576 = vld [vmem:[#allocation3 + $0x4] sm:$0x1]
    %v577 = vld [vmem:[#allocation3 + $0x6] sm:$0x1]
    %v582 = vlaneseq
    %v583 = vshrl.u32 %v582, 7
    %v584 = vsub.s32 0, %v583
    %v585 = vrot.slane %v574, %v584
    %v586 = vlaneseq
    %v587 = vshrl.u32 %v586, 7
    %v588 = vsub.s32 0, %v587
    %v589 = vrot.slane %v575, %v588
    %v590 = vlaneseq
    %v591 = vshrl.u32 %v590, 7
    %v592 = vsub.s32 0, %v591
    %v593 = vrot.slane %v576, %v592
    %v594 = vlaneseq
    %v595 = vshrl.u32 %v594, 7
    %v596 = vsub.s32 0, %v595
    %v597 = vrot.slane %v577, %v596
    %598 = vrot.lane.b32.xlu0 %v585, 3
    %v599 = vpop.permute.xlu0 %598
    %600 = vrot.lane.b32.xlu0 %v589, 3
    %v601 = vpop.permute.xlu0 %600
    %602 = vrot.lane.b32.xlu0 %v593, 3
    %v603 = vpop.permute.xlu0 %602
    %604 = vrot.lane.b32.xlu0 %v597, 3
    %v605 = vpop.permute.xlu0 %604
    %vm610 = vcmask 147480
    %611 = vst.msk [vmem:[#allocation2 + $0x3] sm:$0x1] %vm610, %v599
    %612 = vst.msk [vmem:[#allocation2 + $0x1b] sm:$0x1] %vm610, %v601
    %613 = vst.msk [vmem:[#allocation2 + $0x33] sm:$0x1] %vm610, %v603
    %614 = vst.msk [vmem:[#allocation2 + $0x4b] sm:$0x1] %vm610, %v605
    %v615 = vld [vmem:[#allocation3] sm:$0x1]
    %v616 = vld [vmem:[#allocation3 + $0x2] sm:$0x1]
    %v617 = vld [vmem:[#allocation3 + $0x4] sm:$0x1]
    %v618 = vld [vmem:[#allocation3 + $0x6] sm:$0x1]
    %v623 = vlaneseq
    %v624 = vshrl.u32 %v623, 7
    %v625 = vsub.s32 0, %v624
    %v626 = vrot.slane %v615, %v625
    %v627 = vlaneseq
    %v628 = vshrl.u32 %v627, 7
    %v629 = vsub.s32 0, %v628
    %v630 = vrot.slane %v616, %v629
    %v631 = vlaneseq
    %v632 = vshrl.u32 %v631, 7
    %v633 = vsub.s32 0, %v632
    %v634 = vrot.slane %v617, %v633
    %v635 = vlaneseq
    %v636 = vshrl.u32 %v635, 7
    %v637 = vsub.s32 0, %v636
    %v638 = vrot.slane %v618, %v637
    %639 = vrot.lane.b32.xlu0 %v626, 115
    %v640 = vpop.permute.xlu0 %639
    %641 = vrot.lane.b32.xlu0 %v630, 115
    %v642 = vpop.permute.xlu0 %641
    %643 = vrot.lane.b32.xlu0 %v634, 115
    %v644 = vpop.permute.xlu0 %643
    %645 = vrot.lane.b32.xlu0 %v638, 115
    %v646 = vpop.permute.xlu0 %645
    %651 = vst.msk [vmem:[#allocation2 + $0x4] sm:$0x1] %vm610, %v640
    %652 = vst.msk [vmem:[#allocation2 + $0x1c] sm:$0x1] %vm610, %v642
    %653 = vst.msk [vmem:[#allocation2 + $0x34] sm:$0x1] %vm610, %v644
    %654 = vst.msk [vmem:[#allocation2 + $0x4c] sm:$0x1] %vm610, %v646
    %v655 = vld [vmem:[#allocation3] sm:$0x1]
    %v656 = vld [vmem:[#allocation3 + $0x2] sm:$0x1]
    %v657 = vld [vmem:[#allocation3 + $0x4] sm:$0x1]
    %v658 = vld [vmem:[#allocation3 + $0x6] sm:$0x1]
    %v663 = vlaneseq
    %v664 = vshrl.u32 %v663, 7
    %v665 = vsub.s32 0, %v664
    %v666 = vrot.slane %v655, %v665
    %v667 = vlaneseq
    %v668 = vshrl.u32 %v667, 7
    %v669 = vsub.s32 0, %v668
    %v670 = vrot.slane %v656, %v669
    %v671 = vlaneseq
    %v672 = vshrl.u32 %v671, 7
    %v673 = vsub.s32 0, %v672
    %v674 = vrot.slane %v657, %v673
    %v675 = vlaneseq
    %v676 = vshrl.u32 %v675, 7
    %v677 = vsub.s32 0, %v676
    %v678 = vrot.slane %v658, %v677
    %679 = vrot.lane.b32.xlu0 %v666, 99
    %v680 = vpop.permute.xlu0 %679
    %681 = vrot.lane.b32.xlu0 %v670, 99
    %v682 = vpop.permute.xlu0 %681
    %683 = vrot.lane.b32.xlu0 %v674, 99
    %v684 = vpop.permute.xlu0 %683
    %685 = vrot.lane.b32.xlu0 %v678, 99
    %v686 = vpop.permute.xlu0 %685
    %691 = vst.msk [vmem:[#allocation2 + $0x5] sm:$0x1] %vm610, %v680
    %692 = vst.msk [vmem:[#allocation2 + $0x1d] sm:$0x1] %vm610, %v682
    %693 = vst.msk [vmem:[#allocation2 + $0x35] sm:$0x1] %vm610, %v684
    %694 = vst.msk [vmem:[#allocation2 + $0x4d] sm:$0x1] %vm610, %v686
    %v695 = vld [vmem:[#allocation3] sm:$0x1]
    %v696 = vld [vmem:[#allocation3 + $0x2] sm:$0x1]
    %v697 = vld [vmem:[#allocation3 + $0x4] sm:$0x1]
    %v698 = vld [vmem:[#allocation3 + $0x6] sm:$0x1]
    %v703 = vlaneseq
    %v704 = vshrl.u32 %v703, 7
    %v705 = vsub.s32 0, %v704
    %v706 = vrot.slane %v695, %v705
    %v707 = vlaneseq
    %v708 = vshrl.u32 %v707, 7
    %v709 = vsub.s32 0, %v708
    %v710 = vrot.slane %v696, %v709
    %v711 = vlaneseq
    %v712 = vshrl.u32 %v711, 7
    %v713 = vsub.s32 0, %v712
    %v714 = vrot.slane %v697, %v713
    %v715 = vlaneseq
    %v716 = vshrl.u32 %v715, 7
    %v717 = vsub.s32 0, %v716
    %v718 = vrot.slane %v698, %v717
    %719 = vrot.lane.b32.xlu0 %v706, 83
    %v720 = vpop.permute.xlu0 %719
    %721 = vrot.lane.b32.xlu0 %v710, 83
    %v722 = vpop.permute.xlu0 %721
    %723 = vrot.lane.b32.xlu0 %v714, 83
    %v724 = vpop.permute.xlu0 %723
    %725 = vrot.lane.b32.xlu0 %v718, 83
    %v726 = vpop.permute.xlu0 %725
    %731 = vst.msk [vmem:[#allocation2 + $0x6] sm:$0x1] %vm610, %v720
    %732 = vst.msk [vmem:[#allocation2 + $0x1e] sm:$0x1] %vm610, %v722
    %733 = vst.msk [vmem:[#allocation2 + $0x36] sm:$0x1] %vm610, %v724
    %734 = vst.msk [vmem:[#allocation2 + $0x4e] sm:$0x1] %vm610, %v726
    %v735 = vld [vmem:[#allocation3] sm:$0x1]
    %v736 = vld [vmem:[#allocation3 + $0x2] sm:$0x1]
    %v737 = vld [vmem:[#allocation3 + $0x4] sm:$0x1]
    %v738 = vld [vmem:[#allocation3 + $0x6] sm:$0x1]
    %v743 = vlaneseq
    %v744 = vshrl.u32 %v743, 7
    %v745 = vsub.s32 0, %v744
    %v746 = vrot.slane %v735, %v745
    %v747 = vlaneseq
    %v748 = vshrl.u32 %v747, 7
    %v749 = vsub.s32 0, %v748
    %v750 = vrot.slane %v736, %v749
    %v751 = vlaneseq
    %v752 = vshrl.u32 %v751, 7
    %v753 = vsub.s32 0, %v752
    %v754 = vrot.slane %v737, %v753
    %v755 = vlaneseq
    %v756 = vshrl.u32 %v755, 7
    %v757 = vsub.s32 0, %v756
    %v758 = vrot.slane %v738, %v757
    %759 = vrot.lane.b32.xlu0 %v746, 67
    %v760 = vpop.permute.xlu0 %759
    %761 = vrot.lane.b32.xlu0 %v750, 67
    %v762 = vpop.permute.xlu0 %761
    %763 = vrot.lane.b32.xlu0 %v754, 67
    %v764 = vpop.permute.xlu0 %763
    %765 = vrot.lane.b32.xlu0 %v758, 67
    %v766 = vpop.permute.xlu0 %765
    %771 = vst.msk [vmem:[#allocation2 + $0x7] sm:$0x1] %vm610, %v760
    %772 = vst.msk [vmem:[#allocation2 + $0x1f] sm:$0x1] %vm610, %v762
    %773 = vst.msk [vmem:[#allocation2 + $0x37] sm:$0x1] %vm610, %v764
    %774 = vst.msk [vmem:[#allocation2 + $0x4f] sm:$0x1] %vm610, %v766
    %v775 = vld [vmem:[#allocation3] sm:$0x1]
    %v776 = vld [vmem:[#allocation3 + $0x2] sm:$0x1]
    %v777 = vld [vmem:[#allocation3 + $0x4] sm:$0x1]
    %v778 = vld [vmem:[#allocation3 + $0x6] sm:$0x1]
    %v783 = vlaneseq
    %v784 = vshrl.u32 %v783, 7
    %v785 = vsub.s32 0, %v784
    %v786 = vrot.slane %v775, %v785
    %v787 = vlaneseq
    %v788 = vshrl.u32 %v787, 7
    %v789 = vsub.s32 0, %v788
    %v790 = vrot.slane %v776, %v789
    %v791 = vlaneseq
    %v792 = vshrl.u32 %v791, 7
    %v793 = vsub.s32 0, %v792
    %v794 = vrot.slane %v777, %v793
    %v795 = vlaneseq
    %v796 = vshrl.u32 %v795, 7
    %v797 = vsub.s32 0, %v796
    %v798 = vrot.slane %v778, %v797
    %799 = vrot.lane.b32.xlu0 %v786, 51
    %v800 = vpop.permute.xlu0 %799
    %801 = vrot.lane.b32.xlu0 %v790, 51
    %v802 = vpop.permute.xlu0 %801
    %803 = vrot.lane.b32.xlu0 %v794, 51
    %v804 = vpop.permute.xlu0 %803
    %805 = vrot.lane.b32.xlu0 %v798, 51
    %v806 = vpop.permute.xlu0 %805
    %811 = vst.msk [vmem:[#allocation2 + $0x8] sm:$0x1] %vm610, %v800
    %812 = vst.msk [vmem:[#allocation2 + $0x20] sm:$0x1] %vm610, %v802
    %813 = vst.msk [vmem:[#allocation2 + $0x38] sm:$0x1] %vm610, %v804
    %814 = vst.msk [vmem:[#allocation2 + $0x50] sm:$0x1] %vm610, %v806
    %v815 = vld [vmem:[#allocation3] sm:$0x1]
    %v816 = vld [vmem:[#allocation3 + $0x2] sm:$0x1]
    %v817 = vld [vmem:[#allocation3 + $0x4] sm:$0x1]
    %v818 = vld [vmem:[#allocation3 + $0x6] sm:$0x1]
    %v823 = vlaneseq
    %v824 = vshrl.u32 %v823, 7
    %v825 = vsub.s32 0, %v824
    %v826 = vrot.slane %v815, %v825
    %v827 = vlaneseq
    %v828 = vshrl.u32 %v827, 7
    %v829 = vsub.s32 0, %v828
    %v830 = vrot.slane %v816, %v829
    %v831 = vlaneseq
    %v832 = vshrl.u32 %v831, 7
    %v833 = vsub.s32 0, %v832
    %v834 = vrot.slane %v817, %v833
    %v835 = vlaneseq
    %v836 = vshrl.u32 %v835, 7
    %v837 = vsub.s32 0, %v836
    %v838 = vrot.slane %v818, %v837
    %839 = vrot.lane.b32.xlu0 %v826, 35
    %v840 = vpop.permute.xlu0 %839
    %841 = vrot.lane.b32.xlu0 %v830, 35
    %v842 = vpop.permute.xlu0 %841
    %843 = vrot.lane.b32.xlu0 %v834, 35
    %v844 = vpop.permute.xlu0 %843
    %845 = vrot.lane.b32.xlu0 %v838, 35
    %v846 = vpop.permute.xlu0 %845
    %851 = vst.msk [vmem:[#allocation2 + $0x9] sm:$0x1] %vm610, %v840
    %852 = vst.msk [vmem:[#allocation2 + $0x21] sm:$0x1] %vm610, %v842
    %853 = vst.msk [vmem:[#allocation2 + $0x39] sm:$0x1] %vm610, %v844
    %854 = vst.msk [vmem:[#allocation2 + $0x51] sm:$0x1] %vm610, %v846
    %v855 = vld [vmem:[#allocation3] sm:$0x1]
    %v856 = vld [vmem:[#allocation3 + $0x2] sm:$0x1]
    %v857 = vld [vmem:[#allocation3 + $0x4] sm:$0x1]
    %v858 = vld [vmem:[#allocation3 + $0x6] sm:$0x1]
    %v863 = vlaneseq
    %v864 = vshrl.u32 %v863, 7
    %v865 = vsub.s32 0, %v864
    %v866 = vrot.slane %v855, %v865
    %v867 = vlaneseq
    %v868 = vshrl.u32 %v867, 7
    %v869 = vsub.s32 0, %v868
    %v870 = vrot.slane %v856, %v869
    %v871 = vlaneseq
    %v872 = vshrl.u32 %v871, 7
    %v873 = vsub.s32 0, %v872
    %v874 = vrot.slane %v857, %v873
    %v875 = vlaneseq
    %v876 = vshrl.u32 %v875, 7
    %v877 = vsub.s32 0, %v876
    %v878 = vrot.slane %v858, %v877
    %879 = vrot.lane.b32.xlu0 %v866, 19
    %v880 = vpop.permute.xlu0 %879
    %881 = vrot.lane.b32.xlu0 %v870, 19
    %v882 = vpop.permute.xlu0 %881
    %883 = vrot.lane.b32.xlu0 %v874, 19
    %v884 = vpop.permute.xlu0 %883
    %885 = vrot.lane.b32.xlu0 %v878, 19
    %v886 = vpop.permute.xlu0 %885
    %891 = vst.msk [vmem:[#allocation2 + $0xa] sm:$0x1] %vm610, %v880
    %892 = vst.msk [vmem:[#allocation2 + $0x22] sm:$0x1] %vm610, %v882
    %893 = vst.msk [vmem:[#allocation2 + $0x3a] sm:$0x1] %vm610, %v884
    %894 = vst.msk [vmem:[#allocation2 + $0x52] sm:$0x1] %vm610, %v886
    %v895 = vld [vmem:[#allocation3 + $0x1] sm:$0x1]
    %v896 = vld [vmem:[#allocation3 + $0x3] sm:$0x1]
    %v897 = vld [vmem:[#allocation3 + $0x5] sm:$0x1]
    %v898 = vld [vmem:[#allocation3 + $0x7] sm:$0x1]
    %v903 = vlaneseq
    %v904 = vshrl.u32 %v903, 7
    %v905 = vsub.s32 0, %v904
    %v906 = vrot.slane %v895, %v905
    %v907 = vlaneseq
    %v908 = vshrl.u32 %v907, 7
    %v909 = vsub.s32 0, %v908
    %v910 = vrot.slane %v896, %v909
    %v911 = vlaneseq
    %v912 = vshrl.u32 %v911, 7
    %v913 = vsub.s32 0, %v912
    %v914 = vrot.slane %v897, %v913
    %v915 = vlaneseq
    %v916 = vshrl.u32 %v915, 7
    %v917 = vsub.s32 0, %v916
    %v918 = vrot.slane %v898, %v917
    %919 = vrot.lane.b32.xlu0 %v906, 3
    %v920 = vpop.permute.xlu0 %919
    %921 = vrot.lane.b32.xlu0 %v910, 3
    %v922 = vpop.permute.xlu0 %921
    %923 = vrot.lane.b32.xlu0 %v914, 3
    %v924 = vpop.permute.xlu0 %923
    %925 = vrot.lane.b32.xlu0 %v918, 3
    %v926 = vpop.permute.xlu0 %925
    %931 = vst.msk [vmem:[#allocation2 + $0xb] sm:$0x1] %vm610, %v920
    %932 = vst.msk [vmem:[#allocation2 + $0x23] sm:$0x1] %vm610, %v922
    %933 = vst.msk [vmem:[#allocation2 + $0x3b] sm:$0x1] %vm610, %v924
    %934 = vst.msk [vmem:[#allocation2 + $0x53] sm:$0x1] %vm610, %v926
    %v935 = vld [vmem:[#allocation3 + $0x1] sm:$0x1]
    %v936 = vld [vmem:[#allocation3 + $0x3] sm:$0x1]
    %v937 = vld [vmem:[#allocation3 + $0x5] sm:$0x1]
    %v938 = vld [vmem:[#allocation3 + $0x7] sm:$0x1]
    %v943 = vlaneseq
    %v944 = vshrl.u32 %v943, 7
    %v945 = vsub.s32 0, %v944
    %v946 = vrot.slane %v935, %v945
    %v947 = vlaneseq
    %v948 = vshrl.u32 %v947, 7
    %v949 = vsub.s32 0, %v948
    %v950 = vrot.slane %v936, %v949
    %v951 = vlaneseq
    %v952 = vshrl.u32 %v951, 7
    %v953 = vsub.s32 0, %v952
    %v954 = vrot.slane %v937, %v953
    %v955 = vlaneseq
    %v956 = vshrl.u32 %v955, 7
    %v957 = vsub.s32 0, %v956
    %v958 = vrot.slane %v938, %v957
    %959 = vrot.lane.b32.xlu0 %v946, 115
    %v960 = vpop.permute.xlu0 %959
    %961 = vrot.lane.b32.xlu0 %v950, 115
    %v962 = vpop.permute.xlu0 %961
    %963 = vrot.lane.b32.xlu0 %v954, 115
    %v964 = vpop.permute.xlu0 %963
    %965 = vrot.lane.b32.xlu0 %v958, 115
    %v966 = vpop.permute.xlu0 %965
    %971 = vst.msk [vmem:[#allocation2 + $0xc] sm:$0x1] %vm610, %v960
    %972 = vst.msk [vmem:[#allocation2 + $0x24] sm:$0x1] %vm610, %v962
    %973 = vst.msk [vmem:[#allocation2 + $0x3c] sm:$0x1] %vm610, %v964
    %974 = vst.msk [vmem:[#allocation2 + $0x54] sm:$0x1] %vm610, %v966
    %v975 = vld [vmem:[#allocation3 + $0x1] sm:$0x1]
    %v976 = vld [vmem:[#allocation3 + $0x3] sm:$0x1]
    %v977 = vld [vmem:[#allocation3 + $0x5] sm:$0x1]
    %v978 = vld [vmem:[#allocation3 + $0x7] sm:$0x1]
    %v983 = vlaneseq
    %v984 = vshrl.u32 %v983, 7
    %v985 = vsub.s32 0, %v984
    %v986 = vrot.slane %v975, %v985
    %v987 = vlaneseq
    %v988 = vshrl.u32 %v987, 7
    %v989 = vsub.s32 0, %v988
    %v990 = vrot.slane %v976, %v989
    %v991 = vlaneseq
    %v992 = vshrl.u32 %v991, 7
    %v993 = vsub.s32 0, %v992
    %v994 = vrot.slane %v977, %v993
    %v995 = vlaneseq
    %v996 = vshrl.u32 %v995, 7
    %v997 = vsub.s32 0, %v996
    %v998 = vrot.slane %v978, %v997
    %999 = vrot.lane.b32.xlu0 %v986, 99
    %v1000 = vpop.permute.xlu0 %999
    %1001 = vrot.lane.b32.xlu0 %v990, 99
    %v1002 = vpop.permute.xlu0 %1001
    %1003 = vrot.lane.b32.xlu0 %v994, 99
    %v1004 = vpop.permute.xlu0 %1003
    %1005 = vrot.lane.b32.xlu0 %v998, 99
    %v1006 = vpop.permute.xlu0 %1005
    %1011 = vst.msk [vmem:[#allocation2 + $0xd] sm:$0x1] %vm610, %v1000
    %1012 = vst.msk [vmem:[#allocation2 + $0x25] sm:$0x1] %vm610, %v1002
    %1013 = vst.msk [vmem:[#allocation2 + $0x3d] sm:$0x1] %vm610, %v1004
    %1014 = vst.msk [vmem:[#allocation2 + $0x55] sm:$0x1] %vm610, %v1006
    %v1015 = vld [vmem:[#allocation3 + $0x1] sm:$0x1]
    %v1016 = vld [vmem:[#allocation3 + $0x3] sm:$0x1]
    %v1017 = vld [vmem:[#allocation3 + $0x5] sm:$0x1]
    %v1018 = vld [vmem:[#allocation3 + $0x7] sm:$0x1]
    %v1023 = vlaneseq
    %v1024 = vshrl.u32 %v1023, 7
    %v1025 = vsub.s32 0, %v1024
    %v1026 = vrot.slane %v1015, %v1025
    %v1027 = vlaneseq
    %v1028 = vshrl.u32 %v1027, 7
    %v1029 = vsub.s32 0, %v1028
    %v1030 = vrot.slane %v1016, %v1029
    %v1031 = vlaneseq
    %v1032 = vshrl.u32 %v1031, 7
    %v1033 = vsub.s32 0, %v1032
    %v1034 = vrot.slane %v1017, %v1033
    %v1035 = vlaneseq
    %v1036 = vshrl.u32 %v1035, 7
    %v1037 = vsub.s32 0, %v1036
    %v1038 = vrot.slane %v1018, %v1037
    %1039 = vrot.lane.b32.xlu0 %v1026, 83
    %v1040 = vpop.permute.xlu0 %1039
    %1041 = vrot.lane.b32.xlu0 %v1030, 83
    %v1042 = vpop.permute.xlu0 %1041
    %1043 = vrot.lane.b32.xlu0 %v1034, 83
    %v1044 = vpop.permute.xlu0 %1043
    %1045 = vrot.lane.b32.xlu0 %v1038, 83
    %v1046 = vpop.permute.xlu0 %1045
    %1051 = vst.msk [vmem:[#allocation2 + $0xe] sm:$0x1] %vm610, %v1040
    %1052 = vst.msk [vmem:[#allocation2 + $0x26] sm:$0x1] %vm610, %v1042
    %1053 = vst.msk [vmem:[#allocation2 + $0x3e] sm:$0x1] %vm610, %v1044
    %1054 = vst.msk [vmem:[#allocation2 + $0x56] sm:$0x1] %vm610, %v1046
    %v1055 = vld [vmem:[#allocation3 + $0x1] sm:$0x1]
    %v1056 = vld [vmem:[#allocation3 + $0x3] sm:$0x1]
    %v1057 = vld [vmem:[#allocation3 + $0x5] sm:$0x1]
    %v1058 = vld [vmem:[#allocation3 + $0x7] sm:$0x1]
    %v1063 = vlaneseq
    %v1064 = vshrl.u32 %v1063, 7
    %v1065 = vsub.s32 0, %v1064
    %v1066 = vrot.slane %v1055, %v1065
    %v1067 = vlaneseq
    %v1068 = vshrl.u32 %v1067, 7
    %v1069 = vsub.s32 0, %v1068
    %v1070 = vrot.slane %v1056, %v1069
    %v1071 = vlaneseq
    %v1072 = vshrl.u32 %v1071, 7
    %v1073 = vsub.s32 0, %v1072
    %v1074 = vrot.slane %v1057, %v1073
    %v1075 = vlaneseq
    %v1076 = vshrl.u32 %v1075, 7
    %v1077 = vsub.s32 0, %v1076
    %v1078 = vrot.slane %v1058, %v1077
    %1079 = vrot.lane.b32.xlu0 %v1066, 67
    %v1080 = vpop.permute.xlu0 %1079
    %1081 = vrot.lane.b32.xlu0 %v1070, 67
    %v1082 = vpop.permute.xlu0 %1081
    %1083 = vrot.lane.b32.xlu0 %v1074, 67
    %v1084 = vpop.permute.xlu0 %1083
    %1085 = vrot.lane.b32.xlu0 %v1078, 67
    %v1086 = vpop.permute.xlu0 %1085
    %1091 = vst.msk [vmem:[#allocation2 + $0xf] sm:$0x1] %vm610, %v1080
    %1092 = vst.msk [vmem:[#allocation2 + $0x27] sm:$0x1] %vm610, %v1082
    %1093 = vst.msk [vmem:[#allocation2 + $0x3f] sm:$0x1] %vm610, %v1084
    %1094 = vst.msk [vmem:[#allocation2 + $0x57] sm:$0x1] %vm610, %v1086
    %v1095 = vld [vmem:[#allocation3 + $0x1] sm:$0x1]
    %v1096 = vld [vmem:[#allocation3 + $0x3] sm:$0x1]
    %v1097 = vld [vmem:[#allocation3 + $0x5] sm:$0x1]
    %v1098 = vld [vmem:[#allocation3 + $0x7] sm:$0x1]
    %v1103 = vlaneseq
    %v1104 = vshrl.u32 %v1103, 7
    %v1105 = vsub.s32 0, %v1104
    %v1106 = vrot.slane %v1095, %v1105
    %v1107 = vlaneseq
    %v1108 = vshrl.u32 %v1107, 7
    %v1109 = vsub.s32 0, %v1108
    %v1110 = vrot.slane %v1096, %v1109
    %v1111 = vlaneseq
    %v1112 = vshrl.u32 %v1111, 7
    %v1113 = vsub.s32 0, %v1112
    %v1114 = vrot.slane %v1097, %v1113
    %v1115 = vlaneseq
    %v1116 = vshrl.u32 %v1115, 7
    %v1117 = vsub.s32 0, %v1116
    %v1118 = vrot.slane %v1098, %v1117
    %1119 = vrot.lane.b32.xlu0 %v1106, 51
    %v1120 = vpop.permute.xlu0 %1119
    %1121 = vrot.lane.b32.xlu0 %v1110, 51
    %v1122 = vpop.permute.xlu0 %1121
    %1123 = vrot.lane.b32.xlu0 %v1114, 51
    %v1124 = vpop.permute.xlu0 %1123
    %1125 = vrot.lane.b32.xlu0 %v1118, 51
    %v1126 = vpop.permute.xlu0 %1125
    %1131 = vst.msk [vmem:[#allocation2 + $0x10] sm:$0x1] %vm610, %v1120
    %1132 = vst.msk [vmem:[#allocation2 + $0x28] sm:$0x1] %vm610, %v1122
    %1133 = vst.msk [vmem:[#allocation2 + $0x40] sm:$0x1] %vm610, %v1124
    %1134 = vst.msk [vmem:[#allocation2 + $0x58] sm:$0x1] %vm610, %v1126
    %v1135 = vld [vmem:[#allocation3 + $0x1] sm:$0x1]
    %v1136 = vld [vmem:[#allocation3 + $0x3] sm:$0x1]
    %v1137 = vld [vmem:[#allocation3 + $0x5] sm:$0x1]
    %v1138 = vld [vmem:[#allocation3 + $0x7] sm:$0x1]
    %v1143 = vlaneseq
    %v1144 = vshrl.u32 %v1143, 7
    %v1145 = vsub.s32 0, %v1144
    %v1146 = vrot.slane %v1135, %v1145
    %v1147 = vlaneseq
    %v1148 = vshrl.u32 %v1147, 7
    %v1149 = vsub.s32 0, %v1148
    %v1150 = vrot.slane %v1136, %v1149
    %v1151 = vlaneseq
    %v1152 = vshrl.u32 %v1151, 7
    %v1153 = vsub.s32 0, %v1152
    %v1154 = vrot.slane %v1137, %v1153
    %v1155 = vlaneseq
    %v1156 = vshrl.u32 %v1155, 7
    %v1157 = vsub.s32 0, %v1156
    %v1158 = vrot.slane %v1138, %v1157
    %1159 = vrot.lane.b32.xlu0 %v1146, 35
    %v1160 = vpop.permute.xlu0 %1159
    %1161 = vrot.lane.b32.xlu0 %v1150, 35
    %v1162 = vpop.permute.xlu0 %1161
    %1163 = vrot.lane.b32.xlu0 %v1154, 35
    %v1164 = vpop.permute.xlu0 %1163
    %1165 = vrot.lane.b32.xlu0 %v1158, 35
    %v1166 = vpop.permute.xlu0 %1165
    %1171 = vst.msk [vmem:[#allocation2 + $0x11] sm:$0x1] %vm610, %v1160
    %1172 = vst.msk [vmem:[#allocation2 + $0x29] sm:$0x1] %vm610, %v1162
    %1173 = vst.msk [vmem:[#allocation2 + $0x41] sm:$0x1] %vm610, %v1164
    %1174 = vst.msk [vmem:[#allocation2 + $0x59] sm:$0x1] %vm610, %v1166
    %v1175 = vld [vmem:[#allocation3 + $0x1] sm:$0x1]
    %v1176 = vld [vmem:[#allocation3 + $0x3] sm:$0x1]
    %v1177 = vld [vmem:[#allocation3 + $0x5] sm:$0x1]
    %v1178 = vld [vmem:[#allocation3 + $0x7] sm:$0x1]
    %v1183 = vlaneseq
    %v1184 = vshrl.u32 %v1183, 7
    %v1185 = vsub.s32 0, %v1184
    %v1186 = vrot.slane %v1175, %v1185
    %v1187 = vlaneseq
    %v1188 = vshrl.u32 %v1187, 7
    %v1189 = vsub.s32 0, %v1188
    %v1190 = vrot.slane %v1176, %v1189
    %v1191 = vlaneseq
    %v1192 = vshrl.u32 %v1191, 7
    %v1193 = vsub.s32 0, %v1192
    %v1194 = vrot.slane %v1177, %v1193
    %v1195 = vlaneseq
    %v1196 = vshrl.u32 %v1195, 7
    %v1197 = vsub.s32 0, %v1196
    %v1198 = vrot.slane %v1178, %v1197
    %1199 = vrot.lane.b32.xlu0 %v1186, 19
    %v1200 = vpop.permute.xlu0 %1199
    %1201 = vrot.lane.b32.xlu0 %v1190, 19
    %v1202 = vpop.permute.xlu0 %1201
    %1203 = vrot.lane.b32.xlu0 %v1194, 19
    %v1204 = vpop.permute.xlu0 %1203
    %1205 = vrot.lane.b32.xlu0 %v1198, 19
    %v1206 = vpop.permute.xlu0 %1205
    %1211 = vst.msk [vmem:[#allocation2 + $0x12] sm:$0x1] %vm610, %v1200
    %1212 = vst.msk [vmem:[#allocation2 + $0x2a] sm:$0x1] %vm610, %v1202
    %1213 = vst.msk [vmem:[#allocation2 + $0x42] sm:$0x1] %vm610, %v1204
    %1214 = vst.msk [vmem:[#allocation2 + $0x5a] sm:$0x1] %vm610, %v1206
    %s1215 = sld [smem:[#allocation9 + $0x62]]
    %v1216 = vstv %s1215
    %v1217 = vld [vmem:[#allocation2] sm:$0xff]
    %v1218 = vld [vmem:[#allocation2 + $0x8] sm:$0xff]
    %v1219 = vld [vmem:[#allocation2 + $0x10] sm:$0xff]
    %v1220 = vld [vmem:[#allocation2 + $0x18] sm:$0xff]
    %v1221 = vld [vmem:[#allocation2 + $0x20] sm:$0xff]
    %v1222 = vld [vmem:[#allocation2 + $0x28] sm:$0xff]
    %s1223 = sld [smem:[#allocation9]]
    %v1224 = vstv %s1223
    %v1225 = vmul.f32 %v1224, %v1217
    %v1226 = vmul.f32 %v1224, %v1218
    %v1227 = vmul.f32 %v1224, %v1220
    %v1228 = vmul.f32 %v1224, %v1221
    %v1229 = vadd.f32 %v1216, %v1225
    %v1230 = vadd.f32 %v1216, %v1226
    %v1231 = vadd.f32 %v1216, %v1227
    %v1232 = vadd.f32 %v1216, %v1228
    %s1233 = sld [smem:[#allocation9 + $0x7]]
    %v1234 = vstv %s1233
    %v1235 = vmul.f32 %v1234, %v1217
    %v1236 = vmul.f32 %v1234, %v1218
    %v1237 = vmul.f32 %v1234, %v1219
    %v1238 = vmul.f32 %v1234, %v1220
    %v1239 = vmul.f32 %v1234, %v1221
    %v1240 = vmul.f32 %v1234, %v1222
    %vm1247 = vcmask 1046528
    %v1248 = vrot.slane %v1235, 1
    %v1249 = vrot.slane %v1236, 1
    %v1250 = vsel %vm1247, %v1248, %v1249
    %v1251 = vrot.slane %v1237, 1
    %v1252 = vsel %vm1247, %v1249, %v1251
    %v1253 = vrot.slane %v1238, 1
    %v1254 = vrot.slane %v1239, 1
    %v1255 = vsel %vm1247, %v1253, %v1254
    %v1256 = vrot.slane %v1240, 1
    %v1257 = vsel %vm1247, %v1254, %v1256
    %v1262 = vadd.f32 %v1229, %v1250
    %v1263 = vadd.f32 %v1230, %v1252
    %v1264 = vadd.f32 %v1231, %v1255
    %v1265 = vadd.f32 %v1232, %v1257
    %s1266 = sld [smem:[#allocation9 + $0xe]]
    %v1267 = vstv %s1266
    %v1268 = vmul.f32 %v1267, %v1217
    %v1269 = vmul.f32 %v1267, %v1218
    %v1270 = vmul.f32 %v1267, %v1219
    %v1271 = vmul.f32 %v1267, %v1220
    %v1272 = vmul.f32 %v1267, %v1221
    %v1273 = vmul.f32 %v1267, %v1222
    %vm1280 = vcmask 1045504
    %v1281 = vrot.slane %v1268, 2
    %v1282 = vrot.slane %v1269, 2
    %v1283 = vsel %vm1280, %v1281, %v1282
    %v1284 = vrot.slane %v1270, 2
    %v1285 = vsel %vm1280, %v1282, %v1284
    %v1286 = vrot.slane %v1271, 2
    %v1287 = vrot.slane %v1272, 2
    %v1288 = vsel %vm1280, %v1286, %v1287
    %v1289 = vrot.slane %v1273, 2
    %v1290 = vsel %vm1280, %v1287, %v1289
    %v1295 = vadd.f32 %v1262, %v1283
    %v1296 = vadd.f32 %v1263, %v1285
    %v1297 = vadd.f32 %v1264, %v1288
    %v1298 = vadd.f32 %v1265, %v1290
    %s1299 = sld [smem:[#allocation9 + $0x15]]
    %v1300 = vstv %s1299
    %v1301 = vmul.f32 %v1300, %v1217
    %v1302 = vmul.f32 %v1300, %v1218
    %v1303 = vmul.f32 %v1300, %v1219
    %v1304 = vmul.f32 %v1300, %v1220
    %v1305 = vmul.f32 %v1300, %v1221
    %v1306 = vmul.f32 %v1300, %v1222
    %vm1313 = vcmask 1044480
    %v1314 = vrot.slane %v1301, 3
    %v1315 = vrot.slane %v1302, 3
    %v1316 = vsel %vm1313, %v1314, %v1315
    %v1317 = vrot.slane %v1303, 3
    %v1318 = vsel %vm1313, %v1315, %v1317
    %v1319 = vrot.slane %v1304, 3
    %v1320 = vrot.slane %v1305, 3
    %v1321 = vsel %vm1313, %v1319, %v1320
    %v1322 = vrot.slane %v1306, 3
    %v1323 = vsel %vm1313, %v1320, %v1322
    %v1328 = vadd.f32 %v1295, %v1316
    %v1329 = vadd.f32 %v1296, %v1318
    %v1330 = vadd.f32 %v1297, %v1321
    %v1331 = vadd.f32 %v1298, %v1323
    %s1332 = sld [smem:[#allocation9 + $0x1c]]
    %v1333 = vstv %s1332
    %v1334 = vmul.f32 %v1333, %v1217
    %v1335 = vmul.f32 %v1333, %v1218
    %v1336 = vmul.f32 %v1333, %v1219
    %v1337 = vmul.f32 %v1333, %v1220
    %v1338 = vmul.f32 %v1333, %v1221
    %v1339 = vmul.f32 %v1333, %v1222
    %vm1346 = vcmask 1043456
    %v1347 = vrot.slane %v1334, 4
    %v1348 = vrot.slane %v1335, 4
    %v1349 = vsel %vm1346, %v1347, %v1348
    %v1350 = vrot.slane %v1336, 4
    %v1351 = vsel %vm1346, %v1348, %v1350
    %v1352 = vrot.slane %v1337, 4
    %v1353 = vrot.slane %v1338, 4
    %v1354 = vsel %vm1346, %v1352, %v1353
    %v1355 = vrot.slane %v1339, 4
    %v1356 = vsel %vm1346, %v1353, %v1355
    %v1361 = vadd.f32 %v1328, %v1349
    %v1362 = vadd.f32 %v1329, %v1351
    %v1363 = vadd.f32 %v1330, %v1354
    %v1364 = vadd.f32 %v1331, %v1356
    %s1365 = sld [smem:[#allocation9 + $0x23]]
    %v1366 = vstv %s1365
    %v1367 = vmul.f32 %v1366, %v1217
    %v1368 = vmul.f32 %v1366, %v1218
    %v1369 = vmul.f32 %v1366, %v1219
    %v1370 = vmul.f32 %v1366, %v1220
    %v1371 = vmul.f32 %v1366, %v1221
    %v1372 = vmul.f32 %v1366, %v1222
    %vm1379 = vcmask 1042432
    %v1380 = vrot.slane %v1367, 5
    %v1381 = vrot.slane %v1368, 5
    %v1382 = vsel %vm1379, %v1380, %v1381
    %v1383 = vrot.slane %v1369, 5
    %v1384 = vsel %vm1379, %v1381, %v1383
    %v1385 = vrot.slane %v1370, 5
    %v1386 = vrot.slane %v1371, 5
    %v1387 = vsel %vm1379, %v1385, %v1386
    %v1388 = vrot.slane %v1372, 5
    %v1389 = vsel %vm1379, %v1386, %v1388
    %v1394 = vadd.f32 %v1361, %v1382
    %v1395 = vadd.f32 %v1362, %v1384
    %v1396 = vadd.f32 %v1363, %v1387
    %v1397 = vadd.f32 %v1364, %v1389
    %s1398 = sld [smem:[#allocation9 + $0x2a]]
    %v1399 = vstv %s1398
    %v1400 = vmul.f32 %v1399, %v1217
    %v1401 = vmul.f32 %v1399, %v1218
    %v1402 = vmul.f32 %v1399, %v1219
    %v1403 = vmul.f32 %v1399, %v1220
    %v1404 = vmul.f32 %v1399, %v1221
    %v1405 = vmul.f32 %v1399, %v1222
    %v1412 = vrot.slane %v1400, 6
    %v1413 = vrot.slane %v1401, 6
    %v1414 = vsel %vm229, %v1412, %v1413
    %v1415 = vrot.slane %v1402, 6
    %v1416 = vsel %vm229, %v1413, %v1415
    %v1417 = vrot.slane %v1403, 6
    %v1418 = vrot.slane %v1404, 6
    %v1419 = vsel %vm229, %v1417, %v1418
    %v1420 = vrot.slane %v1405, 6
    %v1421 = vsel %vm229, %v1418, %v1420
    %v1426 = vadd.f32 %v1394, %v1414
    %v1427 = vadd.f32 %v1395, %v1416
    %v1428 = vadd.f32 %v1396, %v1419
    %v1429 = vadd.f32 %v1397, %v1421
    %s1430 = sld [smem:[#allocation9 + $0x1]]
    %v1431 = vstv %s1430
    %v1432 = vmul.f32 %v1431, %v1217
    %v1433 = vmul.f32 %v1431, %v1218
    %v1434 = vmul.f32 %v1431, %v1220
    %v1435 = vmul.f32 %v1431, %v1221
    %1440 = vrot.lane.b32.xlu0 %v1432, 127
    %v1441 = vpop.permute.xlu0 %1440
    %1442 = vrot.lane.b32.xlu0 %v1433, 127
    %v1443 = vpop.permute.xlu0 %1442
    %1444 = vrot.lane.b32.xlu0 %v1434, 127
    %v1445 = vpop.permute.xlu0 %1444
    %1446 = vrot.lane.b32.xlu0 %v1435, 127
    %v1447 = vpop.permute.xlu0 %1446
    %v1452 = vadd.f32 %v1426, %v1441
    %v1453 = vadd.f32 %v1427, %v1443
    %v1454 = vadd.f32 %v1428, %v1445
    %v1455 = vadd.f32 %v1429, %v1447
    %s1456 = sld [smem:[#allocation9 + $0x8]]
    %v1457 = vstv %s1456
    %v1458 = vmul.f32 %v1457, %v1217
    %v1459 = vmul.f32 %v1457, %v1218
    %v1460 = vmul.f32 %v1457, %v1219
    %v1461 = vmul.f32 %v1457, %v1220
    %v1462 = vmul.f32 %v1457, %v1221
    %v1463 = vmul.f32 %v1457, %v1222
    %v1470 = vrot.slane %v1458, 1
    %v1471 = vrot.slane %v1459, 1
    %v1472 = vsel %vm1247, %v1470, %v1471
    %v1473 = vrot.slane %v1460, 1
    %v1474 = vsel %vm1247, %v1471, %v1473
    %v1475 = vrot.slane %v1461, 1
    %v1476 = vrot.slane %v1462, 1
    %v1477 = vsel %vm1247, %v1475, %v1476
    %v1478 = vrot.slane %v1463, 1
    %v1479 = vsel %vm1247, %v1476, %v1478
    %1480 = vrot.lane.b32.xlu0 %v1472, 127
    %v1481 = vpop.permute.xlu0 %1480
    %1482 = vrot.lane.b32.xlu0 %v1474, 127
    %v1483 = vpop.permute.xlu0 %1482
    %1484 = vrot.lane.b32.xlu0 %v1477, 127
    %v1485 = vpop.permute.xlu0 %1484
    %1486 = vrot.lane.b32.xlu0 %v1479, 127
    %v1487 = vpop.permute.xlu0 %1486
    %v1492 = vadd.f32 %v1452, %v1481
    %v1493 = vadd.f32 %v1453, %v1483
    %v1494 = vadd.f32 %v1454, %v1485
    %v1495 = vadd.f32 %v1455, %v1487
    %s1496 = sld [smem:[#allocation9 + $0xf]]
    %v1497 = vstv %s1496
    %v1498 = vmul.f32 %v1497, %v1217
    %v1499 = vmul.f32 %v1497, %v1218
    %v1500 = vmul.f32 %v1497, %v1219
    %v1501 = vmul.f32 %v1497, %v1220
    %v1502 = vmul.f32 %v1497, %v1221
    %v1503 = vmul.f32 %v1497, %v1222
    %v1510 = vrot.slane %v1498, 2
    %v1511 = vrot.slane %v1499, 2
    %v1512 = vsel %vm1280, %v1510, %v1511
    %v1513 = vrot.slane %v1500, 2
    %v1514 = vsel %vm1280, %v1511, %v1513
    %v1515 = vrot.slane %v1501, 2
    %v1516 = vrot.slane %v1502, 2
    %v1517 = vsel %vm1280, %v1515, %v1516
    %v1518 = vrot.slane %v1503, 2
    %v1519 = vsel %vm1280, %v1516, %v1518
    %1520 = vrot.lane.b32.xlu0 %v1512, 127
    %v1521 = vpop.permute.xlu0 %1520
    %1522 = vrot.lane.b32.xlu0 %v1514, 127
    %v1523 = vpop.permute.xlu0 %1522
    %1524 = vrot.lane.b32.xlu0 %v1517, 127
    %v1525 = vpop.permute.xlu0 %1524
    %1526 = vrot.lane.b32.xlu0 %v1519, 127
    %v1527 = vpop.permute.xlu0 %1526
    %v1532 = vadd.f32 %v1492, %v1521
    %v1533 = vadd.f32 %v1493, %v1523
    %v1534 = vadd.f32 %v1494, %v1525
    %v1535 = vadd.f32 %v1495, %v1527
    %s1536 = sld [smem:[#allocation9 + $0x16]]
    %v1537 = vstv %s1536
    %v1538 = vmul.f32 %v1537, %v1217
    %v1539 = vmul.f32 %v1537, %v1218
    %v1540 = vmul.f32 %v1537, %v1219
    %v1541 = vmul.f32 %v1537, %v1220
    %v1542 = vmul.f32 %v1537, %v1221
    %v1543 = vmul.f32 %v1537, %v1222
    %v1550 = vrot.slane %v1538, 3
    %v1551 = vrot.slane %v1539, 3
    %v1552 = vsel %vm1313, %v1550, %v1551
    %v1553 = vrot.slane %v1540, 3
    %v1554 = vsel %vm1313, %v1551, %v1553
    %v1555 = vrot.slane %v1541, 3
    %v1556 = vrot.slane %v1542, 3
    %v1557 = vsel %vm1313, %v1555, %v1556
    %v1558 = vrot.slane %v1543, 3
    %v1559 = vsel %vm1313, %v1556, %v1558
    %1560 = vrot.lane.b32.xlu0 %v1552, 127
    %v1561 = vpop.permute.xlu0 %1560
    %1562 = vrot.lane.b32.xlu0 %v1554, 127
    %v1563 = vpop.permute.xlu0 %1562
    %1564 = vrot.lane.b32.xlu0 %v1557, 127
    %v1565 = vpop.permute.xlu0 %1564
    %1566 = vrot.lane.b32.xlu0 %v1559, 127
    %v1567 = vpop.permute.xlu0 %1566
    %v1572 = vadd.f32 %v1532, %v1561
    %v1573 = vadd.f32 %v1533, %v1563
    %v1574 = vadd.f32 %v1534, %v1565
    %v1575 = vadd.f32 %v1535, %v1567
    %s1576 = sld [smem:[#allocation9 + $0x1d]]
    %v1577 = vstv %s1576
    %v1578 = vmul.f32 %v1577, %v1217
    %v1579 = vmul.f32 %v1577, %v1218
    %v1580 = vmul.f32 %v1577, %v1219
    %v1581 = vmul.f32 %v1577, %v1220
    %v1582 = vmul.f32 %v1577, %v1221
    %v1583 = vmul.f32 %v1577, %v1222
    %v1590 = vrot.slane %v1578, 4
    %v1591 = vrot.slane %v1579, 4
    %v1592 = vsel %vm1346, %v1590, %v1591
    %v1593 = vrot.slane %v1580, 4
    %v1594 = vsel %vm1346, %v1591, %v1593
    %v1595 = vrot.slane %v1581, 4
    %v1596 = vrot.slane %v1582, 4
    %v1597 = vsel %vm1346, %v1595, %v1596
    %v1598 = vrot.slane %v1583, 4
    %v1599 = vsel %vm1346, %v1596, %v1598
    %1600 = vrot.lane.b32.xlu0 %v1592, 127
    %v1601 = vpop.permute.xlu0 %1600
    %1602 = vrot.lane.b32.xlu0 %v1594, 127
    %v1603 = vpop.permute.xlu0 %1602
    %1604 = vrot.lane.b32.xlu0 %v1597, 127
    %v1605 = vpop.permute.xlu0 %1604
    %1606 = vrot.lane.b32.xlu0 %v1599, 127
    %v1607 = vpop.permute.xlu0 %1606
    %v1612 = vadd.f32 %v1572, %v1601
    %v1613 = vadd.f32 %v1573, %v1603
    %v1614 = vadd.f32 %v1574, %v1605
    %v1615 = vadd.f32 %v1575, %v1607
    %s1616 = sld [smem:[#allocation9 + $0x24]]
    %v1617 = vstv %s1616
    %v1618 = vmul.f32 %v1617, %v1217
    %v1619 = vmul.f32 %v1617, %v1218
    %v1620 = vmul.f32 %v1617, %v1219
    %v1621 = vmul.f32 %v1617, %v1220
    %v1622 = vmul.f32 %v1617, %v1221
    %v1623 = vmul.f32 %v1617, %v1222
    %v1630 = vrot.slane %v1618, 5
    %v1631 = vrot.slane %v1619, 5
    %v1632 = vsel %vm1379, %v1630, %v1631
    %v1633 = vrot.slane %v1620, 5
    %v1634 = vsel %vm1379, %v1631, %v1633
    %v1635 = vrot.slane %v1621, 5
    %v1636 = vrot.slane %v1622, 5
    %v1637 = vsel %vm1379, %v1635, %v1636
    %v1638 = vrot.slane %v1623, 5
    %v1639 = vsel %vm1379, %v1636, %v1638
    %1640 = vrot.lane.b32.xlu0 %v1632, 127
    %v1641 = vpop.permute.xlu0 %1640
    %1642 = vrot.lane.b32.xlu0 %v1634, 127
    %v1643 = vpop.permute.xlu0 %1642
    %1644 = vrot.lane.b32.xlu0 %v1637, 127
    %v1645 = vpop.permute.xlu0 %1644
    %1646 = vrot.lane.b32.xlu0 %v1639, 127
    %v1647 = vpop.permute.xlu0 %1646
    %v1652 = vadd.f32 %v1612, %v1641
    %v1653 = vadd.f32 %v1613, %v1643
    %v1654 = vadd.f32 %v1614, %v1645
    %v1655 = vadd.f32 %v1615, %v1647
    %s1656 = sld [smem:[#allocation9 + $0x2b]]
    %v1657 = vstv %s1656
    %v1658 = vmul.f32 %v1657, %v1217
    %v1659 = vmul.f32 %v1657, %v1218
    %v1660 = vmul.f32 %v1657, %v1219
    %v1661 = vmul.f32 %v1657, %v1220
    %v1662 = vmul.f32 %v1657, %v1221
    %v1663 = vmul.f32 %v1657, %v1222
    %v1670 = vrot.slane %v1658, 6
    %v1671 = vrot.slane %v1659, 6
    %v1672 = vsel %vm229, %v1670, %v1671
    %v1673 = vrot.slane %v1660, 6
    %v1674 = vsel %vm229, %v1671, %v1673
    %v1675 = vrot.slane %v1661, 6
    %v1676 = vrot.slane %v1662, 6
    %v1677 = vsel %vm229, %v1675, %v1676
    %v1678 = vrot.slane %v1663, 6
    %v1679 = vsel %vm229, %v1676, %v1678
    %1680 = vrot.lane.b32.xlu0 %v1672, 127
    %v1681 = vpop.permute.xlu0 %1680
    %1682 = vrot.lane.b32.xlu0 %v1674, 127
    %v1683 = vpop.permute.xlu0 %1682
    %1684 = vrot.lane.b32.xlu0 %v1677, 127
    %v1685 = vpop.permute.xlu0 %1684
    %1686 = vrot.lane.b32.xlu0 %v1679, 127
    %v1687 = vpop.permute.xlu0 %1686
    %v1692 = vadd.f32 %v1652, %v1681
    %v1693 = vadd.f32 %v1653, %v1683
    %v1694 = vadd.f32 %v1654, %v1685
    %v1695 = vadd.f32 %v1655, %v1687
    %s1696 = sld [smem:[#allocation9 + $0x2]]
    %v1697 = vstv %s1696
    %v1698 = vmul.f32 %v1697, %v1217
    %v1699 = vmul.f32 %v1697, %v1218
    %v1700 = vmul.f32 %v1697, %v1220
    %v1701 = vmul.f32 %v1697, %v1221
    %1706 = vrot.lane.b32.xlu0 %v1698, 126
    %v1707 = vpop.permute.xlu0 %1706
    %1708 = vrot.lane.b32.xlu0 %v1699, 126
    %v1709 = vpop.permute.xlu0 %1708
    %1710 = vrot.lane.b32.xlu0 %v1700, 126
    %v1711 = vpop.permute.xlu0 %1710
    %1712 = vrot.lane.b32.xlu0 %v1701, 126
    %v1713 = vpop.permute.xlu0 %1712
    %v1718 = vadd.f32 %v1692, %v1707
    %v1719 = vadd.f32 %v1693, %v1709
    %v1720 = vadd.f32 %v1694, %v1711
    %v1721 = vadd.f32 %v1695, %v1713
    %s1722 = sld [smem:[#allocation9 + $0x9]]
    %v1723 = vstv %s1722
    %v1724 = vmul.f32 %v1723, %v1217
    %v1725 = vmul.f32 %v1723, %v1218
    %v1726 = vmul.f32 %v1723, %v1219
    %v1727 = vmul.f32 %v1723, %v1220
    %v1728 = vmul.f32 %v1723, %v1221
    %v1729 = vmul.f32 %v1723, %v1222
    %v1736 = vrot.slane %v1724, 1
    %v1737 = vrot.slane %v1725, 1
    %v1738 = vsel %vm1247, %v1736, %v1737
    %v1739 = vrot.slane %v1726, 1
    %v1740 = vsel %vm1247, %v1737, %v1739
    %v1741 = vrot.slane %v1727, 1
    %v1742 = vrot.slane %v1728, 1
    %v1743 = vsel %vm1247, %v1741, %v1742
    %v1744 = vrot.slane %v1729, 1
    %v1745 = vsel %vm1247, %v1742, %v1744
    %1746 = vrot.lane.b32.xlu0 %v1738, 126
    %v1747 = vpop.permute.xlu0 %1746
    %1748 = vrot.lane.b32.xlu0 %v1740, 126
    %v1749 = vpop.permute.xlu0 %1748
    %1750 = vrot.lane.b32.xlu0 %v1743, 126
    %v1751 = vpop.permute.xlu0 %1750
    %1752 = vrot.lane.b32.xlu0 %v1745, 126
    %v1753 = vpop.permute.xlu0 %1752
    %v1758 = vadd.f32 %v1718, %v1747
    %v1759 = vadd.f32 %v1719, %v1749
    %v1760 = vadd.f32 %v1720, %v1751
    %v1761 = vadd.f32 %v1721, %v1753
    %s1762 = sld [smem:[#allocation9 + $0x10]]
    %v1763 = vstv %s1762
    %v1764 = vmul.f32 %v1763, %v1217
    %v1765 = vmul.f32 %v1763, %v1218
    %v1766 = vmul.f32 %v1763, %v1219
    %v1767 = vmul.f32 %v1763, %v1220
    %v1768 = vmul.f32 %v1763, %v1221
    %v1769 = vmul.f32 %v1763, %v1222
    %v1776 = vrot.slane %v1764, 2
    %v1777 = vrot.slane %v1765, 2
    %v1778 = vsel %vm1280, %v1776, %v1777
    %v1779 = vrot.slane %v1766, 2
    %v1780 = vsel %vm1280, %v1777, %v1779
    %v1781 = vrot.slane %v1767, 2
    %v1782 = vrot.slane %v1768, 2
    %v1783 = vsel %vm1280, %v1781, %v1782
    %v1784 = vrot.slane %v1769, 2
    %v1785 = vsel %vm1280, %v1782, %v1784
    %1786 = vrot.lane.b32.xlu0 %v1778, 126
    %v1787 = vpop.permute.xlu0 %1786
    %1788 = vrot.lane.b32.xlu0 %v1780, 126
    %v1789 = vpop.permute.xlu0 %1788
    %1790 = vrot.lane.b32.xlu0 %v1783, 126
    %v1791 = vpop.permute.xlu0 %1790
    %1792 = vrot.lane.b32.xlu0 %v1785, 126
    %v1793 = vpop.permute.xlu0 %1792
    %v1798 = vadd.f32 %v1758, %v1787
    %v1799 = vadd.f32 %v1759, %v1789
    %v1800 = vadd.f32 %v1760, %v1791
    %v1801 = vadd.f32 %v1761, %v1793
    %s1802 = sld [smem:[#allocation9 + $0x17]]
    %v1803 = vstv %s1802
    %v1804 = vmul.f32 %v1803, %v1217
    %v1805 = vmul.f32 %v1803, %v1218
    %v1806 = vmul.f32 %v1803, %v1219
    %v1807 = vmul.f32 %v1803, %v1220
    %v1808 = vmul.f32 %v1803, %v1221
    %v1809 = vmul.f32 %v1803, %v1222
    %v1816 = vrot.slane %v1804, 3
    %v1817 = vrot.slane %v1805, 3
    %v1818 = vsel %vm1313, %v1816, %v1817
    %v1819 = vrot.slane %v1806, 3
    %v1820 = vsel %vm1313, %v1817, %v1819
    %v1821 = vrot.slane %v1807, 3
    %v1822 = vrot.slane %v1808, 3
    %v1823 = vsel %vm1313, %v1821, %v1822
    %v1824 = vrot.slane %v1809, 3
    %v1825 = vsel %vm1313, %v1822, %v1824
    %1826 = vrot.lane.b32.xlu0 %v1818, 126
    %v1827 = vpop.permute.xlu0 %1826
    %1828 = vrot.lane.b32.xlu0 %v1820, 126
    %v1829 = vpop.permute.xlu0 %1828
    %1830 = vrot.lane.b32.xlu0 %v1823, 126
    %v1831 = vpop.permute.xlu0 %1830
    %1832 = vrot.lane.b32.xlu0 %v1825, 126
    %v1833 = vpop.permute.xlu0 %1832
    %v1838 = vadd.f32 %v1798, %v1827
    %v1839 = vadd.f32 %v1799, %v1829
    %v1840 = vadd.f32 %v1800, %v1831
    %v1841 = vadd.f32 %v1801, %v1833
    %s1842 = sld [smem:[#allocation9 + $0x1e]]
    %v1843 = vstv %s1842
    %v1844 = vmul.f32 %v1843, %v1217
    %v1845 = vmul.f32 %v1843, %v1218
    %v1846 = vmul.f32 %v1843, %v1219
    %v1847 = vmul.f32 %v1843, %v1220
    %v1848 = vmul.f32 %v1843, %v1221
    %v1849 = vmul.f32 %v1843, %v1222
    %v1856 = vrot.slane %v1844, 4
    %v1857 = vrot.slane %v1845, 4
    %v1858 = vsel %vm1346, %v1856, %v1857
    %v1859 = vrot.slane %v1846, 4
    %v1860 = vsel %vm1346, %v1857, %v1859
    %v1861 = vrot.slane %v1847, 4
    %v1862 = vrot.slane %v1848, 4
    %v1863 = vsel %vm1346, %v1861, %v1862
    %v1864 = vrot.slane %v1849, 4
    %v1865 = vsel %vm1346, %v1862, %v1864
    %1866 = vrot.lane.b32.xlu0 %v1858, 126
    %v1867 = vpop.permute.xlu0 %1866
    %1868 = vrot.lane.b32.xlu0 %v1860, 126
    %v1869 = vpop.permute.xlu0 %1868
    %1870 = vrot.lane.b32.xlu0 %v1863, 126
    %v1871 = vpop.permute.xlu0 %1870
    %1872 = vrot.lane.b32.xlu0 %v1865, 126
    %v1873 = vpop.permute.xlu0 %1872
    %v1878 = vadd.f32 %v1838, %v1867
    %v1879 = vadd.f32 %v1839, %v1869
    %v1880 = vadd.f32 %v1840, %v1871
    %v1881 = vadd.f32 %v1841, %v1873
    %s1882 = sld [smem:[#allocation9 + $0x25]]
    %v1883 = vstv %s1882
    %v1884 = vmul.f32 %v1883, %v1217
    %v1885 = vmul.f32 %v1883, %v1218
    %v1886 = vmul.f32 %v1883, %v1219
    %v1887 = vmul.f32 %v1883, %v1220
    %v1888 = vmul.f32 %v1883, %v1221
    %v1889 = vmul.f32 %v1883, %v1222
    %v1896 = vrot.slane %v1884, 5
    %v1897 = vrot.slane %v1885, 5
    %v1898 = vsel %vm1379, %v1896, %v1897
    %v1899 = vrot.slane %v1886, 5
    %v1900 = vsel %vm1379, %v1897, %v1899
    %v1901 = vrot.slane %v1887, 5
    %v1902 = vrot.slane %v1888, 5
    %v1903 = vsel %vm1379, %v1901, %v1902
    %v1904 = vrot.slane %v1889, 5
    %v1905 = vsel %vm1379, %v1902, %v1904
    %1906 = vrot.lane.b32.xlu0 %v1898, 126
    %v1907 = vpop.permute.xlu0 %1906
    %1908 = vrot.lane.b32.xlu0 %v1900, 126
    %v1909 = vpop.permute.xlu0 %1908
    %1910 = vrot.lane.b32.xlu0 %v1903, 126
    %v1911 = vpop.permute.xlu0 %1910
    %1912 = vrot.lane.b32.xlu0 %v1905, 126
    %v1913 = vpop.permute.xlu0 %1912
    %v1918 = vadd.f32 %v1878, %v1907
    %v1919 = vadd.f32 %v1879, %v1909
    %v1920 = vadd.f32 %v1880, %v1911
    %v1921 = vadd.f32 %v1881, %v1913
    %s1922 = sld [smem:[#allocation9 + $0x2c]]
    %v1923 = vstv %s1922
    %v1924 = vmul.f32 %v1923, %v1217
    %v1925 = vmul.f32 %v1923, %v1218
    %v1926 = vmul.f32 %v1923, %v1219
    %v1927 = vmul.f32 %v1923, %v1220
    %v1928 = vmul.f32 %v1923, %v1221
    %v1929 = vmul.f32 %v1923, %v1222
    %v1936 = vrot.slane %v1924, 6
    %v1937 = vrot.slane %v1925, 6
    %v1938 = vsel %vm229, %v1936, %v1937
    %v1939 = vrot.slane %v1926, 6
    %v1940 = vsel %vm229, %v1937, %v1939
    %v1941 = vrot.slane %v1927, 6
    %v1942 = vrot.slane %v1928, 6
    %v1943 = vsel %vm229, %v1941, %v1942
    %v1944 = vrot.slane %v1929, 6
    %v1945 = vsel %vm229, %v1942, %v1944
    %1946 = vrot.lane.b32.xlu0 %v1938, 126
    %v1947 = vpop.permute.xlu0 %1946
    %1948 = vrot.lane.b32.xlu0 %v1940, 126
    %v1949 = vpop.permute.xlu0 %1948
    %1950 = vrot.lane.b32.xlu0 %v1943, 126
    %v1951 = vpop.permute.xlu0 %1950
    %1952 = vrot.lane.b32.xlu0 %v1945, 126
    %v1953 = vpop.permute.xlu0 %1952
    %v1958 = vadd.f32 %v1918, %v1947
    %v1959 = vadd.f32 %v1919, %v1949
    %v1960 = vadd.f32 %v1920, %v1951
    %v1961 = vadd.f32 %v1921, %v1953
    %s1962 = sld [smem:[#allocation9 + $0x3]]
    %v1963 = vstv %s1962
    %v1964 = vmul.f32 %v1963, %v1217
    %v1965 = vmul.f32 %v1963, %v1218
    %v1966 = vmul.f32 %v1963, %v1220
    %v1967 = vmul.f32 %v1963, %v1221
    %1972 = vrot.lane.b32.xlu0 %v1964, 125
    %v1973 = vpop.permute.xlu0 %1972
    %1974 = vrot.lane.b32.xlu0 %v1965, 125
    %v1975 = vpop.permute.xlu0 %1974
    %1976 = vrot.lane.b32.xlu0 %v1966, 125
    %v1977 = vpop.permute.xlu0 %1976
    %1978 = vrot.lane.b32.xlu0 %v1967, 125
    %v1979 = vpop.permute.xlu0 %1978
    %v1984 = vadd.f32 %v1958, %v1973
    %v1985 = vadd.f32 %v1959, %v1975
    %v1986 = vadd.f32 %v1960, %v1977
    %v1987 = vadd.f32 %v1961, %v1979
    %s1988 = sld [smem:[#allocation9 + $0xa]]
    %v1989 = vstv %s1988
    %v1990 = vmul.f32 %v1989, %v1217
    %v1991 = vmul.f32 %v1989, %v1218
    %v1992 = vmul.f32 %v1989, %v1219
    %v1993 = vmul.f32 %v1989, %v1220
    %v1994 = vmul.f32 %v1989, %v1221
    %v1995 = vmul.f32 %v1989, %v1222
    %v2002 = vrot.slane %v1990, 1
    %v2003 = vrot.slane %v1991, 1
    %v2004 = vsel %vm1247, %v2002, %v2003
    %v2005 = vrot.slane %v1992, 1
    %v2006 = vsel %vm1247, %v2003, %v2005
    %v2007 = vrot.slane %v1993, 1
    %v2008 = vrot.slane %v1994, 1
    %v2009 = vsel %vm1247, %v2007, %v2008
    %v2010 = vrot.slane %v1995, 1
    %v2011 = vsel %vm1247, %v2008, %v2010
    %2012 = vrot.lane.b32.xlu0 %v2004, 125
    %v2013 = vpop.permute.xlu0 %2012
    %2014 = vrot.lane.b32.xlu0 %v2006, 125
    %v2015 = vpop.permute.xlu0 %2014
    %2016 = vrot.lane.b32.xlu0 %v2009, 125
    %v2017 = vpop.permute.xlu0 %2016
    %2018 = vrot.lane.b32.xlu0 %v2011, 125
    %v2019 = vpop.permute.xlu0 %2018
    %v2024 = vadd.f32 %v1984, %v2013
    %v2025 = vadd.f32 %v1985, %v2015
    %v2026 = vadd.f32 %v1986, %v2017
    %v2027 = vadd.f32 %v1987, %v2019
    %s2028 = sld [smem:[#allocation9 + $0x11]]
    %v2029 = vstv %s2028
    %v2030 = vmul.f32 %v2029, %v1217
    %v2031 = vmul.f32 %v2029, %v1218
    %v2032 = vmul.f32 %v2029, %v1219
    %v2033 = vmul.f32 %v2029, %v1220
    %v2034 = vmul.f32 %v2029, %v1221
    %v2035 = vmul.f32 %v2029, %v1222
    %v2042 = vrot.slane %v2030, 2
    %v2043 = vrot.slane %v2031, 2
    %v2044 = vsel %vm1280, %v2042, %v2043
    %v2045 = vrot.slane %v2032, 2
    %v2046 = vsel %vm1280, %v2043, %v2045
    %v2047 = vrot.slane %v2033, 2
    %v2048 = vrot.slane %v2034, 2
    %v2049 = vsel %vm1280, %v2047, %v2048
    %v2050 = vrot.slane %v2035, 2
    %v2051 = vsel %vm1280, %v2048, %v2050
    %2052 = vrot.lane.b32.xlu0 %v2044, 125
    %v2053 = vpop.permute.xlu0 %2052
    %2054 = vrot.lane.b32.xlu0 %v2046, 125
    %v2055 = vpop.permute.xlu0 %2054
    %2056 = vrot.lane.b32.xlu0 %v2049, 125
    %v2057 = vpop.permute.xlu0 %2056
    %2058 = vrot.lane.b32.xlu0 %v2051, 125
    %v2059 = vpop.permute.xlu0 %2058
    %v2064 = vadd.f32 %v2024, %v2053
    %v2065 = vadd.f32 %v2025, %v2055
    %v2066 = vadd.f32 %v2026, %v2057
    %v2067 = vadd.f32 %v2027, %v2059
    %s2068 = sld [smem:[#allocation9 + $0x18]]
    %v2069 = vstv %s2068
    %v2070 = vmul.f32 %v2069, %v1217
    %v2071 = vmul.f32 %v2069, %v1218
    %v2072 = vmul.f32 %v2069, %v1219
    %v2073 = vmul.f32 %v2069, %v1220
    %v2074 = vmul.f32 %v2069, %v1221
    %v2075 = vmul.f32 %v2069, %v1222
    %v2082 = vrot.slane %v2070, 3
    %v2083 = vrot.slane %v2071, 3
    %v2084 = vsel %vm1313, %v2082, %v2083
    %v2085 = vrot.slane %v2072, 3
    %v2086 = vsel %vm1313, %v2083, %v2085
    %v2087 = vrot.slane %v2073, 3
    %v2088 = vrot.slane %v2074, 3
    %v2089 = vsel %vm1313, %v2087, %v2088
    %v2090 = vrot.slane %v2075, 3
    %v2091 = vsel %vm1313, %v2088, %v2090
    %2092 = vrot.lane.b32.xlu0 %v2084, 125
    %v2093 = vpop.permute.xlu0 %2092
    %2094 = vrot.lane.b32.xlu0 %v2086, 125
    %v2095 = vpop.permute.xlu0 %2094
    %2096 = vrot.lane.b32.xlu0 %v2089, 125
    %v2097 = vpop.permute.xlu0 %2096
    %2098 = vrot.lane.b32.xlu0 %v2091, 125
    %v2099 = vpop.permute.xlu0 %2098
    %v2104 = vadd.f32 %v2064, %v2093
    %v2105 = vadd.f32 %v2065, %v2095
    %v2106 = vadd.f32 %v2066, %v2097
    %v2107 = vadd.f32 %v2067, %v2099
    %s2108 = sld [smem:[#allocation9 + $0x1f]]
    %v2109 = vstv %s2108
    %v2110 = vmul.f32 %v2109, %v1217
    %v2111 = vmul.f32 %v2109, %v1218
    %v2112 = vmul.f32 %v2109, %v1219
    %v2113 = vmul.f32 %v2109, %v1220
    %v2114 = vmul.f32 %v2109, %v1221
    %v2115 = vmul.f32 %v2109, %v1222
    %v2122 = vrot.slane %v2110, 4
    %v2123 = vrot.slane %v2111, 4
    %v2124 = vsel %vm1346, %v2122, %v2123
    %v2125 = vrot.slane %v2112, 4
    %v2126 = vsel %vm1346, %v2123, %v2125
    %v2127 = vrot.slane %v2113, 4
    %v2128 = vrot.slane %v2114, 4
    %v2129 = vsel %vm1346, %v2127, %v2128
    %v2130 = vrot.slane %v2115, 4
    %v2131 = vsel %vm1346, %v2128, %v2130
    %2132 = vrot.lane.b32.xlu0 %v2124, 125
    %v2133 = vpop.permute.xlu0 %2132
    %2134 = vrot.lane.b32.xlu0 %v2126, 125
    %v2135 = vpop.permute.xlu0 %2134
    %2136 = vrot.lane.b32.xlu0 %v2129, 125
    %v2137 = vpop.permute.xlu0 %2136
    %2138 = vrot.lane.b32.xlu0 %v2131, 125
    %v2139 = vpop.permute.xlu0 %2138
    %v2144 = vadd.f32 %v2104, %v2133
    %v2145 = vadd.f32 %v2105, %v2135
    %v2146 = vadd.f32 %v2106, %v2137
    %v2147 = vadd.f32 %v2107, %v2139
    %s2148 = sld [smem:[#allocation9 + $0x26]]
    %v2149 = vstv %s2148
    %v2150 = vmul.f32 %v2149, %v1217
    %v2151 = vmul.f32 %v2149, %v1218
    %v2152 = vmul.f32 %v2149, %v1219
    %v2153 = vmul.f32 %v2149, %v1220
    %v2154 = vmul.f32 %v2149, %v1221
    %v2155 = vmul.f32 %v2149, %v1222
    %v2162 = vrot.slane %v2150, 5
    %v2163 = vrot.slane %v2151, 5
    %v2164 = vsel %vm1379, %v2162, %v2163
    %v2165 = vrot.slane %v2152, 5
    %v2166 = vsel %vm1379, %v2163, %v2165
    %v2167 = vrot.slane %v2153, 5
    %v2168 = vrot.slane %v2154, 5
    %v2169 = vsel %vm1379, %v2167, %v2168
    %v2170 = vrot.slane %v2155, 5
    %v2171 = vsel %vm1379, %v2168, %v2170
    %2172 = vrot.lane.b32.xlu0 %v2164, 125
    %v2173 = vpop.permute.xlu0 %2172
    %2174 = vrot.lane.b32.xlu0 %v2166, 125
    %v2175 = vpop.permute.xlu0 %2174
    %2176 = vrot.lane.b32.xlu0 %v2169, 125
    %v2177 = vpop.permute.xlu0 %2176
    %2178 = vrot.lane.b32.xlu0 %v2171, 125
    %v2179 = vpop.permute.xlu0 %2178
    %v2184 = vadd.f32 %v2144, %v2173
    %v2185 = vadd.f32 %v2145, %v2175
    %v2186 = vadd.f32 %v2146, %v2177
    %v2187 = vadd.f32 %v2147, %v2179
    %s2188 = sld [smem:[#allocation9 + $0x2d]]
    %v2189 = vstv %s2188
    %v2190 = vmul.f32 %v2189, %v1217
    %v2191 = vmul.f32 %v2189, %v1218
    %v2192 = vmul.f32 %v2189, %v1219
    %v2193 = vmul.f32 %v2189, %v1220
    %v2194 = vmul.f32 %v2189, %v1221
    %v2195 = vmul.f32 %v2189, %v1222
    %v2202 = vrot.slane %v2190, 6
    %v2203 = vrot.slane %v2191, 6
    %v2204 = vsel %vm229, %v2202, %v2203
    %v2205 = vrot.slane %v2192, 6
    %v2206 = vsel %vm229, %v2203, %v2205
    %v2207 = vrot.slane %v2193, 6
    %v2208 = vrot.slane %v2194, 6
    %v2209 = vsel %vm229, %v2207, %v2208
    %v2210 = vrot.slane %v2195, 6
    %v2211 = vsel %vm229, %v2208, %v2210
    %2212 = vrot.lane.b32.xlu0 %v2204, 125
    %v2213 = vpop.permute.xlu0 %2212
    %2214 = vrot.lane.b32.xlu0 %v2206, 125
    %v2215 = vpop.permute.xlu0 %2214
    %2216 = vrot.lane.b32.xlu0 %v2209, 125
    %v2217 = vpop.permute.xlu0 %2216
    %2218 = vrot.lane.b32.xlu0 %v2211, 125
    %v2219 = vpop.permute.xlu0 %2218
    %v2224 = vadd.f32 %v2184, %v2213
    %v2225 = vadd.f32 %v2185, %v2215
    %v2226 = vadd.f32 %v2186, %v2217
    %v2227 = vadd.f32 %v2187, %v2219
    %s2228 = sld [smem:[#allocation9 + $0x4]]
    %v2229 = vstv %s2228
    %v2230 = vmul.f32 %v2229, %v1217
    %v2231 = vmul.f32 %v2229, %v1218
    %v2232 = vmul.f32 %v2229, %v1220
    %v2233 = vmul.f32 %v2229, %v1221
    %2238 = vrot.lane.b32.xlu0 %v2230, 124
    %v2239 = vpop.permute.xlu0 %2238
    %2240 = vrot.lane.b32.xlu0 %v2231, 124
    %v2241 = vpop.permute.xlu0 %2240
    %2242 = vrot.lane.b32.xlu0 %v2232, 124
    %v2243 = vpop.permute.xlu0 %2242
    %2244 = vrot.lane.b32.xlu0 %v2233, 124
    %v2245 = vpop.permute.xlu0 %2244
    %v2250 = vadd.f32 %v2224, %v2239
    %v2251 = vadd.f32 %v2225, %v2241
    %v2252 = vadd.f32 %v2226, %v2243
    %v2253 = vadd.f32 %v2227, %v2245
    %s2254 = sld [smem:[#allocation9 + $0xb]]
    %v2255 = vstv %s2254
    %v2256 = vmul.f32 %v2255, %v1217
    %v2257 = vmul.f32 %v2255, %v1218
    %v2258 = vmul.f32 %v2255, %v1219
    %v2259 = vmul.f32 %v2255, %v1220
    %v2260 = vmul.f32 %v2255, %v1221
    %v2261 = vmul.f32 %v2255, %v1222
    %v2268 = vrot.slane %v2256, 1
    %v2269 = vrot.slane %v2257, 1
    %v2270 = vsel %vm1247, %v2268, %v2269
    %v2271 = vrot.slane %v2258, 1
    %v2272 = vsel %vm1247, %v2269, %v2271
    %v2273 = vrot.slane %v2259, 1
    %v2274 = vrot.slane %v2260, 1
    %v2275 = vsel %vm1247, %v2273, %v2274
    %v2276 = vrot.slane %v2261, 1
    %v2277 = vsel %vm1247, %v2274, %v2276
    %2278 = vrot.lane.b32.xlu0 %v2270, 124
    %v2279 = vpop.permute.xlu0 %2278
    %2280 = vrot.lane.b32.xlu0 %v2272, 124
    %v2281 = vpop.permute.xlu0 %2280
    %2282 = vrot.lane.b32.xlu0 %v2275, 124
    %v2283 = vpop.permute.xlu0 %2282
    %2284 = vrot.lane.b32.xlu0 %v2277, 124
    %v2285 = vpop.permute.xlu0 %2284
    %v2290 = vadd.f32 %v2250, %v2279
    %v2291 = vadd.f32 %v2251, %v2281
    %v2292 = vadd.f32 %v2252, %v2283
    %v2293 = vadd.f32 %v2253, %v2285
    %s2294 = sld [smem:[#allocation9 + $0x12]]
    %v2295 = vstv %s2294
    %v2296 = vmul.f32 %v2295, %v1217
    %v2297 = vmul.f32 %v2295, %v1218
    %v2298 = vmul.f32 %v2295, %v1219
    %v2299 = vmul.f32 %v2295, %v1220
    %v2300 = vmul.f32 %v2295, %v1221
    %v2301 = vmul.f32 %v2295, %v1222
    %v2308 = vrot.slane %v2296, 2
    %v2309 = vrot.slane %v2297, 2
    %v2310 = vsel %vm1280, %v2308, %v2309
    %v2311 = vrot.slane %v2298, 2
    %v2312 = vsel %vm1280, %v2309, %v2311
    %v2313 = vrot.slane %v2299, 2
    %v2314 = vrot.slane %v2300, 2
    %v2315 = vsel %vm1280, %v2313, %v2314
    %v2316 = vrot.slane %v2301, 2
    %v2317 = vsel %vm1280, %v2314, %v2316
    %2318 = vrot.lane.b32.xlu0 %v2310, 124
    %v2319 = vpop.permute.xlu0 %2318
    %2320 = vrot.lane.b32.xlu0 %v2312, 124
    %v2321 = vpop.permute.xlu0 %2320
    %2322 = vrot.lane.b32.xlu0 %v2315, 124
    %v2323 = vpop.permute.xlu0 %2322
    %2324 = vrot.lane.b32.xlu0 %v2317, 124
    %v2325 = vpop.permute.xlu0 %2324
    %v2330 = vadd.f32 %v2290, %v2319
    %v2331 = vadd.f32 %v2291, %v2321
    %v2332 = vadd.f32 %v2292, %v2323
    %v2333 = vadd.f32 %v2293, %v2325
    %s2334 = sld [smem:[#allocation9 + $0x19]]
    %v2335 = vstv %s2334
    %v2336 = vmul.f32 %v2335, %v1217
    %v2337 = vmul.f32 %v2335, %v1218
    %v2338 = vmul.f32 %v2335, %v1219
    %v2339 = vmul.f32 %v2335, %v1220
    %v2340 = vmul.f32 %v2335, %v1221
    %v2341 = vmul.f32 %v2335, %v1222
    %v2348 = vrot.slane %v2336, 3
    %v2349 = vrot.slane %v2337, 3
    %v2350 = vsel %vm1313, %v2348, %v2349
    %v2351 = vrot.slane %v2338, 3
    %v2352 = vsel %vm1313, %v2349, %v2351
    %v2353 = vrot.slane %v2339, 3
    %v2354 = vrot.slane %v2340, 3
    %v2355 = vsel %vm1313, %v2353, %v2354
    %v2356 = vrot.slane %v2341, 3
    %v2357 = vsel %vm1313, %v2354, %v2356
    %2358 = vrot.lane.b32.xlu0 %v2350, 124
    %v2359 = vpop.permute.xlu0 %2358
    %2360 = vrot.lane.b32.xlu0 %v2352, 124
    %v2361 = vpop.permute.xlu0 %2360
    %2362 = vrot.lane.b32.xlu0 %v2355, 124
    %v2363 = vpop.permute.xlu0 %2362
    %2364 = vrot.lane.b32.xlu0 %v2357, 124
    %v2365 = vpop.permute.xlu0 %2364
    %v2370 = vadd.f32 %v2330, %v2359
    %v2371 = vadd.f32 %v2331, %v2361
    %v2372 = vadd.f32 %v2332, %v2363
    %v2373 = vadd.f32 %v2333, %v2365
    %s2374 = sld [smem:[#allocation9 + $0x20]]
    %v2375 = vstv %s2374
    %v2376 = vmul.f32 %v2375, %v1217
    %v2377 = vmul.f32 %v2375, %v1218
    %v2378 = vmul.f32 %v2375, %v1219
    %v2379 = vmul.f32 %v2375, %v1220
    %v2380 = vmul.f32 %v2375, %v1221
    %v2381 = vmul.f32 %v2375, %v1222
    %v2388 = vrot.slane %v2376, 4
    %v2389 = vrot.slane %v2377, 4
    %v2390 = vsel %vm1346, %v2388, %v2389
    %v2391 = vrot.slane %v2378, 4
    %v2392 = vsel %vm1346, %v2389, %v2391
    %v2393 = vrot.slane %v2379, 4
    %v2394 = vrot.slane %v2380, 4
    %v2395 = vsel %vm1346, %v2393, %v2394
    %v2396 = vrot.slane %v2381, 4
    %v2397 = vsel %vm1346, %v2394, %v2396
    %2398 = vrot.lane.b32.xlu0 %v2390, 124
    %v2399 = vpop.permute.xlu0 %2398
    %2400 = vrot.lane.b32.xlu0 %v2392, 124
    %v2401 = vpop.permute.xlu0 %2400
    %2402 = vrot.lane.b32.xlu0 %v2395, 124
    %v2403 = vpop.permute.xlu0 %2402
    %2404 = vrot.lane.b32.xlu0 %v2397, 124
    %v2405 = vpop.permute.xlu0 %2404
    %v2410 = vadd.f32 %v2370, %v2399
    %v2411 = vadd.f32 %v2371, %v2401
    %v2412 = vadd.f32 %v2372, %v2403
    %v2413 = vadd.f32 %v2373, %v2405
    %s2414 = sld [smem:[#allocation9 + $0x27]]
    %v2415 = vstv %s2414
    %v2416 = vmul.f32 %v2415, %v1217
    %v2417 = vmul.f32 %v2415, %v1218
    %v2418 = vmul.f32 %v2415, %v1219
    %v2419 = vmul.f32 %v2415, %v1220
    %v2420 = vmul.f32 %v2415, %v1221
    %v2421 = vmul.f32 %v2415, %v1222
    %v2428 = vrot.slane %v2416, 5
    %v2429 = vrot.slane %v2417, 5
    %v2430 = vsel %vm1379, %v2428, %v2429
    %v2431 = vrot.slane %v2418, 5
    %v2432 = vsel %vm1379, %v2429, %v2431
    %v2433 = vrot.slane %v2419, 5
    %v2434 = vrot.slane %v2420, 5
    %v2435 = vsel %vm1379, %v2433, %v2434
    %v2436 = vrot.slane %v2421, 5
    %v2437 = vsel %vm1379, %v2434, %v2436
    %2438 = vrot.lane.b32.xlu0 %v2430, 124
    %v2439 = vpop.permute.xlu0 %2438
    %2440 = vrot.lane.b32.xlu0 %v2432, 124
    %v2441 = vpop.permute.xlu0 %2440
    %2442 = vrot.lane.b32.xlu0 %v2435, 124
    %v2443 = vpop.permute.xlu0 %2442
    %2444 = vrot.lane.b32.xlu0 %v2437, 124
    %v2445 = vpop.permute.xlu0 %2444
    %v2450 = vadd.f32 %v2410, %v2439
    %v2451 = vadd.f32 %v2411, %v2441
    %v2452 = vadd.f32 %v2412, %v2443
    %v2453 = vadd.f32 %v2413, %v2445
    %s2454 = sld [smem:[#allocation9 + $0x2e]]
    %v2455 = vstv %s2454
    %v2456 = vmul.f32 %v2455, %v1217
    %v2457 = vmul.f32 %v2455, %v1218
    %v2458 = vmul.f32 %v2455, %v1219
    %v2459 = vmul.f32 %v2455, %v1220
    %v2460 = vmul.f32 %v2455, %v1221
    %v2461 = vmul.f32 %v2455, %v1222
    %v2468 = vrot.slane %v2456, 6
    %v2469 = vrot.slane %v2457, 6
    %v2470 = vsel %vm229, %v2468, %v2469
    %v2471 = vrot.slane %v2458, 6
    %v2472 = vsel %vm229, %v2469, %v2471
    %v2473 = vrot.slane %v2459, 6
    %v2474 = vrot.slane %v2460, 6
    %v2475 = vsel %vm229, %v2473, %v2474
    %v2476 = vrot.slane %v2461, 6
    %v2477 = vsel %vm229, %v2474, %v2476
    %2478 = vrot.lane.b32.xlu0 %v2470, 124
    %v2479 = vpop.permute.xlu0 %2478
    %2480 = vrot.lane.b32.xlu0 %v2472, 124
    %v2481 = vpop.permute.xlu0 %2480
    %2482 = vrot.lane.b32.xlu0 %v2475, 124
    %v2483 = vpop.permute.xlu0 %2482
    %2484 = vrot.lane.b32.xlu0 %v2477, 124
    %v2485 = vpop.permute.xlu0 %2484
    %v2490 = vadd.f32 %v2450, %v2479
    %v2491 = vadd.f32 %v2451, %v2481
    %v2492 = vadd.f32 %v2452, %v2483
    %v2493 = vadd.f32 %v2453, %v2485
    %s2494 = sld [smem:[#allocation9 + $0x5]]
    %v2495 = vstv %s2494
    %v2496 = vmul.f32 %v2495, %v1217
    %v2497 = vmul.f32 %v2495, %v1218
    %v2498 = vmul.f32 %v2495, %v1220
    %v2499 = vmul.f32 %v2495, %v1221
    %2504 = vrot.lane.b32.xlu0 %v2496, 123
    %v2505 = vpop.permute.xlu0 %2504
    %2506 = vrot.lane.b32.xlu0 %v2497, 123
    %v2507 = vpop.permute.xlu0 %2506
    %2508 = vrot.lane.b32.xlu0 %v2498, 123
    %v2509 = vpop.permute.xlu0 %2508
    %2510 = vrot.lane.b32.xlu0 %v2499, 123
    %v2511 = vpop.permute.xlu0 %2510
    %v2516 = vadd.f32 %v2490, %v2505
    %v2517 = vadd.f32 %v2491, %v2507
    %v2518 = vadd.f32 %v2492, %v2509
    %v2519 = vadd.f32 %v2493, %v2511
    %s2520 = sld [smem:[#allocation9 + $0xc]]
    %v2521 = vstv %s2520
    %v2522 = vmul.f32 %v2521, %v1217
    %v2523 = vmul.f32 %v2521, %v1218
    %v2524 = vmul.f32 %v2521, %v1219
    %v2525 = vmul.f32 %v2521, %v1220
    %v2526 = vmul.f32 %v2521, %v1221
    %v2527 = vmul.f32 %v2521, %v1222
    %v2534 = vrot.slane %v2522, 1
    %v2535 = vrot.slane %v2523, 1
    %v2536 = vsel %vm1247, %v2534, %v2535
    %v2537 = vrot.slane %v2524, 1
    %v2538 = vsel %vm1247, %v2535, %v2537
    %v2539 = vrot.slane %v2525, 1
    %v2540 = vrot.slane %v2526, 1
    %v2541 = vsel %vm1247, %v2539, %v2540
    %v2542 = vrot.slane %v2527, 1
    %v2543 = vsel %vm1247, %v2540, %v2542
    %2544 = vrot.lane.b32.xlu0 %v2536, 123
    %v2545 = vpop.permute.xlu0 %2544
    %2546 = vrot.lane.b32.xlu0 %v2538, 123
    %v2547 = vpop.permute.xlu0 %2546
    %2548 = vrot.lane.b32.xlu0 %v2541, 123
    %v2549 = vpop.permute.xlu0 %2548
    %2550 = vrot.lane.b32.xlu0 %v2543, 123
    %v2551 = vpop.permute.xlu0 %2550
    %v2556 = vadd.f32 %v2516, %v2545
    %v2557 = vadd.f32 %v2517, %v2547
    %v2558 = vadd.f32 %v2518, %v2549
    %v2559 = vadd.f32 %v2519, %v2551
    %s2560 = sld [smem:[#allocation9 + $0x13]]
    %v2561 = vstv %s2560
    %v2562 = vmul.f32 %v2561, %v1217
    %v2563 = vmul.f32 %v2561, %v1218
    %v2564 = vmul.f32 %v2561, %v1219
    %v2565 = vmul.f32 %v2561, %v1220
    %v2566 = vmul.f32 %v2561, %v1221
    %v2567 = vmul.f32 %v2561, %v1222
    %v2574 = vrot.slane %v2562, 2
    %v2575 = vrot.slane %v2563, 2
    %v2576 = vsel %vm1280, %v2574, %v2575
    %v2577 = vrot.slane %v2564, 2
    %v2578 = vsel %vm1280, %v2575, %v2577
    %v2579 = vrot.slane %v2565, 2
    %v2580 = vrot.slane %v2566, 2
    %v2581 = vsel %vm1280, %v2579, %v2580
    %v2582 = vrot.slane %v2567, 2
    %v2583 = vsel %vm1280, %v2580, %v2582
    %2584 = vrot.lane.b32.xlu0 %v2576, 123
    %v2585 = vpop.permute.xlu0 %2584
    %2586 = vrot.lane.b32.xlu0 %v2578, 123
    %v2587 = vpop.permute.xlu0 %2586
    %2588 = vrot.lane.b32.xlu0 %v2581, 123
    %v2589 = vpop.permute.xlu0 %2588
    %2590 = vrot.lane.b32.xlu0 %v2583, 123
    %v2591 = vpop.permute.xlu0 %2590
    %v2596 = vadd.f32 %v2556, %v2585
    %v2597 = vadd.f32 %v2557, %v2587
    %v2598 = vadd.f32 %v2558, %v2589
    %v2599 = vadd.f32 %v2559, %v2591
    %s2600 = sld [smem:[#allocation9 + $0x1a]]
    %v2601 = vstv %s2600
    %v2602 = vmul.f32 %v2601, %v1217
    %v2603 = vmul.f32 %v2601, %v1218
    %v2604 = vmul.f32 %v2601, %v1219
    %v2605 = vmul.f32 %v2601, %v1220
    %v2606 = vmul.f32 %v2601, %v1221
    %v2607 = vmul.f32 %v2601, %v1222
    %v2614 = vrot.slane %v2602, 3
    %v2615 = vrot.slane %v2603, 3
    %v2616 = vsel %vm1313, %v2614, %v2615
    %v2617 = vrot.slane %v2604, 3
    %v2618 = vsel %vm1313, %v2615, %v2617
    %v2619 = vrot.slane %v2605, 3
    %v2620 = vrot.slane %v2606, 3
    %v2621 = vsel %vm1313, %v2619, %v2620
    %v2622 = vrot.slane %v2607, 3
    %v2623 = vsel %vm1313, %v2620, %v2622
    %2624 = vrot.lane.b32.xlu0 %v2616, 123
    %v2625 = vpop.permute.xlu0 %2624
    %2626 = vrot.lane.b32.xlu0 %v2618, 123
    %v2627 = vpop.permute.xlu0 %2626
    %2628 = vrot.lane.b32.xlu0 %v2621, 123
    %v2629 = vpop.permute.xlu0 %2628
    %2630 = vrot.lane.b32.xlu0 %v2623, 123
    %v2631 = vpop.permute.xlu0 %2630
    %v2636 = vadd.f32 %v2596, %v2625
    %v2637 = vadd.f32 %v2597, %v2627
    %v2638 = vadd.f32 %v2598, %v2629
    %v2639 = vadd.f32 %v2599, %v2631
    %s2640 = sld [smem:[#allocation9 + $0x21]]
    %v2641 = vstv %s2640
    %v2642 = vmul.f32 %v2641, %v1217
    %v2643 = vmul.f32 %v2641, %v1218
    %v2644 = vmul.f32 %v2641, %v1219
    %v2645 = vmul.f32 %v2641, %v1220
    %v2646 = vmul.f32 %v2641, %v1221
    %v2647 = vmul.f32 %v2641, %v1222
    %v2654 = vrot.slane %v2642, 4
    %v2655 = vrot.slane %v2643, 4
    %v2656 = vsel %vm1346, %v2654, %v2655
    %v2657 = vrot.slane %v2644, 4
    %v2658 = vsel %vm1346, %v2655, %v2657
    %v2659 = vrot.slane %v2645, 4
    %v2660 = vrot.slane %v2646, 4
    %v2661 = vsel %vm1346, %v2659, %v2660
    %v2662 = vrot.slane %v2647, 4
    %v2663 = vsel %vm1346, %v2660, %v2662
    %2664 = vrot.lane.b32.xlu0 %v2656, 123
    %v2665 = vpop.permute.xlu0 %2664
    %2666 = vrot.lane.b32.xlu0 %v2658, 123
    %v2667 = vpop.permute.xlu0 %2666
    %2668 = vrot.lane.b32.xlu0 %v2661, 123
    %v2669 = vpop.permute.xlu0 %2668
    %2670 = vrot.lane.b32.xlu0 %v2663, 123
    %v2671 = vpop.permute.xlu0 %2670
    %v2676 = vadd.f32 %v2636, %v2665
    %v2677 = vadd.f32 %v2637, %v2667
    %v2678 = vadd.f32 %v2638, %v2669
    %v2679 = vadd.f32 %v2639, %v2671
    %s2680 = sld [smem:[#allocation9 + $0x28]]
    %v2681 = vstv %s2680
    %v2682 = vmul.f32 %v2681, %v1217
    %v2683 = vmul.f32 %v2681, %v1218
    %v2684 = vmul.f32 %v2681, %v1219
    %v2685 = vmul.f32 %v2681, %v1220
    %v2686 = vmul.f32 %v2681, %v1221
    %v2687 = vmul.f32 %v2681, %v1222
    %v2694 = vrot.slane %v2682, 5
    %v2695 = vrot.slane %v2683, 5
    %v2696 = vsel %vm1379, %v2694, %v2695
    %v2697 = vrot.slane %v2684, 5
    %v2698 = vsel %vm1379, %v2695, %v2697
    %v2699 = vrot.slane %v2685, 5
    %v2700 = vrot.slane %v2686, 5
    %v2701 = vsel %vm1379, %v2699, %v2700
    %v2702 = vrot.slane %v2687, 5
    %v2703 = vsel %vm1379, %v2700, %v2702
    %2704 = vrot.lane.b32.xlu0 %v2696, 123
    %v2705 = vpop.permute.xlu0 %2704
    %2706 = vrot.lane.b32.xlu0 %v2698, 123
    %v2707 = vpop.permute.xlu0 %2706
    %2708 = vrot.lane.b32.xlu0 %v2701, 123
    %v2709 = vpop.permute.xlu0 %2708
    %2710 = vrot.lane.b32.xlu0 %v2703, 123
    %v2711 = vpop.permute.xlu0 %2710
    %v2716 = vadd.f32 %v2676, %v2705
    %v2717 = vadd.f32 %v2677, %v2707
    %v2718 = vadd.f32 %v2678, %v2709
    %v2719 = vadd.f32 %v2679, %v2711
    %s2720 = sld [smem:[#allocation9 + $0x2f]]
    %v2721 = vstv %s2720
    %v2722 = vmul.f32 %v2721, %v1217
    %v2723 = vmul.f32 %v2721, %v1218
    %v2724 = vmul.f32 %v2721, %v1219
    %v2725 = vmul.f32 %v2721, %v1220
    %v2726 = vmul.f32 %v2721, %v1221
    %v2727 = vmul.f32 %v2721, %v1222
    %v2734 = vrot.slane %v2722, 6
    %v2735 = vrot.slane %v2723, 6
    %v2736 = vsel %vm229, %v2734, %v2735
    %v2737 = vrot.slane %v2724, 6
    %v2738 = vsel %vm229, %v2735, %v2737
    %v2739 = vrot.slane %v2725, 6
    %v2740 = vrot.slane %v2726, 6
    %v2741 = vsel %vm229, %v2739, %v2740
    %v2742 = vrot.slane %v2727, 6
    %v2743 = vsel %vm229, %v2740, %v2742
    %2744 = vrot.lane.b32.xlu0 %v2736, 123
    %v2745 = vpop.permute.xlu0 %2744
    %2746 = vrot.lane.b32.xlu0 %v2738, 123
    %v2747 = vpop.permute.xlu0 %2746
    %2748 = vrot.lane.b32.xlu0 %v2741, 123
    %v2749 = vpop.permute.xlu0 %2748
    %2750 = vrot.lane.b32.xlu0 %v2743, 123
    %v2751 = vpop.permute.xlu0 %2750
    %v2756 = vadd.f32 %v2716, %v2745
    %v2757 = vadd.f32 %v2717, %v2747
    %v2758 = vadd.f32 %v2718, %v2749
    %v2759 = vadd.f32 %v2719, %v2751
    %s2760 = sld [smem:[#allocation9 + $0x6]]
    %v2761 = vstv %s2760
    %v2762 = vmul.f32 %v2761, %v1217
    %v2763 = vmul.f32 %v2761, %v1218
    %v2764 = vmul.f32 %v2761, %v1220
    %v2765 = vmul.f32 %v2761, %v1221
    %2770 = vrot.lane.b32.xlu0 %v2762, 122
    %v2771 = vpop.permute.xlu0 %2770
    %2772 = vrot.lane.b32.xlu0 %v2763, 122
    %v2773 = vpop.permute.xlu0 %2772
    %2774 = vrot.lane.b32.xlu0 %v2764, 122
    %v2775 = vpop.permute.xlu0 %2774
    %2776 = vrot.lane.b32.xlu0 %v2765, 122
    %v2777 = vpop.permute.xlu0 %2776
    %v2782 = vadd.f32 %v2756, %v2771
    %v2783 = vadd.f32 %v2757, %v2773
    %v2784 = vadd.f32 %v2758, %v2775
    %v2785 = vadd.f32 %v2759, %v2777
    %s2786 = sld [smem:[#allocation9 + $0xd]]
    %v2787 = vstv %s2786
    %v2788 = vmul.f32 %v2787, %v1217
    %v2789 = vmul.f32 %v2787, %v1218
    %v2790 = vmul.f32 %v2787, %v1219
    %v2791 = vmul.f32 %v2787, %v1220
    %v2792 = vmul.f32 %v2787, %v1221
    %v2793 = vmul.f32 %v2787, %v1222
    %v2800 = vrot.slane %v2788, 1
    %v2801 = vrot.slane %v2789, 1
    %v2802 = vsel %vm1247, %v2800, %v2801
    %v2803 = vrot.slane %v2790, 1
    %v2804 = vsel %vm1247, %v2801, %v2803
    %v2805 = vrot.slane %v2791, 1
    %v2806 = vrot.slane %v2792, 1
    %v2807 = vsel %vm1247, %v2805, %v2806
    %v2808 = vrot.slane %v2793, 1
    %v2809 = vsel %vm1247, %v2806, %v2808
    %2810 = vrot.lane.b32.xlu0 %v2802, 122
    %v2811 = vpop.permute.xlu0 %2810
    %2812 = vrot.lane.b32.xlu0 %v2804, 122
    %v2813 = vpop.permute.xlu0 %2812
    %2814 = vrot.lane.b32.xlu0 %v2807, 122
    %v2815 = vpop.permute.xlu0 %2814
    %2816 = vrot.lane.b32.xlu0 %v2809, 122
    %v2817 = vpop.permute.xlu0 %2816
    %v2822 = vadd.f32 %v2782, %v2811
    %v2823 = vadd.f32 %v2783, %v2813
    %v2824 = vadd.f32 %v2784, %v2815
    %v2825 = vadd.f32 %v2785, %v2817
    %s2826 = sld [smem:[#allocation9 + $0x14]]
    %v2827 = vstv %s2826
    %v2828 = vmul.f32 %v2827, %v1217
    %v2829 = vmul.f32 %v2827, %v1218
    %v2830 = vmul.f32 %v2827, %v1219
    %v2831 = vmul.f32 %v2827, %v1220
    %v2832 = vmul.f32 %v2827, %v1221
    %v2833 = vmul.f32 %v2827, %v1222
    %v2840 = vrot.slane %v2828, 2
    %v2841 = vrot.slane %v2829, 2
    %v2842 = vsel %vm1280, %v2840, %v2841
    %v2843 = vrot.slane %v2830, 2
    %v2844 = vsel %vm1280, %v2841, %v2843
    %v2845 = vrot.slane %v2831, 2
    %v2846 = vrot.slane %v2832, 2
    %v2847 = vsel %vm1280, %v2845, %v2846
    %v2848 = vrot.slane %v2833, 2
    %v2849 = vsel %vm1280, %v2846, %v2848
    %2850 = vrot.lane.b32.xlu0 %v2842, 122
    %v2851 = vpop.permute.xlu0 %2850
    %2852 = vrot.lane.b32.xlu0 %v2844, 122
    %v2853 = vpop.permute.xlu0 %2852
    %2854 = vrot.lane.b32.xlu0 %v2847, 122
    %v2855 = vpop.permute.xlu0 %2854
    %2856 = vrot.lane.b32.xlu0 %v2849, 122
    %v2857 = vpop.permute.xlu0 %2856
    %v2862 = vadd.f32 %v2822, %v2851
    %v2863 = vadd.f32 %v2823, %v2853
    %v2864 = vadd.f32 %v2824, %v2855
    %v2865 = vadd.f32 %v2825, %v2857
    %s2866 = sld [smem:[#allocation9 + $0x1b]]
    %v2867 = vstv %s2866
    %v2868 = vmul.f32 %v2867, %v1217
    %v2869 = vmul.f32 %v2867, %v1218
    %v2870 = vmul.f32 %v2867, %v1219
    %v2871 = vmul.f32 %v2867, %v1220
    %v2872 = vmul.f32 %v2867, %v1221
    %v2873 = vmul.f32 %v2867, %v1222
    %v2880 = vrot.slane %v2868, 3
    %v2881 = vrot.slane %v2869, 3
    %v2882 = vsel %vm1313, %v2880, %v2881
    %v2883 = vrot.slane %v2870, 3
    %v2884 = vsel %vm1313, %v2881, %v2883
    %v2885 = vrot.slane %v2871, 3
    %v2886 = vrot.slane %v2872, 3
    %v2887 = vsel %vm1313, %v2885, %v2886
    %v2888 = vrot.slane %v2873, 3
    %v2889 = vsel %vm1313, %v2886, %v2888
    %2890 = vrot.lane.b32.xlu0 %v2882, 122
    %v2891 = vpop.permute.xlu0 %2890
    %2892 = vrot.lane.b32.xlu0 %v2884, 122
    %v2893 = vpop.permute.xlu0 %2892
    %2894 = vrot.lane.b32.xlu0 %v2887, 122
    %v2895 = vpop.permute.xlu0 %2894
    %2896 = vrot.lane.b32.xlu0 %v2889, 122
    %v2897 = vpop.permute.xlu0 %2896
    %v2902 = vadd.f32 %v2862, %v2891
    %v2903 = vadd.f32 %v2863, %v2893
    %v2904 = vadd.f32 %v2864, %v2895
    %v2905 = vadd.f32 %v2865, %v2897
    %s2906 = sld [smem:[#allocation9 + $0x22]]
    %v2907 = vstv %s2906
    %v2908 = vmul.f32 %v2907, %v1217
    %v2909 = vmul.f32 %v2907, %v1218
    %v2910 = vmul.f32 %v2907, %v1219
    %v2911 = vmul.f32 %v2907, %v1220
    %v2912 = vmul.f32 %v2907, %v1221
    %v2913 = vmul.f32 %v2907, %v1222
    %v2920 = vrot.slane %v2908, 4
    %v2921 = vrot.slane %v2909, 4
    %v2922 = vsel %vm1346, %v2920, %v2921
    %v2923 = vrot.slane %v2910, 4
    %v2924 = vsel %vm1346, %v2921, %v2923
    %v2925 = vrot.slane %v2911, 4
    %v2926 = vrot.slane %v2912, 4
    %v2927 = vsel %vm1346, %v2925, %v2926
    %v2928 = vrot.slane %v2913, 4
    %v2929 = vsel %vm1346, %v2926, %v2928
    %2930 = vrot.lane.b32.xlu0 %v2922, 122
    %v2931 = vpop.permute.xlu0 %2930
    %2932 = vrot.lane.b32.xlu0 %v2924, 122
    %v2933 = vpop.permute.xlu0 %2932
    %2934 = vrot.lane.b32.xlu0 %v2927, 122
    %v2935 = vpop.permute.xlu0 %2934
    %2936 = vrot.lane.b32.xlu0 %v2929, 122
    %v2937 = vpop.permute.xlu0 %2936
    %v2942 = vadd.f32 %v2902, %v2931
    %v2943 = vadd.f32 %v2903, %v2933
    %v2944 = vadd.f32 %v2904, %v2935
    %v2945 = vadd.f32 %v2905, %v2937
    %s2946 = sld [smem:[#allocation9 + $0x29]]
    %v2947 = vstv %s2946
    %v2948 = vmul.f32 %v2947, %v1217
    %v2949 = vmul.f32 %v2947, %v1218
    %v2950 = vmul.f32 %v2947, %v1219
    %v2951 = vmul.f32 %v2947, %v1220
    %v2952 = vmul.f32 %v2947, %v1221
    %v2953 = vmul.f32 %v2947, %v1222
    %v2960 = vrot.slane %v2948, 5
    %v2961 = vrot.slane %v2949, 5
    %v2962 = vsel %vm1379, %v2960, %v2961
    %v2963 = vrot.slane %v2950, 5
    %v2964 = vsel %vm1379, %v2961, %v2963
    %v2965 = vrot.slane %v2951, 5
    %v2966 = vrot.slane %v2952, 5
    %v2967 = vsel %vm1379, %v2965, %v2966
    %v2968 = vrot.slane %v2953, 5
    %v2969 = vsel %vm1379, %v2966, %v2968
    %2970 = vrot.lane.b32.xlu0 %v2962, 122
    %v2971 = vpop.permute.xlu0 %2970
    %2972 = vrot.lane.b32.xlu0 %v2964, 122
    %v2973 = vpop.permute.xlu0 %2972
    %2974 = vrot.lane.b32.xlu0 %v2967, 122
    %v2975 = vpop.permute.xlu0 %2974
    %2976 = vrot.lane.b32.xlu0 %v2969, 122
    %v2977 = vpop.permute.xlu0 %2976
    %v2982 = vadd.f32 %v2942, %v2971
    %v2983 = vadd.f32 %v2943, %v2973
    %v2984 = vadd.f32 %v2944, %v2975
    %v2985 = vadd.f32 %v2945, %v2977
    %s2986 = sld [smem:[#allocation9 + $0x30]]
    %v2987 = vstv %s2986
    %v2988 = vmul.f32 %v2987, %v1217
    %v2989 = vmul.f32 %v2987, %v1218
    %v2990 = vmul.f32 %v2987, %v1219
    %v2991 = vmul.f32 %v2987, %v1220
    %v2992 = vmul.f32 %v2987, %v1221
    %v2993 = vmul.f32 %v2987, %v1222
    %v3000 = vrot.slane %v2988, 6
    %v3001 = vrot.slane %v2989, 6
    %v3002 = vsel %vm229, %v3000, %v3001
    %v3003 = vrot.slane %v2990, 6
    %v3004 = vsel %vm229, %v3001, %v3003
    %v3005 = vrot.slane %v2991, 6
    %v3006 = vrot.slane %v2992, 6
    %v3007 = vsel %vm229, %v3005, %v3006
    %v3008 = vrot.slane %v2993, 6
    %v3009 = vsel %vm229, %v3006, %v3008
    %3010 = vrot.lane.b32.xlu0 %v3002, 122
    %v3011 = vpop.permute.xlu0 %3010
    %3012 = vrot.lane.b32.xlu0 %v3004, 122
    %v3013 = vpop.permute.xlu0 %3012
    %3014 = vrot.lane.b32.xlu0 %v3007, 122
    %v3015 = vpop.permute.xlu0 %3014
    %3016 = vrot.lane.b32.xlu0 %v3009, 122
    %v3017 = vpop.permute.xlu0 %3016
    %v3022 = vadd.f32 %v2982, %v3011
    %v3023 = vadd.f32 %v2983, %v3013
    %v3024 = vadd.f32 %v2984, %v3015
    %v3025 = vadd.f32 %v2985, %v3017
    %s3026 = scalar_lea.vmem [#allocation2], 48
    %v3027 = vld [vmem:[%s3026] sm:$0xff]
    %v3028 = vld [vmem:[%s3026 + $0x8] sm:$0xff]
    %v3029 = vld [vmem:[%s3026 + $0x10] sm:$0xff]
    %v3030 = vld [vmem:[%s3026 + $0x18] sm:$0xff]
    %v3031 = vld [vmem:[%s3026 + $0x20] sm:$0xff]
    %v3032 = vld [vmem:[%s3026 + $0x28] sm:$0xff]
    %s3033 = sld [smem:[#allocation9 + $0x31]]
    %v3034 = vstv %s3033
    %v3035 = vmul.f32 %v3034, %v3027
    %v3036 = vmul.f32 %v3034, %v3028
    %v3037 = vmul.f32 %v3034, %v3030
    %v3038 = vmul.f32 %v3034, %v3031
    %v3039 = vadd.f32 %v3022, %v3035
    %v3040 = vadd.f32 %v3023, %v3036
    %v3041 = vadd.f32 %v3024, %v3037
    %v3042 = vadd.f32 %v3025, %v3038
    %s3043 = sld [smem:[#allocation9 + $0x38]]
    %v3044 = vstv %s3043
    %v3045 = vmul.f32 %v3044, %v3027
    %v3046 = vmul.f32 %v3044, %v3028
    %v3047 = vmul.f32 %v3044, %v3029
    %v3048 = vmul.f32 %v3044, %v3030
    %v3049 = vmul.f32 %v3044, %v3031
    %v3050 = vmul.f32 %v3044, %v3032
    %v3057 = vrot.slane %v3045, 1
    %v3058 = vrot.slane %v3046, 1
    %v3059 = vsel %vm1247, %v3057, %v3058
    %v3060 = vrot.slane %v3047, 1
    %v3061 = vsel %vm1247, %v3058, %v3060
    %v3062 = vrot.slane %v3048, 1
    %v3063 = vrot.slane %v3049, 1
    %v3064 = vsel %vm1247, %v3062, %v3063
    %v3065 = vrot.slane %v3050, 1
    %v3066 = vsel %vm1247, %v3063, %v3065
    %v3071 = vadd.f32 %v3039, %v3059
    %v3072 = vadd.f32 %v3040, %v3061
    %v3073 = vadd.f32 %v3041, %v3064
    %v3074 = vadd.f32 %v3042, %v3066
    %s3075 = sld [smem:[#allocation9 + $0x3f]]
    %v3076 = vstv %s3075
    %v3077 = vmul.f32 %v3076, %v3027
    %v3078 = vmul.f32 %v3076, %v3028
    %v3079 = vmul.f32 %v3076, %v3029
    %v3080 = vmul.f32 %v3076, %v3030
    %v3081 = vmul.f32 %v3076, %v3031
    %v3082 = vmul.f32 %v3076, %v3032
    %v3089 = vrot.slane %v3077, 2
    %v3090 = vrot.slane %v3078, 2
    %v3091 = vsel %vm1280, %v3089, %v3090
    %v3092 = vrot.slane %v3079, 2
    %v3093 = vsel %vm1280, %v3090, %v3092
    %v3094 = vrot.slane %v3080, 2
    %v3095 = vrot.slane %v3081, 2
    %v3096 = vsel %vm1280, %v3094, %v3095
    %v3097 = vrot.slane %v3082, 2
    %v3098 = vsel %vm1280, %v3095, %v3097
    %v3103 = vadd.f32 %v3071, %v3091
    %v3104 = vadd.f32 %v3072, %v3093
    %v3105 = vadd.f32 %v3073, %v3096
    %v3106 = vadd.f32 %v3074, %v3098
    %s3107 = sld [smem:[#allocation9 + $0x46]]
    %v3108 = vstv %s3107
    %v3109 = vmul.f32 %v3108, %v3027
    %v3110 = vmul.f32 %v3108, %v3028
    %v3111 = vmul.f32 %v3108, %v3029
    %v3112 = vmul.f32 %v3108, %v3030
    %v3113 = vmul.f32 %v3108, %v3031
    %v3114 = vmul.f32 %v3108, %v3032
    %v3121 = vrot.slane %v3109, 3
    %v3122 = vrot.slane %v3110, 3
    %v3123 = vsel %vm1313, %v3121, %v3122
    %v3124 = vrot.slane %v3111, 3
    %v3125 = vsel %vm1313, %v3122, %v3124
    %v3126 = vrot.slane %v3112, 3
    %v3127 = vrot.slane %v3113, 3
    %v3128 = vsel %vm1313, %v3126, %v3127
    %v3129 = vrot.slane %v3114, 3
    %v3130 = vsel %vm1313, %v3127, %v3129
    %v3135 = vadd.f32 %v3103, %v3123
    %v3136 = vadd.f32 %v3104, %v3125
    %v3137 = vadd.f32 %v3105, %v3128
    %v3138 = vadd.f32 %v3106, %v3130
    %s3139 = sld [smem:[#allocation9 + $0x4d]]
    %v3140 = vstv %s3139
    %v3141 = vmul.f32 %v3140, %v3027
    %v3142 = vmul.f32 %v3140, %v3028
    %v3143 = vmul.f32 %v3140, %v3029
    %v3144 = vmul.f32 %v3140, %v3030
    %v3145 = vmul.f32 %v3140, %v3031
    %v3146 = vmul.f32 %v3140, %v3032
    %v3153 = vrot.slane %v3141, 4
    %v3154 = vrot.slane %v3142, 4
    %v3155 = vsel %vm1346, %v3153, %v3154
    %v3156 = vrot.slane %v3143, 4
    %v3157 = vsel %vm1346, %v3154, %v3156
    %v3158 = vrot.slane %v3144, 4
    %v3159 = vrot.slane %v3145, 4
    %v3160 = vsel %vm1346, %v3158, %v3159
    %v3161 = vrot.slane %v3146, 4
    %v3162 = vsel %vm1346, %v3159, %v3161
    %v3167 = vadd.f32 %v3135, %v3155
    %v3168 = vadd.f32 %v3136, %v3157
    %v3169 = vadd.f32 %v3137, %v3160
    %v3170 = vadd.f32 %v3138, %v3162
    %s3171 = sld [smem:[#allocation9 + $0x54]]
    %v3172 = vstv %s3171
    %v3173 = vmul.f32 %v3172, %v3027
    %v3174 = vmul.f32 %v3172, %v3028
    %v3175 = vmul.f32 %v3172, %v3029
    %v3176 = vmul.f32 %v3172, %v3030
    %v3177 = vmul.f32 %v3172, %v3031
    %v3178 = vmul.f32 %v3172, %v3032
    %v3185 = vrot.slane %v3173, 5
    %v3186 = vrot.slane %v3174, 5
    %v3187 = vsel %vm1379, %v3185, %v3186
    %v3188 = vrot.slane %v3175, 5
    %v3189 = vsel %vm1379, %v3186, %v3188
    %v3190 = vrot.slane %v3176, 5
    %v3191 = vrot.slane %v3177, 5
    %v3192 = vsel %vm1379, %v3190, %v3191
    %v3193 = vrot.slane %v3178, 5
    %v3194 = vsel %vm1379, %v3191, %v3193
    %v3199 = vadd.f32 %v3167, %v3187
    %v3200 = vadd.f32 %v3168, %v3189
    %v3201 = vadd.f32 %v3169, %v3192
    %v3202 = vadd.f32 %v3170, %v3194
    %s3203 = sld [smem:[#allocation9 + $0x5b]]
    %v3204 = vstv %s3203
    %v3205 = vmul.f32 %v3204, %v3027
    %v3206 = vmul.f32 %v3204, %v3028
    %v3207 = vmul.f32 %v3204, %v3029
    %v3208 = vmul.f32 %v3204, %v3030
    %v3209 = vmul.f32 %v3204, %v3031
    %v3210 = vmul.f32 %v3204, %v3032
    %v3217 = vrot.slane %v3205, 6
    %v3218 = vrot.slane %v3206, 6
    %v3219 = vsel %vm229, %v3217, %v3218
    %v3220 = vrot.slane %v3207, 6
    %v3221 = vsel %vm229, %v3218, %v3220
    %v3222 = vrot.slane %v3208, 6
    %v3223 = vrot.slane %v3209, 6
    %v3224 = vsel %vm229, %v3222, %v3223
    %v3225 = vrot.slane %v3210, 6
    %v3226 = vsel %vm229, %v3223, %v3225
    %v3231 = vadd.f32 %v3199, %v3219
    %v3232 = vadd.f32 %v3200, %v3221
    %v3233 = vadd.f32 %v3201, %v3224
    %v3234 = vadd.f32 %v3202, %v3226
    %s3235 = sld [smem:[#allocation9 + $0x32]]
    %v3236 = vstv %s3235
    %v3237 = vmul.f32 %v3236, %v3027
    %v3238 = vmul.f32 %v3236, %v3028
    %v3239 = vmul.f32 %v3236, %v3030
    %v3240 = vmul.f32 %v3236, %v3031
    %3245 = vrot.lane.b32.xlu0 %v3237, 127
    %v3246 = vpop.permute.xlu0 %3245
    %3247 = vrot.lane.b32.xlu0 %v3238, 127
    %v3248 = vpop.permute.xlu0 %3247
    %3249 = vrot.lane.b32.xlu0 %v3239, 127
    %v3250 = vpop.permute.xlu0 %3249
    %3251 = vrot.lane.b32.xlu0 %v3240, 127
    %v3252 = vpop.permute.xlu0 %3251
    %v3257 = vadd.f32 %v3231, %v3246
    %v3258 = vadd.f32 %v3232, %v3248
    %v3259 = vadd.f32 %v3233, %v3250
    %v3260 = vadd.f32 %v3234, %v3252
    %s3261 = sld [smem:[#allocation9 + $0x39]]
    %v3262 = vstv %s3261
    %v3263 = vmul.f32 %v3262, %v3027
    %v3264 = vmul.f32 %v3262, %v3028
    %v3265 = vmul.f32 %v3262, %v3029
    %v3266 = vmul.f32 %v3262, %v3030
    %v3267 = vmul.f32 %v3262, %v3031
    %v3268 = vmul.f32 %v3262, %v3032
    %v3275 = vrot.slane %v3263, 1
    %v3276 = vrot.slane %v3264, 1
    %v3277 = vsel %vm1247, %v3275, %v3276
    %v3278 = vrot.slane %v3265, 1
    %v3279 = vsel %vm1247, %v3276, %v3278
    %v3280 = vrot.slane %v3266, 1
    %v3281 = vrot.slane %v3267, 1
    %v3282 = vsel %vm1247, %v3280, %v3281
    %v3283 = vrot.slane %v3268, 1
    %v3284 = vsel %vm1247, %v3281, %v3283
    %3285 = vrot.lane.b32.xlu0 %v3277, 127
    %v3286 = vpop.permute.xlu0 %3285
    %3287 = vrot.lane.b32.xlu0 %v3279, 127
    %v3288 = vpop.permute.xlu0 %3287
    %3289 = vrot.lane.b32.xlu0 %v3282, 127
    %v3290 = vpop.permute.xlu0 %3289
    %3291 = vrot.lane.b32.xlu0 %v3284, 127
    %v3292 = vpop.permute.xlu0 %3291
    %v3297 = vadd.f32 %v3257, %v3286
    %v3298 = vadd.f32 %v3258, %v3288
    %v3299 = vadd.f32 %v3259, %v3290
    %v3300 = vadd.f32 %v3260, %v3292
    %s3301 = sld [smem:[#allocation9 + $0x40]]
    %v3302 = vstv %s3301
    %v3303 = vmul.f32 %v3302, %v3027
    %v3304 = vmul.f32 %v3302, %v3028
    %v3305 = vmul.f32 %v3302, %v3029
    %v3306 = vmul.f32 %v3302, %v3030
    %v3307 = vmul.f32 %v3302, %v3031
    %v3308 = vmul.f32 %v3302, %v3032
    %v3315 = vrot.slane %v3303, 2
    %v3316 = vrot.slane %v3304, 2
    %v3317 = vsel %vm1280, %v3315, %v3316
    %v3318 = vrot.slane %v3305, 2
    %v3319 = vsel %vm1280, %v3316, %v3318
    %v3320 = vrot.slane %v3306, 2
    %v3321 = vrot.slane %v3307, 2
    %v3322 = vsel %vm1280, %v3320, %v3321
    %v3323 = vrot.slane %v3308, 2
    %v3324 = vsel %vm1280, %v3321, %v3323
    %3325 = vrot.lane.b32.xlu0 %v3317, 127
    %v3326 = vpop.permute.xlu0 %3325
    %3327 = vrot.lane.b32.xlu0 %v3319, 127
    %v3328 = vpop.permute.xlu0 %3327
    %3329 = vrot.lane.b32.xlu0 %v3322, 127
    %v3330 = vpop.permute.xlu0 %3329
    %3331 = vrot.lane.b32.xlu0 %v3324, 127
    %v3332 = vpop.permute.xlu0 %3331
    %v3337 = vadd.f32 %v3297, %v3326
    %v3338 = vadd.f32 %v3298, %v3328
    %v3339 = vadd.f32 %v3299, %v3330
    %v3340 = vadd.f32 %v3300, %v3332
    %s3341 = sld [smem:[#allocation9 + $0x47]]
    %v3342 = vstv %s3341
    %v3343 = vmul.f32 %v3342, %v3027
    %v3344 = vmul.f32 %v3342, %v3028
    %v3345 = vmul.f32 %v3342, %v3029
    %v3346 = vmul.f32 %v3342, %v3030
    %v3347 = vmul.f32 %v3342, %v3031
    %v3348 = vmul.f32 %v3342, %v3032
    %v3355 = vrot.slane %v3343, 3
    %v3356 = vrot.slane %v3344, 3
    %v3357 = vsel %vm1313, %v3355, %v3356
    %v3358 = vrot.slane %v3345, 3
    %v3359 = vsel %vm1313, %v3356, %v3358
    %v3360 = vrot.slane %v3346, 3
    %v3361 = vrot.slane %v3347, 3
    %v3362 = vsel %vm1313, %v3360, %v3361
    %v3363 = vrot.slane %v3348, 3
    %v3364 = vsel %vm1313, %v3361, %v3363
    %3365 = vrot.lane.b32.xlu0 %v3357, 127
    %v3366 = vpop.permute.xlu0 %3365
    %3367 = vrot.lane.b32.xlu0 %v3359, 127
    %v3368 = vpop.permute.xlu0 %3367
    %3369 = vrot.lane.b32.xlu0 %v3362, 127
    %v3370 = vpop.permute.xlu0 %3369
    %3371 = vrot.lane.b32.xlu0 %v3364, 127
    %v3372 = vpop.permute.xlu0 %3371
    %v3377 = vadd.f32 %v3337, %v3366
    %v3378 = vadd.f32 %v3338, %v3368
    %v3379 = vadd.f32 %v3339, %v3370
    %v3380 = vadd.f32 %v3340, %v3372
    %s3381 = sld [smem:[#allocation9 + $0x4e]]
    %v3382 = vstv %s3381
    %v3383 = vmul.f32 %v3382, %v3027
    %v3384 = vmul.f32 %v3382, %v3028
    %v3385 = vmul.f32 %v3382, %v3029
    %v3386 = vmul.f32 %v3382, %v3030
    %v3387 = vmul.f32 %v3382, %v3031
    %v3388 = vmul.f32 %v3382, %v3032
    %v3395 = vrot.slane %v3383, 4
    %v3396 = vrot.slane %v3384, 4
    %v3397 = vsel %vm1346, %v3395, %v3396
    %v3398 = vrot.slane %v3385, 4
    %v3399 = vsel %vm1346, %v3396, %v3398
    %v3400 = vrot.slane %v3386, 4
    %v3401 = vrot.slane %v3387, 4
    %v3402 = vsel %vm1346, %v3400, %v3401
    %v3403 = vrot.slane %v3388, 4
    %v3404 = vsel %vm1346, %v3401, %v3403
    %3405 = vrot.lane.b32.xlu0 %v3397, 127
    %v3406 = vpop.permute.xlu0 %3405
    %3407 = vrot.lane.b32.xlu0 %v3399, 127
    %v3408 = vpop.permute.xlu0 %3407
    %3409 = vrot.lane.b32.xlu0 %v3402, 127
    %v3410 = vpop.permute.xlu0 %3409
    %3411 = vrot.lane.b32.xlu0 %v3404, 127
    %v3412 = vpop.permute.xlu0 %3411
    %v3417 = vadd.f32 %v3377, %v3406
    %v3418 = vadd.f32 %v3378, %v3408
    %v3419 = vadd.f32 %v3379, %v3410
    %v3420 = vadd.f32 %v3380, %v3412
    %s3421 = sld [smem:[#allocation9 + $0x55]]
    %v3422 = vstv %s3421
    %v3423 = vmul.f32 %v3422, %v3027
    %v3424 = vmul.f32 %v3422, %v3028
    %v3425 = vmul.f32 %v3422, %v3029
    %v3426 = vmul.f32 %v3422, %v3030
    %v3427 = vmul.f32 %v3422, %v3031
    %v3428 = vmul.f32 %v3422, %v3032
    %v3435 = vrot.slane %v3423, 5
    %v3436 = vrot.slane %v3424, 5
    %v3437 = vsel %vm1379, %v3435, %v3436
    %v3438 = vrot.slane %v3425, 5
    %v3439 = vsel %vm1379, %v3436, %v3438
    %v3440 = vrot.slane %v3426, 5
    %v3441 = vrot.slane %v3427, 5
    %v3442 = vsel %vm1379, %v3440, %v3441
    %v3443 = vrot.slane %v3428, 5
    %v3444 = vsel %vm1379, %v3441, %v3443
    %3445 = vrot.lane.b32.xlu0 %v3437, 127
    %v3446 = vpop.permute.xlu0 %3445
    %3447 = vrot.lane.b32.xlu0 %v3439, 127
    %v3448 = vpop.permute.xlu0 %3447
    %3449 = vrot.lane.b32.xlu0 %v3442, 127
    %v3450 = vpop.permute.xlu0 %3449
    %3451 = vrot.lane.b32.xlu0 %v3444, 127
    %v3452 = vpop.permute.xlu0 %3451
    %v3457 = vadd.f32 %v3417, %v3446
    %v3458 = vadd.f32 %v3418, %v3448
    %v3459 = vadd.f32 %v3419, %v3450
    %v3460 = vadd.f32 %v3420, %v3452
    %s3461 = sld [smem:[#allocation9 + $0x5c]]
    %v3462 = vstv %s3461
    %v3463 = vmul.f32 %v3462, %v3027
    %v3464 = vmul.f32 %v3462, %v3028
    %v3465 = vmul.f32 %v3462, %v3029
    %v3466 = vmul.f32 %v3462, %v3030
    %v3467 = vmul.f32 %v3462, %v3031
    %v3468 = vmul.f32 %v3462, %v3032
    %v3475 = vrot.slane %v3463, 6
    %v3476 = vrot.slane %v3464, 6
    %v3477 = vsel %vm229, %v3475, %v3476
    %v3478 = vrot.slane %v3465, 6
    %v3479 = vsel %vm229, %v3476, %v3478
    %v3480 = vrot.slane %v3466, 6
    %v3481 = vrot.slane %v3467, 6
    %v3482 = vsel %vm229, %v3480, %v3481
    %v3483 = vrot.slane %v3468, 6
    %v3484 = vsel %vm229, %v3481, %v3483
    %3485 = vrot.lane.b32.xlu0 %v3477, 127
    %v3486 = vpop.permute.xlu0 %3485
    %3487 = vrot.lane.b32.xlu0 %v3479, 127
    %v3488 = vpop.permute.xlu0 %3487
    %3489 = vrot.lane.b32.xlu0 %v3482, 127
    %v3490 = vpop.permute.xlu0 %3489
    %3491 = vrot.lane.b32.xlu0 %v3484, 127
    %v3492 = vpop.permute.xlu0 %3491
    %v3497 = vadd.f32 %v3457, %v3486
    %v3498 = vadd.f32 %v3458, %v3488
    %v3499 = vadd.f32 %v3459, %v3490
    %v3500 = vadd.f32 %v3460, %v3492
    %s3501 = sld [smem:[#allocation9 + $0x33]]
    %v3502 = vstv %s3501
    %v3503 = vmul.f32 %v3502, %v3027
    %v3504 = vmul.f32 %v3502, %v3028
    %v3505 = vmul.f32 %v3502, %v3030
    %v3506 = vmul.f32 %v3502, %v3031
    %3511 = vrot.lane.b32.xlu0 %v3503, 126
    %v3512 = vpop.permute.xlu0 %3511
    %3513 = vrot.lane.b32.xlu0 %v3504, 126
    %v3514 = vpop.permute.xlu0 %3513
    %3515 = vrot.lane.b32.xlu0 %v3505, 126
    %v3516 = vpop.permute.xlu0 %3515
    %3517 = vrot.lane.b32.xlu0 %v3506, 126
    %v3518 = vpop.permute.xlu0 %3517
    %v3523 = vadd.f32 %v3497, %v3512
    %v3524 = vadd.f32 %v3498, %v3514
    %v3525 = vadd.f32 %v3499, %v3516
    %v3526 = vadd.f32 %v3500, %v3518
    %s3527 = sld [smem:[#allocation9 + $0x3a]]
    %v3528 = vstv %s3527
    %v3529 = vmul.f32 %v3528, %v3027
    %v3530 = vmul.f32 %v3528, %v3028
    %v3531 = vmul.f32 %v3528, %v3029
    %v3532 = vmul.f32 %v3528, %v3030
    %v3533 = vmul.f32 %v3528, %v3031
    %v3534 = vmul.f32 %v3528, %v3032
    %v3541 = vrot.slane %v3529, 1
    %v3542 = vrot.slane %v3530, 1
    %v3543 = vsel %vm1247, %v3541, %v3542
    %v3544 = vrot.slane %v3531, 1
    %v3545 = vsel %vm1247, %v3542, %v3544
    %v3546 = vrot.slane %v3532, 1
    %v3547 = vrot.slane %v3533, 1
    %v3548 = vsel %vm1247, %v3546, %v3547
    %v3549 = vrot.slane %v3534, 1
    %v3550 = vsel %vm1247, %v3547, %v3549
    %3551 = vrot.lane.b32.xlu0 %v3543, 126
    %v3552 = vpop.permute.xlu0 %3551
    %3553 = vrot.lane.b32.xlu0 %v3545, 126
    %v3554 = vpop.permute.xlu0 %3553
    %3555 = vrot.lane.b32.xlu0 %v3548, 126
    %v3556 = vpop.permute.xlu0 %3555
    %3557 = vrot.lane.b32.xlu0 %v3550, 126
    %v3558 = vpop.permute.xlu0 %3557
    %v3563 = vadd.f32 %v3523, %v3552
    %v3564 = vadd.f32 %v3524, %v3554
    %v3565 = vadd.f32 %v3525, %v3556
    %v3566 = vadd.f32 %v3526, %v3558
    %s3567 = sld [smem:[#allocation9 + $0x41]]
    %v3568 = vstv %s3567
    %v3569 = vmul.f32 %v3568, %v3027
    %v3570 = vmul.f32 %v3568, %v3028
    %v3571 = vmul.f32 %v3568, %v3029
    %v3572 = vmul.f32 %v3568, %v3030
    %v3573 = vmul.f32 %v3568, %v3031
    %v3574 = vmul.f32 %v3568, %v3032
    %v3581 = vrot.slane %v3569, 2
    %v3582 = vrot.slane %v3570, 2
    %v3583 = vsel %vm1280, %v3581, %v3582
    %v3584 = vrot.slane %v3571, 2
    %v3585 = vsel %vm1280, %v3582, %v3584
    %v3586 = vrot.slane %v3572, 2
    %v3587 = vrot.slane %v3573, 2
    %v3588 = vsel %vm1280, %v3586, %v3587
    %v3589 = vrot.slane %v3574, 2
    %v3590 = vsel %vm1280, %v3587, %v3589
    %3591 = vrot.lane.b32.xlu0 %v3583, 126
    %v3592 = vpop.permute.xlu0 %3591
    %3593 = vrot.lane.b32.xlu0 %v3585, 126
    %v3594 = vpop.permute.xlu0 %3593
    %3595 = vrot.lane.b32.xlu0 %v3588, 126
    %v3596 = vpop.permute.xlu0 %3595
    %3597 = vrot.lane.b32.xlu0 %v3590, 126
    %v3598 = vpop.permute.xlu0 %3597
    %v3603 = vadd.f32 %v3563, %v3592
    %v3604 = vadd.f32 %v3564, %v3594
    %v3605 = vadd.f32 %v3565, %v3596
    %v3606 = vadd.f32 %v3566, %v3598
    %s3607 = sld [smem:[#allocation9 + $0x48]]
    %v3608 = vstv %s3607
    %v3609 = vmul.f32 %v3608, %v3027
    %v3610 = vmul.f32 %v3608, %v3028
    %v3611 = vmul.f32 %v3608, %v3029
    %v3612 = vmul.f32 %v3608, %v3030
    %v3613 = vmul.f32 %v3608, %v3031
    %v3614 = vmul.f32 %v3608, %v3032
    %v3621 = vrot.slane %v3609, 3
    %v3622 = vrot.slane %v3610, 3
    %v3623 = vsel %vm1313, %v3621, %v3622
    %v3624 = vrot.slane %v3611, 3
    %v3625 = vsel %vm1313, %v3622, %v3624
    %v3626 = vrot.slane %v3612, 3
    %v3627 = vrot.slane %v3613, 3
    %v3628 = vsel %vm1313, %v3626, %v3627
    %v3629 = vrot.slane %v3614, 3
    %v3630 = vsel %vm1313, %v3627, %v3629
    %3631 = vrot.lane.b32.xlu0 %v3623, 126
    %v3632 = vpop.permute.xlu0 %3631
    %3633 = vrot.lane.b32.xlu0 %v3625, 126
    %v3634 = vpop.permute.xlu0 %3633
    %3635 = vrot.lane.b32.xlu0 %v3628, 126
    %v3636 = vpop.permute.xlu0 %3635
    %3637 = vrot.lane.b32.xlu0 %v3630, 126
    %v3638 = vpop.permute.xlu0 %3637
    %v3643 = vadd.f32 %v3603, %v3632
    %v3644 = vadd.f32 %v3604, %v3634
    %v3645 = vadd.f32 %v3605, %v3636
    %v3646 = vadd.f32 %v3606, %v3638
    %s3647 = sld [smem:[#allocation9 + $0x4f]]
    %v3648 = vstv %s3647
    %v3649 = vmul.f32 %v3648, %v3027
    %v3650 = vmul.f32 %v3648, %v3028
    %v3651 = vmul.f32 %v3648, %v3029
    %v3652 = vmul.f32 %v3648, %v3030
    %v3653 = vmul.f32 %v3648, %v3031
    %v3654 = vmul.f32 %v3648, %v3032
    %v3661 = vrot.slane %v3649, 4
    %v3662 = vrot.slane %v3650, 4
    %v3663 = vsel %vm1346, %v3661, %v3662
    %v3664 = vrot.slane %v3651, 4
    %v3665 = vsel %vm1346, %v3662, %v3664
    %v3666 = vrot.slane %v3652, 4
    %v3667 = vrot.slane %v3653, 4
    %v3668 = vsel %vm1346, %v3666, %v3667
    %v3669 = vrot.slane %v3654, 4
    %v3670 = vsel %vm1346, %v3667, %v3669
    %3671 = vrot.lane.b32.xlu0 %v3663, 126
    %v3672 = vpop.permute.xlu0 %3671
    %3673 = vrot.lane.b32.xlu0 %v3665, 126
    %v3674 = vpop.permute.xlu0 %3673
    %3675 = vrot.lane.b32.xlu0 %v3668, 126
    %v3676 = vpop.permute.xlu0 %3675
    %3677 = vrot.lane.b32.xlu0 %v3670, 126
    %v3678 = vpop.permute.xlu0 %3677
    %v3683 = vadd.f32 %v3643, %v3672
    %v3684 = vadd.f32 %v3644, %v3674
    %v3685 = vadd.f32 %v3645, %v3676
    %v3686 = vadd.f32 %v3646, %v3678
    %s3687 = sld [smem:[#allocation9 + $0x56]]
    %v3688 = vstv %s3687
    %v3689 = vmul.f32 %v3688, %v3027
    %v3690 = vmul.f32 %v3688, %v3028
    %v3691 = vmul.f32 %v3688, %v3029
    %v3692 = vmul.f32 %v3688, %v3030
    %v3693 = vmul.f32 %v3688, %v3031
    %v3694 = vmul.f32 %v3688, %v3032
    %v3701 = vrot.slane %v3689, 5
    %v3702 = vrot.slane %v3690, 5
    %v3703 = vsel %vm1379, %v3701, %v3702
    %v3704 = vrot.slane %v3691, 5
    %v3705 = vsel %vm1379, %v3702, %v3704
    %v3706 = vrot.slane %v3692, 5
    %v3707 = vrot.slane %v3693, 5
    %v3708 = vsel %vm1379, %v3706, %v3707
    %v3709 = vrot.slane %v3694, 5
    %v3710 = vsel %vm1379, %v3707, %v3709
    %3711 = vrot.lane.b32.xlu0 %v3703, 126
    %v3712 = vpop.permute.xlu0 %3711
    %3713 = vrot.lane.b32.xlu0 %v3705, 126
    %v3714 = vpop.permute.xlu0 %3713
    %3715 = vrot.lane.b32.xlu0 %v3708, 126
    %v3716 = vpop.permute.xlu0 %3715
    %3717 = vrot.lane.b32.xlu0 %v3710, 126
    %v3718 = vpop.permute.xlu0 %3717
    %v3723 = vadd.f32 %v3683, %v3712
    %v3724 = vadd.f32 %v3684, %v3714
    %v3725 = vadd.f32 %v3685, %v3716
    %v3726 = vadd.f32 %v3686, %v3718
    %s3727 = sld [smem:[#allocation9 + $0x5d]]
    %v3728 = vstv %s3727
    %v3729 = vmul.f32 %v3728, %v3027
    %v3730 = vmul.f32 %v3728, %v3028
    %v3731 = vmul.f32 %v3728, %v3029
    %v3732 = vmul.f32 %v3728, %v3030
    %v3733 = vmul.f32 %v3728, %v3031
    %v3734 = vmul.f32 %v3728, %v3032
    %v3741 = vrot.slane %v3729, 6
    %v3742 = vrot.slane %v3730, 6
    %v3743 = vsel %vm229, %v3741, %v3742
    %v3744 = vrot.slane %v3731, 6
    %v3745 = vsel %vm229, %v3742, %v3744
    %v3746 = vrot.slane %v3732, 6
    %v3747 = vrot.slane %v3733, 6
    %v3748 = vsel %vm229, %v3746, %v3747
    %v3749 = vrot.slane %v3734, 6
    %v3750 = vsel %vm229, %v3747, %v3749
    %3751 = vrot.lane.b32.xlu0 %v3743, 126
    %v3752 = vpop.permute.xlu0 %3751
    %3753 = vrot.lane.b32.xlu0 %v3745, 126
    %v3754 = vpop.permute.xlu0 %3753
    %3755 = vrot.lane.b32.xlu0 %v3748, 126
    %v3756 = vpop.permute.xlu0 %3755
    %3757 = vrot.lane.b32.xlu0 %v3750, 126
    %v3758 = vpop.permute.xlu0 %3757
    %v3763 = vadd.f32 %v3723, %v3752
    %v3764 = vadd.f32 %v3724, %v3754
    %v3765 = vadd.f32 %v3725, %v3756
    %v3766 = vadd.f32 %v3726, %v3758
    %s3767 = sld [smem:[#allocation9 + $0x34]]
    %v3768 = vstv %s3767
    %v3769 = vmul.f32 %v3768, %v3027
    %v3770 = vmul.f32 %v3768, %v3028
    %v3771 = vmul.f32 %v3768, %v3030
    %v3772 = vmul.f32 %v3768, %v3031
    %3777 = vrot.lane.b32.xlu0 %v3769, 125
    %v3778 = vpop.permute.xlu0 %3777
    %3779 = vrot.lane.b32.xlu0 %v3770, 125
    %v3780 = vpop.permute.xlu0 %3779
    %3781 = vrot.lane.b32.xlu0 %v3771, 125
    %v3782 = vpop.permute.xlu0 %3781
    %3783 = vrot.lane.b32.xlu0 %v3772, 125
    %v3784 = vpop.permute.xlu0 %3783
    %v3789 = vadd.f32 %v3763, %v3778
    %v3790 = vadd.f32 %v3764, %v3780
    %v3791 = vadd.f32 %v3765, %v3782
    %v3792 = vadd.f32 %v3766, %v3784
    %s3793 = sld [smem:[#allocation9 + $0x3b]]
    %v3794 = vstv %s3793
    %v3795 = vmul.f32 %v3794, %v3027
    %v3796 = vmul.f32 %v3794, %v3028
    %v3797 = vmul.f32 %v3794, %v3029
    %v3798 = vmul.f32 %v3794, %v3030
    %v3799 = vmul.f32 %v3794, %v3031
    %v3800 = vmul.f32 %v3794, %v3032
    %v3807 = vrot.slane %v3795, 1
    %v3808 = vrot.slane %v3796, 1
    %v3809 = vsel %vm1247, %v3807, %v3808
    %v3810 = vrot.slane %v3797, 1
    %v3811 = vsel %vm1247, %v3808, %v3810
    %v3812 = vrot.slane %v3798, 1
    %v3813 = vrot.slane %v3799, 1
    %v3814 = vsel %vm1247, %v3812, %v3813
    %v3815 = vrot.slane %v3800, 1
    %v3816 = vsel %vm1247, %v3813, %v3815
    %3817 = vrot.lane.b32.xlu0 %v3809, 125
    %v3818 = vpop.permute.xlu0 %3817
    %3819 = vrot.lane.b32.xlu0 %v3811, 125
    %v3820 = vpop.permute.xlu0 %3819
    %3821 = vrot.lane.b32.xlu0 %v3814, 125
    %v3822 = vpop.permute.xlu0 %3821
    %3823 = vrot.lane.b32.xlu0 %v3816, 125
    %v3824 = vpop.permute.xlu0 %3823
    %v3829 = vadd.f32 %v3789, %v3818
    %v3830 = vadd.f32 %v3790, %v3820
    %v3831 = vadd.f32 %v3791, %v3822
    %v3832 = vadd.f32 %v3792, %v3824
    %s3833 = sld [smem:[#allocation9 + $0x42]]
    %v3834 = vstv %s3833
    %v3835 = vmul.f32 %v3834, %v3027
    %v3836 = vmul.f32 %v3834, %v3028
    %v3837 = vmul.f32 %v3834, %v3029
    %v3838 = vmul.f32 %v3834, %v3030
    %v3839 = vmul.f32 %v3834, %v3031
    %v3840 = vmul.f32 %v3834, %v3032
    %v3847 = vrot.slane %v3835, 2
    %v3848 = vrot.slane %v3836, 2
    %v3849 = vsel %vm1280, %v3847, %v3848
    %v3850 = vrot.slane %v3837, 2
    %v3851 = vsel %vm1280, %v3848, %v3850
    %v3852 = vrot.slane %v3838, 2
    %v3853 = vrot.slane %v3839, 2
    %v3854 = vsel %vm1280, %v3852, %v3853
    %v3855 = vrot.slane %v3840, 2
    %v3856 = vsel %vm1280, %v3853, %v3855
    %3857 = vrot.lane.b32.xlu0 %v3849, 125
    %v3858 = vpop.permute.xlu0 %3857
    %3859 = vrot.lane.b32.xlu0 %v3851, 125
    %v3860 = vpop.permute.xlu0 %3859
    %3861 = vrot.lane.b32.xlu0 %v3854, 125
    %v3862 = vpop.permute.xlu0 %3861
    %3863 = vrot.lane.b32.xlu0 %v3856, 125
    %v3864 = vpop.permute.xlu0 %3863
    %v3869 = vadd.f32 %v3829, %v3858
    %v3870 = vadd.f32 %v3830, %v3860
    %v3871 = vadd.f32 %v3831, %v3862
    %v3872 = vadd.f32 %v3832, %v3864
    %s3873 = sld [smem:[#allocation9 + $0x49]]
    %v3874 = vstv %s3873
    %v3875 = vmul.f32 %v3874, %v3027
    %v3876 = vmul.f32 %v3874, %v3028
    %v3877 = vmul.f32 %v3874, %v3029
    %v3878 = vmul.f32 %v3874, %v3030
    %v3879 = vmul.f32 %v3874, %v3031
    %v3880 = vmul.f32 %v3874, %v3032
    %v3887 = vrot.slane %v3875, 3
    %v3888 = vrot.slane %v3876, 3
    %v3889 = vsel %vm1313, %v3887, %v3888
    %v3890 = vrot.slane %v3877, 3
    %v3891 = vsel %vm1313, %v3888, %v3890
    %v3892 = vrot.slane %v3878, 3
    %v3893 = vrot.slane %v3879, 3
    %v3894 = vsel %vm1313, %v3892, %v3893
    %v3895 = vrot.slane %v3880, 3
    %v3896 = vsel %vm1313, %v3893, %v3895
    %3897 = vrot.lane.b32.xlu0 %v3889, 125
    %v3898 = vpop.permute.xlu0 %3897
    %3899 = vrot.lane.b32.xlu0 %v3891, 125
    %v3900 = vpop.permute.xlu0 %3899
    %3901 = vrot.lane.b32.xlu0 %v3894, 125
    %v3902 = vpop.permute.xlu0 %3901
    %3903 = vrot.lane.b32.xlu0 %v3896, 125
    %v3904 = vpop.permute.xlu0 %3903
    %v3909 = vadd.f32 %v3869, %v3898
    %v3910 = vadd.f32 %v3870, %v3900
    %v3911 = vadd.f32 %v3871, %v3902
    %v3912 = vadd.f32 %v3872, %v3904
    %s3913 = sld [smem:[#allocation9 + $0x50]]
    %v3914 = vstv %s3913
    %v3915 = vmul.f32 %v3914, %v3027
    %v3916 = vmul.f32 %v3914, %v3028
    %v3917 = vmul.f32 %v3914, %v3029
    %v3918 = vmul.f32 %v3914, %v3030
    %v3919 = vmul.f32 %v3914, %v3031
    %v3920 = vmul.f32 %v3914, %v3032
    %v3927 = vrot.slane %v3915, 4
    %v3928 = vrot.slane %v3916, 4
    %v3929 = vsel %vm1346, %v3927, %v3928
    %v3930 = vrot.slane %v3917, 4
    %v3931 = vsel %vm1346, %v3928, %v3930
    %v3932 = vrot.slane %v3918, 4
    %v3933 = vrot.slane %v3919, 4
    %v3934 = vsel %vm1346, %v3932, %v3933
    %v3935 = vrot.slane %v3920, 4
    %v3936 = vsel %vm1346, %v3933, %v3935
    %3937 = vrot.lane.b32.xlu0 %v3929, 125
    %v3938 = vpop.permute.xlu0 %3937
    %3939 = vrot.lane.b32.xlu0 %v3931, 125
    %v3940 = vpop.permute.xlu0 %3939
    %3941 = vrot.lane.b32.xlu0 %v3934, 125
    %v3942 = vpop.permute.xlu0 %3941
    %3943 = vrot.lane.b32.xlu0 %v3936, 125
    %v3944 = vpop.permute.xlu0 %3943
    %v3949 = vadd.f32 %v3909, %v3938
    %v3950 = vadd.f32 %v3910, %v3940
    %v3951 = vadd.f32 %v3911, %v3942
    %v3952 = vadd.f32 %v3912, %v3944
    %s3953 = sld [smem:[#allocation9 + $0x57]]
    %v3954 = vstv %s3953
    %v3955 = vmul.f32 %v3954, %v3027
    %v3956 = vmul.f32 %v3954, %v3028
    %v3957 = vmul.f32 %v3954, %v3029
    %v3958 = vmul.f32 %v3954, %v3030
    %v3959 = vmul.f32 %v3954, %v3031
    %v3960 = vmul.f32 %v3954, %v3032
    %v3967 = vrot.slane %v3955, 5
    %v3968 = vrot.slane %v3956, 5
    %v3969 = vsel %vm1379, %v3967, %v3968
    %v3970 = vrot.slane %v3957, 5
    %v3971 = vsel %vm1379, %v3968, %v3970
    %v3972 = vrot.slane %v3958, 5
    %v3973 = vrot.slane %v3959, 5
    %v3974 = vsel %vm1379, %v3972, %v3973
    %v3975 = vrot.slane %v3960, 5
    %v3976 = vsel %vm1379, %v3973, %v3975
    %3977 = vrot.lane.b32.xlu0 %v3969, 125
    %v3978 = vpop.permute.xlu0 %3977
    %3979 = vrot.lane.b32.xlu0 %v3971, 125
    %v3980 = vpop.permute.xlu0 %3979
    %3981 = vrot.lane.b32.xlu0 %v3974, 125
    %v3982 = vpop.permute.xlu0 %3981
    %3983 = vrot.lane.b32.xlu0 %v3976, 125
    %v3984 = vpop.permute.xlu0 %3983
    %v3989 = vadd.f32 %v3949, %v3978
    %v3990 = vadd.f32 %v3950, %v3980
    %v3991 = vadd.f32 %v3951, %v3982
    %v3992 = vadd.f32 %v3952, %v3984
    %s3993 = sld [smem:[#allocation9 + $0x5e]]
    %v3994 = vstv %s3993
    %v3995 = vmul.f32 %v3994, %v3027
    %v3996 = vmul.f32 %v3994, %v3028
    %v3997 = vmul.f32 %v3994, %v3029
    %v3998 = vmul.f32 %v3994, %v3030
    %v3999 = vmul.f32 %v3994, %v3031
    %v4000 = vmul.f32 %v3994, %v3032
    %v4007 = vrot.slane %v3995, 6
    %v4008 = vrot.slane %v3996, 6
    %v4009 = vsel %vm229, %v4007, %v4008
    %v4010 = vrot.slane %v3997, 6
    %v4011 = vsel %vm229, %v4008, %v4010
    %v4012 = vrot.slane %v3998, 6
    %v4013 = vrot.slane %v3999, 6
    %v4014 = vsel %vm229, %v4012, %v4013
    %v4015 = vrot.slane %v4000, 6
    %v4016 = vsel %vm229, %v4013, %v4015
    %4017 = vrot.lane.b32.xlu0 %v4009, 125
    %v4018 = vpop.permute.xlu0 %4017
    %4019 = vrot.lane.b32.xlu0 %v4011, 125
    %v4020 = vpop.permute.xlu0 %4019
    %4021 = vrot.lane.b32.xlu0 %v4014, 125
    %v4022 = vpop.permute.xlu0 %4021
    %4023 = vrot.lane.b32.xlu0 %v4016, 125
    %v4024 = vpop.permute.xlu0 %4023
    %v4029 = vadd.f32 %v3989, %v4018
    %v4030 = vadd.f32 %v3990, %v4020
    %v4031 = vadd.f32 %v3991, %v4022
    %v4032 = vadd.f32 %v3992, %v4024
    %s4033 = sld [smem:[#allocation9 + $0x35]]
    %v4034 = vstv %s4033
    %v4035 = vmul.f32 %v4034, %v3027
    %v4036 = vmul.f32 %v4034, %v3028
    %v4037 = vmul.f32 %v4034, %v3030
    %v4038 = vmul.f32 %v4034, %v3031
    %4043 = vrot.lane.b32.xlu0 %v4035, 124
    %v4044 = vpop.permute.xlu0 %4043
    %4045 = vrot.lane.b32.xlu0 %v4036, 124
    %v4046 = vpop.permute.xlu0 %4045
    %4047 = vrot.lane.b32.xlu0 %v4037, 124
    %v4048 = vpop.permute.xlu0 %4047
    %4049 = vrot.lane.b32.xlu0 %v4038, 124
    %v4050 = vpop.permute.xlu0 %4049
    %v4055 = vadd.f32 %v4029, %v4044
    %v4056 = vadd.f32 %v4030, %v4046
    %v4057 = vadd.f32 %v4031, %v4048
    %v4058 = vadd.f32 %v4032, %v4050
    %s4059 = sld [smem:[#allocation9 + $0x3c]]
    %v4060 = vstv %s4059
    %v4061 = vmul.f32 %v4060, %v3027
    %v4062 = vmul.f32 %v4060, %v3028
    %v4063 = vmul.f32 %v4060, %v3029
    %v4064 = vmul.f32 %v4060, %v3030
    %v4065 = vmul.f32 %v4060, %v3031
    %v4066 = vmul.f32 %v4060, %v3032
    %v4073 = vrot.slane %v4061, 1
    %v4074 = vrot.slane %v4062, 1
    %v4075 = vsel %vm1247, %v4073, %v4074
    %v4076 = vrot.slane %v4063, 1
    %v4077 = vsel %vm1247, %v4074, %v4076
    %v4078 = vrot.slane %v4064, 1
    %v4079 = vrot.slane %v4065, 1
    %v4080 = vsel %vm1247, %v4078, %v4079
    %v4081 = vrot.slane %v4066, 1
    %v4082 = vsel %vm1247, %v4079, %v4081
    %4083 = vrot.lane.b32.xlu0 %v4075, 124
    %v4084 = vpop.permute.xlu0 %4083
    %4085 = vrot.lane.b32.xlu0 %v4077, 124
    %v4086 = vpop.permute.xlu0 %4085
    %4087 = vrot.lane.b32.xlu0 %v4080, 124
    %v4088 = vpop.permute.xlu0 %4087
    %4089 = vrot.lane.b32.xlu0 %v4082, 124
    %v4090 = vpop.permute.xlu0 %4089
    %v4095 = vadd.f32 %v4055, %v4084
    %v4096 = vadd.f32 %v4056, %v4086
    %v4097 = vadd.f32 %v4057, %v4088
    %v4098 = vadd.f32 %v4058, %v4090
    %s4099 = sld [smem:[#allocation9 + $0x43]]
    %v4100 = vstv %s4099
    %v4101 = vmul.f32 %v4100, %v3027
    %v4102 = vmul.f32 %v4100, %v3028
    %v4103 = vmul.f32 %v4100, %v3029
    %v4104 = vmul.f32 %v4100, %v3030
    %v4105 = vmul.f32 %v4100, %v3031
    %v4106 = vmul.f32 %v4100, %v3032
    %v4113 = vrot.slane %v4101, 2
    %v4114 = vrot.slane %v4102, 2
    %v4115 = vsel %vm1280, %v4113, %v4114
    %v4116 = vrot.slane %v4103, 2
    %v4117 = vsel %vm1280, %v4114, %v4116
    %v4118 = vrot.slane %v4104, 2
    %v4119 = vrot.slane %v4105, 2
    %v4120 = vsel %vm1280, %v4118, %v4119
    %v4121 = vrot.slane %v4106, 2
    %v4122 = vsel %vm1280, %v4119, %v4121
    %4123 = vrot.lane.b32.xlu0 %v4115, 124
    %v4124 = vpop.permute.xlu0 %4123
    %4125 = vrot.lane.b32.xlu0 %v4117, 124
    %v4126 = vpop.permute.xlu0 %4125
    %4127 = vrot.lane.b32.xlu0 %v4120, 124
    %v4128 = vpop.permute.xlu0 %4127
    %4129 = vrot.lane.b32.xlu0 %v4122, 124
    %v4130 = vpop.permute.xlu0 %4129
    %v4135 = vadd.f32 %v4095, %v4124
    %v4136 = vadd.f32 %v4096, %v4126
    %v4137 = vadd.f32 %v4097, %v4128
    %v4138 = vadd.f32 %v4098, %v4130
    %s4139 = sld [smem:[#allocation9 + $0x4a]]
    %v4140 = vstv %s4139
    %v4141 = vmul.f32 %v4140, %v3027
    %v4142 = vmul.f32 %v4140, %v3028
    %v4143 = vmul.f32 %v4140, %v3029
    %v4144 = vmul.f32 %v4140, %v3030
    %v4145 = vmul.f32 %v4140, %v3031
    %v4146 = vmul.f32 %v4140, %v3032
    %v4153 = vrot.slane %v4141, 3
    %v4154 = vrot.slane %v4142, 3
    %v4155 = vsel %vm1313, %v4153, %v4154
    %v4156 = vrot.slane %v4143, 3
    %v4157 = vsel %vm1313, %v4154, %v4156
    %v4158 = vrot.slane %v4144, 3
    %v4159 = vrot.slane %v4145, 3
    %v4160 = vsel %vm1313, %v4158, %v4159
    %v4161 = vrot.slane %v4146, 3
    %v4162 = vsel %vm1313, %v4159, %v4161
    %4163 = vrot.lane.b32.xlu0 %v4155, 124
    %v4164 = vpop.permute.xlu0 %4163
    %4165 = vrot.lane.b32.xlu0 %v4157, 124
    %v4166 = vpop.permute.xlu0 %4165
    %4167 = vrot.lane.b32.xlu0 %v4160, 124
    %v4168 = vpop.permute.xlu0 %4167
    %4169 = vrot.lane.b32.xlu0 %v4162, 124
    %v4170 = vpop.permute.xlu0 %4169
    %v4175 = vadd.f32 %v4135, %v4164
    %v4176 = vadd.f32 %v4136, %v4166
    %v4177 = vadd.f32 %v4137, %v4168
    %v4178 = vadd.f32 %v4138, %v4170
    %s4179 = sld [smem:[#allocation9 + $0x51]]
    %v4180 = vstv %s4179
    %v4181 = vmul.f32 %v4180, %v3027
    %v4182 = vmul.f32 %v4180, %v3028
    %v4183 = vmul.f32 %v4180, %v3029
    %v4184 = vmul.f32 %v4180, %v3030
    %v4185 = vmul.f32 %v4180, %v3031
    %v4186 = vmul.f32 %v4180, %v3032
    %v4193 = vrot.slane %v4181, 4
    %v4194 = vrot.slane %v4182, 4
    %v4195 = vsel %vm1346, %v4193, %v4194
    %v4196 = vrot.slane %v4183, 4
    %v4197 = vsel %vm1346, %v4194, %v4196
    %v4198 = vrot.slane %v4184, 4
    %v4199 = vrot.slane %v4185, 4
    %v4200 = vsel %vm1346, %v4198, %v4199
    %v4201 = vrot.slane %v4186, 4
    %v4202 = vsel %vm1346, %v4199, %v4201
    %4203 = vrot.lane.b32.xlu0 %v4195, 124
    %v4204 = vpop.permute.xlu0 %4203
    %4205 = vrot.lane.b32.xlu0 %v4197, 124
    %v4206 = vpop.permute.xlu0 %4205
    %4207 = vrot.lane.b32.xlu0 %v4200, 124
    %v4208 = vpop.permute.xlu0 %4207
    %4209 = vrot.lane.b32.xlu0 %v4202, 124
    %v4210 = vpop.permute.xlu0 %4209
    %v4215 = vadd.f32 %v4175, %v4204
    %v4216 = vadd.f32 %v4176, %v4206
    %v4217 = vadd.f32 %v4177, %v4208
    %v4218 = vadd.f32 %v4178, %v4210
    %s4219 = sld [smem:[#allocation9 + $0x58]]
    %v4220 = vstv %s4219
    %v4221 = vmul.f32 %v4220, %v3027
    %v4222 = vmul.f32 %v4220, %v3028
    %v4223 = vmul.f32 %v4220, %v3029
    %v4224 = vmul.f32 %v4220, %v3030
    %v4225 = vmul.f32 %v4220, %v3031
    %v4226 = vmul.f32 %v4220, %v3032
    %v4233 = vrot.slane %v4221, 5
    %v4234 = vrot.slane %v4222, 5
    %v4235 = vsel %vm1379, %v4233, %v4234
    %v4236 = vrot.slane %v4223, 5
    %v4237 = vsel %vm1379, %v4234, %v4236
    %v4238 = vrot.slane %v4224, 5
    %v4239 = vrot.slane %v4225, 5
    %v4240 = vsel %vm1379, %v4238, %v4239
    %v4241 = vrot.slane %v4226, 5
    %v4242 = vsel %vm1379, %v4239, %v4241
    %4243 = vrot.lane.b32.xlu0 %v4235, 124
    %v4244 = vpop.permute.xlu0 %4243
    %4245 = vrot.lane.b32.xlu0 %v4237, 124
    %v4246 = vpop.permute.xlu0 %4245
    %4247 = vrot.lane.b32.xlu0 %v4240, 124
    %v4248 = vpop.permute.xlu0 %4247
    %4249 = vrot.lane.b32.xlu0 %v4242, 124
    %v4250 = vpop.permute.xlu0 %4249
    %v4255 = vadd.f32 %v4215, %v4244
    %v4256 = vadd.f32 %v4216, %v4246
    %v4257 = vadd.f32 %v4217, %v4248
    %v4258 = vadd.f32 %v4218, %v4250
    %s4259 = sld [smem:[#allocation9 + $0x5f]]
    %v4260 = vstv %s4259
    %v4261 = vmul.f32 %v4260, %v3027
    %v4262 = vmul.f32 %v4260, %v3028
    %v4263 = vmul.f32 %v4260, %v3029
    %v4264 = vmul.f32 %v4260, %v3030
    %v4265 = vmul.f32 %v4260, %v3031
    %v4266 = vmul.f32 %v4260, %v3032
    %v4273 = vrot.slane %v4261, 6
    %v4274 = vrot.slane %v4262, 6
    %v4275 = vsel %vm229, %v4273, %v4274
    %v4276 = vrot.slane %v4263, 6
    %v4277 = vsel %vm229, %v4274, %v4276
    %v4278 = vrot.slane %v4264, 6
    %v4279 = vrot.slane %v4265, 6
    %v4280 = vsel %vm229, %v4278, %v4279
    %v4281 = vrot.slane %v4266, 6
    %v4282 = vsel %vm229, %v4279, %v4281
    %4283 = vrot.lane.b32.xlu0 %v4275, 124
    %v4284 = vpop.permute.xlu0 %4283
    %4285 = vrot.lane.b32.xlu0 %v4277, 124
    %v4286 = vpop.permute.xlu0 %4285
    %4287 = vrot.lane.b32.xlu0 %v4280, 124
    %v4288 = vpop.permute.xlu0 %4287
    %4289 = vrot.lane.b32.xlu0 %v4282, 124
    %v4290 = vpop.permute.xlu0 %4289
    %v4295 = vadd.f32 %v4255, %v4284
    %v4296 = vadd.f32 %v4256, %v4286
    %v4297 = vadd.f32 %v4257, %v4288
    %v4298 = vadd.f32 %v4258, %v4290
    %s4299 = sld [smem:[#allocation9 + $0x36]]
    %v4300 = vstv %s4299
    %v4301 = vmul.f32 %v4300, %v3027
    %v4302 = vmul.f32 %v4300, %v3028
    %v4303 = vmul.f32 %v4300, %v3030
    %v4304 = vmul.f32 %v4300, %v3031
    %4309 = vrot.lane.b32.xlu0 %v4301, 123
    %v4310 = vpop.permute.xlu0 %4309
    %4311 = vrot.lane.b32.xlu0 %v4302, 123
    %v4312 = vpop.permute.xlu0 %4311
    %4313 = vrot.lane.b32.xlu0 %v4303, 123
    %v4314 = vpop.permute.xlu0 %4313
    %4315 = vrot.lane.b32.xlu0 %v4304, 123
    %v4316 = vpop.permute.xlu0 %4315
    %v4321 = vadd.f32 %v4295, %v4310
    %v4322 = vadd.f32 %v4296, %v4312
    %v4323 = vadd.f32 %v4297, %v4314
    %v4324 = vadd.f32 %v4298, %v4316
    %s4325 = sld [smem:[#allocation9 + $0x3d]]
    %v4326 = vstv %s4325
    %v4327 = vmul.f32 %v4326, %v3027
    %v4328 = vmul.f32 %v4326, %v3028
    %v4329 = vmul.f32 %v4326, %v3029
    %v4330 = vmul.f32 %v4326, %v3030
    %v4331 = vmul.f32 %v4326, %v3031
    %v4332 = vmul.f32 %v4326, %v3032
    %v4339 = vrot.slane %v4327, 1
    %v4340 = vrot.slane %v4328, 1
    %v4341 = vsel %vm1247, %v4339, %v4340
    %v4342 = vrot.slane %v4329, 1
    %v4343 = vsel %vm1247, %v4340, %v4342
    %v4344 = vrot.slane %v4330, 1
    %v4345 = vrot.slane %v4331, 1
    %v4346 = vsel %vm1247, %v4344, %v4345
    %v4347 = vrot.slane %v4332, 1
    %v4348 = vsel %vm1247, %v4345, %v4347
    %4349 = vrot.lane.b32.xlu0 %v4341, 123
    %v4350 = vpop.permute.xlu0 %4349
    %4351 = vrot.lane.b32.xlu0 %v4343, 123
    %v4352 = vpop.permute.xlu0 %4351
    %4353 = vrot.lane.b32.xlu0 %v4346, 123
    %v4354 = vpop.permute.xlu0 %4353
    %4355 = vrot.lane.b32.xlu0 %v4348, 123
    %v4356 = vpop.permute.xlu0 %4355
    %v4361 = vadd.f32 %v4321, %v4350
    %v4362 = vadd.f32 %v4322, %v4352
    %v4363 = vadd.f32 %v4323, %v4354
    %v4364 = vadd.f32 %v4324, %v4356
    %s4365 = sld [smem:[#allocation9 + $0x44]]
    %v4366 = vstv %s4365
    %v4367 = vmul.f32 %v4366, %v3027
    %v4368 = vmul.f32 %v4366, %v3028
    %v4369 = vmul.f32 %v4366, %v3029
    %v4370 = vmul.f32 %v4366, %v3030
    %v4371 = vmul.f32 %v4366, %v3031
    %v4372 = vmul.f32 %v4366, %v3032
    %v4379 = vrot.slane %v4367, 2
    %v4380 = vrot.slane %v4368, 2
    %v4381 = vsel %vm1280, %v4379, %v4380
    %v4382 = vrot.slane %v4369, 2
    %v4383 = vsel %vm1280, %v4380, %v4382
    %v4384 = vrot.slane %v4370, 2
    %v4385 = vrot.slane %v4371, 2
    %v4386 = vsel %vm1280, %v4384, %v4385
    %v4387 = vrot.slane %v4372, 2
    %v4388 = vsel %vm1280, %v4385, %v4387
    %4389 = vrot.lane.b32.xlu0 %v4381, 123
    %v4390 = vpop.permute.xlu0 %4389
    %4391 = vrot.lane.b32.xlu0 %v4383, 123
    %v4392 = vpop.permute.xlu0 %4391
    %4393 = vrot.lane.b32.xlu0 %v4386, 123
    %v4394 = vpop.permute.xlu0 %4393
    %4395 = vrot.lane.b32.xlu0 %v4388, 123
    %v4396 = vpop.permute.xlu0 %4395
    %v4401 = vadd.f32 %v4361, %v4390
    %v4402 = vadd.f32 %v4362, %v4392
    %v4403 = vadd.f32 %v4363, %v4394
    %v4404 = vadd.f32 %v4364, %v4396
    %s4405 = sld [smem:[#allocation9 + $0x4b]]
    %v4406 = vstv %s4405
    %v4407 = vmul.f32 %v4406, %v3027
    %v4408 = vmul.f32 %v4406, %v3028
    %v4409 = vmul.f32 %v4406, %v3029
    %v4410 = vmul.f32 %v4406, %v3030
    %v4411 = vmul.f32 %v4406, %v3031
    %v4412 = vmul.f32 %v4406, %v3032
    %v4419 = vrot.slane %v4407, 3
    %v4420 = vrot.slane %v4408, 3
    %v4421 = vsel %vm1313, %v4419, %v4420
    %v4422 = vrot.slane %v4409, 3
    %v4423 = vsel %vm1313, %v4420, %v4422
    %v4424 = vrot.slane %v4410, 3
    %v4425 = vrot.slane %v4411, 3
    %v4426 = vsel %vm1313, %v4424, %v4425
    %v4427 = vrot.slane %v4412, 3
    %v4428 = vsel %vm1313, %v4425, %v4427
    %4429 = vrot.lane.b32.xlu0 %v4421, 123
    %v4430 = vpop.permute.xlu0 %4429
    %4431 = vrot.lane.b32.xlu0 %v4423, 123
    %v4432 = vpop.permute.xlu0 %4431
    %4433 = vrot.lane.b32.xlu0 %v4426, 123
    %v4434 = vpop.permute.xlu0 %4433
    %4435 = vrot.lane.b32.xlu0 %v4428, 123
    %v4436 = vpop.permute.xlu0 %4435
    %v4441 = vadd.f32 %v4401, %v4430
    %v4442 = vadd.f32 %v4402, %v4432
    %v4443 = vadd.f32 %v4403, %v4434
    %v4444 = vadd.f32 %v4404, %v4436
    %s4445 = sld [smem:[#allocation9 + $0x52]]
    %v4446 = vstv %s4445
    %v4447 = vmul.f32 %v4446, %v3027
    %v4448 = vmul.f32 %v4446, %v3028
    %v4449 = vmul.f32 %v4446, %v3029
    %v4450 = vmul.f32 %v4446, %v3030
    %v4451 = vmul.f32 %v4446, %v3031
    %v4452 = vmul.f32 %v4446, %v3032
    %v4459 = vrot.slane %v4447, 4
    %v4460 = vrot.slane %v4448, 4
    %v4461 = vsel %vm1346, %v4459, %v4460
    %v4462 = vrot.slane %v4449, 4
    %v4463 = vsel %vm1346, %v4460, %v4462
    %v4464 = vrot.slane %v4450, 4
    %v4465 = vrot.slane %v4451, 4
    %v4466 = vsel %vm1346, %v4464, %v4465
    %v4467 = vrot.slane %v4452, 4
    %v4468 = vsel %vm1346, %v4465, %v4467
    %4469 = vrot.lane.b32.xlu0 %v4461, 123
    %v4470 = vpop.permute.xlu0 %4469
    %4471 = vrot.lane.b32.xlu0 %v4463, 123
    %v4472 = vpop.permute.xlu0 %4471
    %4473 = vrot.lane.b32.xlu0 %v4466, 123
    %v4474 = vpop.permute.xlu0 %4473
    %4475 = vrot.lane.b32.xlu0 %v4468, 123
    %v4476 = vpop.permute.xlu0 %4475
    %v4481 = vadd.f32 %v4441, %v4470
    %v4482 = vadd.f32 %v4442, %v4472
    %v4483 = vadd.f32 %v4443, %v4474
    %v4484 = vadd.f32 %v4444, %v4476
    %s4485 = sld [smem:[#allocation9 + $0x59]]
    %v4486 = vstv %s4485
    %v4487 = vmul.f32 %v4486, %v3027
    %v4488 = vmul.f32 %v4486, %v3028
    %v4489 = vmul.f32 %v4486, %v3029
    %v4490 = vmul.f32 %v4486, %v3030
    %v4491 = vmul.f32 %v4486, %v3031
    %v4492 = vmul.f32 %v4486, %v3032
    %v4499 = vrot.slane %v4487, 5
    %v4500 = vrot.slane %v4488, 5
    %v4501 = vsel %vm1379, %v4499, %v4500
    %v4502 = vrot.slane %v4489, 5
    %v4503 = vsel %vm1379, %v4500, %v4502
    %v4504 = vrot.slane %v4490, 5
    %v4505 = vrot.slane %v4491, 5
    %v4506 = vsel %vm1379, %v4504, %v4505
    %v4507 = vrot.slane %v4492, 5
    %v4508 = vsel %vm1379, %v4505, %v4507
    %4509 = vrot.lane.b32.xlu0 %v4501, 123
    %v4510 = vpop.permute.xlu0 %4509
    %4511 = vrot.lane.b32.xlu0 %v4503, 123
    %v4512 = vpop.permute.xlu0 %4511
    %4513 = vrot.lane.b32.xlu0 %v4506, 123
    %v4514 = vpop.permute.xlu0 %4513
    %4515 = vrot.lane.b32.xlu0 %v4508, 123
    %v4516 = vpop.permute.xlu0 %4515
    %v4521 = vadd.f32 %v4481, %v4510
    %v4522 = vadd.f32 %v4482, %v4512
    %v4523 = vadd.f32 %v4483, %v4514
    %v4524 = vadd.f32 %v4484, %v4516
    %s4525 = sld [smem:[#allocation9 + $0x60]]
    %v4526 = vstv %s4525
    %v4527 = vmul.f32 %v4526, %v3027
    %v4528 = vmul.f32 %v4526, %v3028
    %v4529 = vmul.f32 %v4526, %v3029
    %v4530 = vmul.f32 %v4526, %v3030
    %v4531 = vmul.f32 %v4526, %v3031
    %v4532 = vmul.f32 %v4526, %v3032
    %v4539 = vrot.slane %v4527, 6
    %v4540 = vrot.slane %v4528, 6
    %v4541 = vsel %vm229, %v4539, %v4540
    %v4542 = vrot.slane %v4529, 6
    %v4543 = vsel %vm229, %v4540, %v4542
    %v4544 = vrot.slane %v4530, 6
    %v4545 = vrot.slane %v4531, 6
    %v4546 = vsel %vm229, %v4544, %v4545
    %v4547 = vrot.slane %v4532, 6
    %v4548 = vsel %vm229, %v4545, %v4547
    %4549 = vrot.lane.b32.xlu0 %v4541, 123
    %v4550 = vpop.permute.xlu0 %4549
    %4551 = vrot.lane.b32.xlu0 %v4543, 123
    %v4552 = vpop.permute.xlu0 %4551
    %4553 = vrot.lane.b32.xlu0 %v4546, 123
    %v4554 = vpop.permute.xlu0 %4553
    %4555 = vrot.lane.b32.xlu0 %v4548, 123
    %v4556 = vpop.permute.xlu0 %4555
    %v4561 = vadd.f32 %v4521, %v4550
    %v4562 = vadd.f32 %v4522, %v4552
    %v4563 = vadd.f32 %v4523, %v4554
    %v4564 = vadd.f32 %v4524, %v4556
    %s4565 = sld [smem:[#allocation9 + $0x37]]
    %v4566 = vstv %s4565
    %v4567 = vmul.f32 %v4566, %v3027
    %v4568 = vmul.f32 %v4566, %v3028
    %v4569 = vmul.f32 %v4566, %v3030
    %v4570 = vmul.f32 %v4566, %v3031
    %4575 = vrot.lane.b32.xlu0 %v4567, 122
    %v4576 = vpop.permute.xlu0 %4575
    %4577 = vrot.lane.b32.xlu0 %v4568, 122
    %v4578 = vpop.permute.xlu0 %4577
    %4579 = vrot.lane.b32.xlu0 %v4569, 122
    %v4580 = vpop.permute.xlu0 %4579
    %4581 = vrot.lane.b32.xlu0 %v4570, 122
    %v4582 = vpop.permute.xlu0 %4581
    %v4587 = vadd.f32 %v4561, %v4576
    %v4588 = vadd.f32 %v4562, %v4578
    %v4589 = vadd.f32 %v4563, %v4580
    %v4590 = vadd.f32 %v4564, %v4582
    %s4591 = sld [smem:[#allocation9 + $0x3e]]
    %v4592 = vstv %s4591
    %v4593 = vmul.f32 %v4592, %v3027
    %v4594 = vmul.f32 %v4592, %v3028
    %v4595 = vmul.f32 %v4592, %v3029
    %v4596 = vmul.f32 %v4592, %v3030
    %v4597 = vmul.f32 %v4592, %v3031
    %v4598 = vmul.f32 %v4592, %v3032
    %v4605 = vrot.slane %v4593, 1
    %v4606 = vrot.slane %v4594, 1
    %v4607 = vsel %vm1247, %v4605, %v4606
    %v4608 = vrot.slane %v4595, 1
    %v4609 = vsel %vm1247, %v4606, %v4608
    %v4610 = vrot.slane %v4596, 1
    %v4611 = vrot.slane %v4597, 1
    %v4612 = vsel %vm1247, %v4610, %v4611
    %v4613 = vrot.slane %v4598, 1
    %v4614 = vsel %vm1247, %v4611, %v4613
    %4615 = vrot.lane.b32.xlu0 %v4607, 122
    %v4616 = vpop.permute.xlu0 %4615
    %4617 = vrot.lane.b32.xlu0 %v4609, 122
    %v4618 = vpop.permute.xlu0 %4617
    %4619 = vrot.lane.b32.xlu0 %v4612, 122
    %v4620 = vpop.permute.xlu0 %4619
    %4621 = vrot.lane.b32.xlu0 %v4614, 122
    %v4622 = vpop.permute.xlu0 %4621
    %v4627 = vadd.f32 %v4587, %v4616
    %v4628 = vadd.f32 %v4588, %v4618
    %v4629 = vadd.f32 %v4589, %v4620
    %v4630 = vadd.f32 %v4590, %v4622
    %s4631 = sld [smem:[#allocation9 + $0x45]]
    %v4632 = vstv %s4631
    %v4633 = vmul.f32 %v4632, %v3027
    %v4634 = vmul.f32 %v4632, %v3028
    %v4635 = vmul.f32 %v4632, %v3029
    %v4636 = vmul.f32 %v4632, %v3030
    %v4637 = vmul.f32 %v4632, %v3031
    %v4638 = vmul.f32 %v4632, %v3032
    %v4645 = vrot.slane %v4633, 2
    %v4646 = vrot.slane %v4634, 2
    %v4647 = vsel %vm1280, %v4645, %v4646
    %v4648 = vrot.slane %v4635, 2
    %v4649 = vsel %vm1280, %v4646, %v4648
    %v4650 = vrot.slane %v4636, 2
    %v4651 = vrot.slane %v4637, 2
    %v4652 = vsel %vm1280, %v4650, %v4651
    %v4653 = vrot.slane %v4638, 2
    %v4654 = vsel %vm1280, %v4651, %v4653
    %4655 = vrot.lane.b32.xlu0 %v4647, 122
    %v4656 = vpop.permute.xlu0 %4655
    %4657 = vrot.lane.b32.xlu0 %v4649, 122
    %v4658 = vpop.permute.xlu0 %4657
    %4659 = vrot.lane.b32.xlu0 %v4652, 122
    %v4660 = vpop.permute.xlu0 %4659
    %4661 = vrot.lane.b32.xlu0 %v4654, 122
    %v4662 = vpop.permute.xlu0 %4661
    %v4667 = vadd.f32 %v4627, %v4656
    %v4668 = vadd.f32 %v4628, %v4658
    %v4669 = vadd.f32 %v4629, %v4660
    %v4670 = vadd.f32 %v4630, %v4662
    %s4671 = sld [smem:[#allocation9 + $0x4c]]
    %v4672 = vstv %s4671
    %v4673 = vmul.f32 %v4672, %v3027
    %v4674 = vmul.f32 %v4672, %v3028
    %v4675 = vmul.f32 %v4672, %v3029
    %v4676 = vmul.f32 %v4672, %v3030
    %v4677 = vmul.f32 %v4672, %v3031
    %v4678 = vmul.f32 %v4672, %v3032
    %v4685 = vrot.slane %v4673, 3
    %v4686 = vrot.slane %v4674, 3
    %v4687 = vsel %vm1313, %v4685, %v4686
    %v4688 = vrot.slane %v4675, 3
    %v4689 = vsel %vm1313, %v4686, %v4688
    %v4690 = vrot.slane %v4676, 3
    %v4691 = vrot.slane %v4677, 3
    %v4692 = vsel %vm1313, %v4690, %v4691
    %v4693 = vrot.slane %v4678, 3
    %v4694 = vsel %vm1313, %v4691, %v4693
    %4695 = vrot.lane.b32.xlu0 %v4687, 122
    %v4696 = vpop.permute.xlu0 %4695
    %4697 = vrot.lane.b32.xlu0 %v4689, 122
    %v4698 = vpop.permute.xlu0 %4697
    %4699 = vrot.lane.b32.xlu0 %v4692, 122
    %v4700 = vpop.permute.xlu0 %4699
    %4701 = vrot.lane.b32.xlu0 %v4694, 122
    %v4702 = vpop.permute.xlu0 %4701
    %v4707 = vadd.f32 %v4667, %v4696
    %v4708 = vadd.f32 %v4668, %v4698
    %v4709 = vadd.f32 %v4669, %v4700
    %v4710 = vadd.f32 %v4670, %v4702
    %s4711 = sld [smem:[#allocation9 + $0x53]]
    %v4712 = vstv %s4711
    %v4713 = vmul.f32 %v4712, %v3027
    %v4714 = vmul.f32 %v4712, %v3028
    %v4715 = vmul.f32 %v4712, %v3029
    %v4716 = vmul.f32 %v4712, %v3030
    %v4717 = vmul.f32 %v4712, %v3031
    %v4718 = vmul.f32 %v4712, %v3032
    %v4725 = vrot.slane %v4713, 4
    %v4726 = vrot.slane %v4714, 4
    %v4727 = vsel %vm1346, %v4725, %v4726
    %v4728 = vrot.slane %v4715, 4
    %v4729 = vsel %vm1346, %v4726, %v4728
    %v4730 = vrot.slane %v4716, 4
    %v4731 = vrot.slane %v4717, 4
    %v4732 = vsel %vm1346, %v4730, %v4731
    %v4733 = vrot.slane %v4718, 4
    %v4734 = vsel %vm1346, %v4731, %v4733
    %4735 = vrot.lane.b32.xlu0 %v4727, 122
    %v4736 = vpop.permute.xlu0 %4735
    %4737 = vrot.lane.b32.xlu0 %v4729, 122
    %v4738 = vpop.permute.xlu0 %4737
    %4739 = vrot.lane.b32.xlu0 %v4732, 122
    %v4740 = vpop.permute.xlu0 %4739
    %4741 = vrot.lane.b32.xlu0 %v4734, 122
    %v4742 = vpop.permute.xlu0 %4741
    %v4747 = vadd.f32 %v4707, %v4736
    %v4748 = vadd.f32 %v4708, %v4738
    %v4749 = vadd.f32 %v4709, %v4740
    %v4750 = vadd.f32 %v4710, %v4742
    %s4751 = sld [smem:[#allocation9 + $0x5a]]
    %v4752 = vstv %s4751
    %v4753 = vmul.f32 %v4752, %v3027
    %v4754 = vmul.f32 %v4752, %v3028
    %v4755 = vmul.f32 %v4752, %v3029
    %v4756 = vmul.f32 %v4752, %v3030
    %v4757 = vmul.f32 %v4752, %v3031
    %v4758 = vmul.f32 %v4752, %v3032
    %v4765 = vrot.slane %v4753, 5
    %v4766 = vrot.slane %v4754, 5
    %v4767 = vsel %vm1379, %v4765, %v4766
    %v4768 = vrot.slane %v4755, 5
    %v4769 = vsel %vm1379, %v4766, %v4768
    %v4770 = vrot.slane %v4756, 5
    %v4771 = vrot.slane %v4757, 5
    %v4772 = vsel %vm1379, %v4770, %v4771
    %v4773 = vrot.slane %v4758, 5
    %v4774 = vsel %vm1379, %v4771, %v4773
    %4775 = vrot.lane.b32.xlu0 %v4767, 122
    %v4776 = vpop.permute.xlu0 %4775
    %4777 = vrot.lane.b32.xlu0 %v4769, 122
    %v4778 = vpop.permute.xlu0 %4777
    %4779 = vrot.lane.b32.xlu0 %v4772, 122
    %v4780 = vpop.permute.xlu0 %4779
    %4781 = vrot.lane.b32.xlu0 %v4774, 122
    %v4782 = vpop.permute.xlu0 %4781
    %v4787 = vadd.f32 %v4747, %v4776
    %v4788 = vadd.f32 %v4748, %v4778
    %v4789 = vadd.f32 %v4749, %v4780
    %v4790 = vadd.f32 %v4750, %v4782
    %s4791 = sld [smem:[#allocation9 + $0x61]]
    %v4792 = vstv %s4791
    %v4793 = vmul.f32 %v4792, %v3027
    %v4794 = vmul.f32 %v4792, %v3028
    %v4795 = vmul.f32 %v4792, %v3029
    %v4796 = vmul.f32 %v4792, %v3030
    %v4797 = vmul.f32 %v4792, %v3031
    %v4798 = vmul.f32 %v4792, %v3032
    %v4805 = vrot.slane %v4793, 6
    %v4806 = vrot.slane %v4794, 6
    %v4807 = vsel %vm229, %v4805, %v4806
    %v4808 = vrot.slane %v4795, 6
    %v4809 = vsel %vm229, %v4806, %v4808
    %v4810 = vrot.slane %v4796, 6
    %v4811 = vrot.slane %v4797, 6
    %v4812 = vsel %vm229, %v4810, %v4811
    %v4813 = vrot.slane %v4798, 6
    %v4814 = vsel %vm229, %v4811, %v4813
    %4815 = vrot.lane.b32.xlu0 %v4807, 122
    %v4816 = vpop.permute.xlu0 %4815
    %4817 = vrot.lane.b32.xlu0 %v4809, 122
    %v4818 = vpop.permute.xlu0 %4817
    %4819 = vrot.lane.b32.xlu0 %v4812, 122
    %v4820 = vpop.permute.xlu0 %4819
    %4821 = vrot.lane.b32.xlu0 %v4814, 122
    %v4822 = vpop.permute.xlu0 %4821
    %v4827 = vadd.f32 %v4787, %v4816
    %v4828 = vadd.f32 %v4788, %v4818
    %v4829 = vadd.f32 %v4789, %v4820
    %v4830 = vadd.f32 %v4790, %v4822
    %vm4831 = vcmp.lt.s32.totalorder %v409, 16
    %vm4832 = vmand %vm410, %vm4831
    %4833 = vst.msk [vmem:[#allocation4] sm:$0x1] %vm4832, %v4827
    %4834 = vst.msk [vmem:[#allocation4 + $0x2] sm:$0x1] %vm4832, %v4829
    %v4838 = vunpack.c.l.s4 1966171168
    %v4839 = vunpack.c.0.s8 %v4838
    %v4840 = vlaneseq
    %v4841 = vshrl.u32 %v4840, 7
    %v4842 = vsub.s32 %v4839, %v4841
    %v4843 = vrot.slane %v4827, %v4842
    %v4844 = vcombine.high %v4843, %v4843
    %v4846 = vunpack.c.l.s4 1966171168
    %v4847 = vunpack.c.0.s8 %v4846
    %v4848 = vlaneseq
    %v4849 = vshrl.u32 %v4848, 7
    %v4850 = vsub.s32 %v4847, %v4849
    %v4851 = vrot.slane %v4843, %v4850
    %v4853 = vunpack.c.l.s4 1966171168
    %v4854 = vunpack.c.0.s8 %v4853
    %v4855 = vlaneseq
    %v4856 = vshrl.u32 %v4855, 7
    %v4857 = vsub.s32 %v4854, %v4856
    %v4858 = vrot.slane %v4844, %v4857
    %v4860 = vunpack.c.l.s4 1966171168
    %v4861 = vunpack.c.0.s8 %v4860
    %v4862 = vlaneseq
    %v4863 = vshrl.u32 %v4862, 7
    %v4864 = vsub.s32 %v4861, %v4863
    %v4865 = vrot.slane %v4829, %v4864
    %v4866 = vcombine.high %v4865, %v4865
    %v4868 = vunpack.c.l.s4 1966171168
    %v4869 = vunpack.c.0.s8 %v4868
    %v4870 = vlaneseq
    %v4871 = vshrl.u32 %v4870, 7
    %v4872 = vsub.s32 %v4869, %v4871
    %v4873 = vrot.slane %v4865, %v4872
    %v4875 = vunpack.c.l.s4 1966171168
    %v4876 = vunpack.c.0.s8 %v4875
    %v4877 = vlaneseq
    %v4878 = vshrl.u32 %v4877, 7
    %v4879 = vsub.s32 %v4876, %v4878
    %v4880 = vrot.slane %v4866, %v4879
    %4881 = vrot.lane.b32.xlu0 %v4858, 16
    %v4882 = vpop.permute.xlu0 %4881
    %4883 = vrot.lane.b32.xlu0 %v4880, 16
    %v4884 = vpop.permute.xlu0 %4883
    %vm4887 = vcmp.ge.s32.totalorder %v409, 16
    %vm4888 = vcmp.lt.s32.totalorder %v409, 32
    %vm4889 = vmand %vm4887, %vm4888
    %4890 = vst.msk [vmem:[#allocation4] sm:$0x1] %vm4889, %v4882
    %4891 = vst.msk [vmem:[#allocation4 + $0x2] sm:$0x1] %vm4889, %v4884
    %v4892 = vcombine.high %v4851, %v4851
    %v4893 = vcombine.high %v4873, %v4873
    %4894 = vrot.lane.b32.xlu0 %v4892, 32
    %v4895 = vpop.permute.xlu0 %4894
    %4896 = vrot.lane.b32.xlu0 %v4893, 32
    %v4897 = vpop.permute.xlu0 %4896
    %vm4900 = vcmp.ge.s32.totalorder %v409, 32
    %vm4901 = vcmp.lt.s32.totalorder %v409, 48
    %vm4902 = vmand %vm4900, %vm4901
    %4903 = vst.msk [vmem:[#allocation4] sm:$0x1] %vm4902, %v4895
    %4904 = vst.msk [vmem:[#allocation4 + $0x2] sm:$0x1] %vm4902, %v4897
    %v4905 = vcombine.high %v4858, %v4858
    %v4906 = vcombine.high %v4880, %v4880
    %4907 = vrot.lane.b32.xlu0 %v4905, 48
    %v4908 = vpop.permute.xlu0 %4907
    %4909 = vrot.lane.b32.xlu0 %v4906, 48
    %v4910 = vpop.permute.xlu0 %4909
    %vm4913 = vcmp.ge.s32.totalorder %v409, 48
    %vm4914 = vcmp.lt.s32.totalorder %v409, 64
    %vm4915 = vmand %vm4913, %vm4914
    %4916 = vst.msk [vmem:[#allocation4] sm:$0x1] %vm4915, %v4908
    %4917 = vst.msk [vmem:[#allocation4 + $0x2] sm:$0x1] %vm4915, %v4910
    %v4918 = vcombine.high %v4827, %v4827
    %v4920 = vunpack.c.l.s4 1966171168
    %v4921 = vunpack.c.0.s8 %v4920
    %v4922 = vlaneseq
    %v4923 = vshrl.u32 %v4922, 7
    %v4924 = vsub.s32 %v4921, %v4923
    %v4925 = vrot.slane %v4918, %v4924
    %v4927 = vunpack.c.l.s4 1966171168
    %v4928 = vunpack.c.0.s8 %v4927
    %v4929 = vlaneseq
    %v4930 = vshrl.u32 %v4929, 7
    %v4931 = vsub.s32 %v4928, %v4930
    %v4932 = vrot.slane %v4925, %v4931
    %v4933 = vcombine.high %v4829, %v4829
    %v4935 = vunpack.c.l.s4 1966171168
    %v4936 = vunpack.c.0.s8 %v4935
    %v4937 = vlaneseq
    %v4938 = vshrl.u32 %v4937, 7
    %v4939 = vsub.s32 %v4936, %v4938
    %v4940 = vrot.slane %v4933, %v4939
    %v4942 = vunpack.c.l.s4 1966171168
    %v4943 = vunpack.c.0.s8 %v4942
    %v4944 = vlaneseq
    %v4945 = vshrl.u32 %v4944, 7
    %v4946 = vsub.s32 %v4943, %v4945
    %v4947 = vrot.slane %v4940, %v4946
    %4948 = vrot.lane.b32.xlu0 %v4932, 64
    %v4949 = vpop.permute.xlu0 %4948
    %4950 = vrot.lane.b32.xlu0 %v4947, 64
    %v4951 = vpop.permute.xlu0 %4950
    %vm4954 = vcmp.ge.s32.totalorder %v409, 64
    %vm4955 = vcmp.lt.s32.totalorder %v409, 80
    %vm4956 = vmand %vm4954, %vm4955
    %4957 = vst.msk [vmem:[#allocation4] sm:$0x1] %vm4956, %v4949
    %4958 = vst.msk [vmem:[#allocation4 + $0x2] sm:$0x1] %vm4956, %v4951
    %v4959 = vcombine.high %v4925, %v4925
    %v4961 = vunpack.c.l.s4 1966171168
    %v4962 = vunpack.c.0.s8 %v4961
    %v4963 = vlaneseq
    %v4964 = vshrl.u32 %v4963, 7
    %v4965 = vsub.s32 %v4962, %v4964
    %v4966 = vrot.slane %v4959, %v4965
    %v4967 = vcombine.high %v4940, %v4940
    %v4969 = vunpack.c.l.s4 1966171168
    %v4970 = vunpack.c.0.s8 %v4969
    %v4971 = vlaneseq
    %v4972 = vshrl.u32 %v4971, 7
    %v4973 = vsub.s32 %v4970, %v4972
    %v4974 = vrot.slane %v4967, %v4973
    %4975 = vrot.lane.b32.xlu0 %v4966, 80
    %v4976 = vpop.permute.xlu0 %4975
    %4977 = vrot.lane.b32.xlu0 %v4974, 80
    %v4978 = vpop.permute.xlu0 %4977
    %vm4981 = vcmp.ge.s32.totalorder %v409, 80
    %vm4982 = vcmp.lt.s32.totalorder %v409, 96
    %vm4983 = vmand %vm4981, %vm4982
    %4984 = vst.msk [vmem:[#allocation4] sm:$0x1] %vm4983, %v4976
    %4985 = vst.msk [vmem:[#allocation4 + $0x2] sm:$0x1] %vm4983, %v4978
    %v4986 = vcombine.high %v4932, %v4932
    %v4987 = vcombine.high %v4947, %v4947
    %4988 = vrot.lane.b32.xlu0 %v4986, 96
    %v4989 = vpop.permute.xlu0 %4988
    %4990 = vrot.lane.b32.xlu0 %v4987, 96
    %v4991 = vpop.permute.xlu0 %4990
    %vm4994 = vcmp.ge.s32.totalorder %v409, 96
    %vm4995 = vcmp.lt.s32.totalorder %v409, 112
    %vm4996 = vmand %vm4994, %vm4995
    %4997 = vst.msk [vmem:[#allocation4] sm:$0x1] %vm4996, %v4989
    %4998 = vst.msk [vmem:[#allocation4 + $0x2] sm:$0x1] %vm4996, %v4991
    %v4999 = vcombine.high %v4966, %v4966
    %v5000 = vcombine.high %v4974, %v4974
    %5001 = vrot.lane.b32.xlu0 %v4999, 112
    %v5002 = vpop.permute.xlu0 %5001
    %5003 = vrot.lane.b32.xlu0 %v5000, 112
    %v5004 = vpop.permute.xlu0 %5003
    %vm5007 = vcmp.ge.s32.totalorder %v409, 112
    %vm5008 = vcmp.lt.s32.totalorder %v409, 128
    %vm5009 = vmand %vm5007, %vm5008
    %5010 = vst.msk [vmem:[#allocation4] sm:$0x1] %vm5009, %v5002
    %5011 = vst.msk [vmem:[#allocation4 + $0x2] sm:$0x1] %vm5009, %v5004
    %5012 = vst.msk [vmem:[#allocation4 + $0x1] sm:$0x1] %vm4832, %v4828
    %5013 = vst.msk [vmem:[#allocation4 + $0x3] sm:$0x1] %vm4832, %v4830
    %v5017 = vunpack.c.l.s4 1966171168
    %v5018 = vunpack.c.0.s8 %v5017
    %v5019 = vlaneseq
    %v5020 = vshrl.u32 %v5019, 7
    %v5021 = vsub.s32 %v5018, %v5020
    %v5022 = vrot.slane %v4828, %v5021
    %v5023 = vcombine.high %v5022, %v5022
    %v5025 = vunpack.c.l.s4 1966171168
    %v5026 = vunpack.c.0.s8 %v5025
    %v5027 = vlaneseq
    %v5028 = vshrl.u32 %v5027, 7
    %v5029 = vsub.s32 %v5026, %v5028
    %v5030 = vrot.slane %v5022, %v5029
    %v5032 = vunpack.c.l.s4 1966171168
    %v5033 = vunpack.c.0.s8 %v5032
    %v5034 = vlaneseq
    %v5035 = vshrl.u32 %v5034, 7
    %v5036 = vsub.s32 %v5033, %v5035
    %v5037 = vrot.slane %v5023, %v5036
    %v5039 = vunpack.c.l.s4 1966171168
    %v5040 = vunpack.c.0.s8 %v5039
    %v5041 = vlaneseq
    %v5042 = vshrl.u32 %v5041, 7
    %v5043 = vsub.s32 %v5040, %v5042
    %v5044 = vrot.slane %v4830, %v5043
    %v5045 = vcombine.high %v5044, %v5044
    %v5047 = vunpack.c.l.s4 1966171168
    %v5048 = vunpack.c.0.s8 %v5047
    %v5049 = vlaneseq
    %v5050 = vshrl.u32 %v5049, 7
    %v5051 = vsub.s32 %v5048, %v5050
    %v5052 = vrot.slane %v5044, %v5051
    %v5054 = vunpack.c.l.s4 1966171168
    %v5055 = vunpack.c.0.s8 %v5054
    %v5056 = vlaneseq
    %v5057 = vshrl.u32 %v5056, 7
    %v5058 = vsub.s32 %v5055, %v5057
    %v5059 = vrot.slane %v5045, %v5058
    %5060 = vrot.lane.b32.xlu0 %v5037, 16
    %v5061 = vpop.permute.xlu0 %5060
    %5062 = vrot.lane.b32.xlu0 %v5059, 16
    %v5063 = vpop.permute.xlu0 %5062
    %5066 = vst.msk [vmem:[#allocation4 + $0x1] sm:$0x1] %vm4889, %v5061
    %5067 = vst.msk [vmem:[#allocation4 + $0x3] sm:$0x1] %vm4889, %v5063
    %v5068 = vcombine.high %v5030, %v5030
    %v5069 = vcombine.high %v5052, %v5052
    %5070 = vrot.lane.b32.xlu0 %v5068, 32
    %v5071 = vpop.permute.xlu0 %5070
    %5072 = vrot.lane.b32.xlu0 %v5069, 32
    %v5073 = vpop.permute.xlu0 %5072
    %5076 = vst.msk [vmem:[#allocation4 + $0x1] sm:$0x1] %vm4902, %v5071
    %5077 = vst.msk [vmem:[#allocation4 + $0x3] sm:$0x1] %vm4902, %v5073
    %v5078 = vcombine.high %v5037, %v5037
    %v5079 = vcombine.high %v5059, %v5059
    %5080 = vrot.lane.b32.xlu0 %v5078, 48
    %v5081 = vpop.permute.xlu0 %5080
    %5082 = vrot.lane.b32.xlu0 %v5079, 48
    %v5083 = vpop.permute.xlu0 %5082
    %5086 = vst.msk [vmem:[#allocation4 + $0x1] sm:$0x1] %vm4915, %v5081
    %5087 = vst.msk [vmem:[#allocation4 + $0x3] sm:$0x1] %vm4915, %v5083
    %v5088 = vcombine.high %v4828, %v4828
    %v5090 = vunpack.c.l.s4 1966171168
    %v5091 = vunpack.c.0.s8 %v5090
    %v5092 = vlaneseq
    %v5093 = vshrl.u32 %v5092, 7
    %v5094 = vsub.s32 %v5091, %v5093
    %v5095 = vrot.slane %v5088, %v5094
    %v5097 = vunpack.c.l.s4 1966171168
    %v5098 = vunpack.c.0.s8 %v5097
    %v5099 = vlaneseq
    %v5100 = vshrl.u32 %v5099, 7
    %v5101 = vsub.s32 %v5098, %v5100
    %v5102 = vrot.slane %v5095, %v5101
    %v5103 = vcombine.high %v4830, %v4830
    %v5105 = vunpack.c.l.s4 1966171168
    %v5106 = vunpack.c.0.s8 %v5105
    %v5107 = vlaneseq
    %v5108 = vshrl.u32 %v5107, 7
    %v5109 = vsub.s32 %v5106, %v5108
    %v5110 = vrot.slane %v5103, %v5109
    %v5112 = vunpack.c.l.s4 1966171168
    %v5113 = vunpack.c.0.s8 %v5112
    %v5114 = vlaneseq
    %v5115 = vshrl.u32 %v5114, 7
    %v5116 = vsub.s32 %v5113, %v5115
    %v5117 = vrot.slane %v5110, %v5116
    %5118 = vrot.lane.b32.xlu0 %v5102, 64
    %v5119 = vpop.permute.xlu0 %5118
    %5120 = vrot.lane.b32.xlu0 %v5117, 64
    %v5121 = vpop.permute.xlu0 %5120
    %5124 = vst.msk [vmem:[#allocation4 + $0x1] sm:$0x1] %vm4956, %v5119
    %5125 = vst.msk [vmem:[#allocation4 + $0x3] sm:$0x1] %vm4956, %v5121
    %v5126 = vcombine.high %v5095, %v5095
    %v5128 = vunpack.c.l.s4 1966171168
    %v5129 = vunpack.c.0.s8 %v5128
    %v5130 = vlaneseq
    %v5131 = vshrl.u32 %v5130, 7
    %v5132 = vsub.s32 %v5129, %v5131
    %v5133 = vrot.slane %v5126, %v5132
    %v5134 = vcombine.high %v5110, %v5110
    %v5136 = vunpack.c.l.s4 1966171168
    %v5137 = vunpack.c.0.s8 %v5136
    %v5138 = vlaneseq
    %v5139 = vshrl.u32 %v5138, 7
    %v5140 = vsub.s32 %v5137, %v5139
    %v5141 = vrot.slane %v5134, %v5140
    %5142 = vrot.lane.b32.xlu0 %v5133, 80
    %v5143 = vpop.permute.xlu0 %5142
    %5144 = vrot.lane.b32.xlu0 %v5141, 80
    %v5145 = vpop.permute.xlu0 %5144
    %5148 = vst.msk [vmem:[#allocation4 + $0x1] sm:$0x1] %vm4983, %v5143
    %5149 = vst.msk [vmem:[#allocation4 + $0x3] sm:$0x1] %vm4983, %v5145
    %v5150 = vcombine.high %v5102, %v5102
    %v5151 = vcombine.high %v5117, %v5117
    %5152 = vrot.lane.b32.xlu0 %v5150, 96
    %v5153 = vpop.permute.xlu0 %5152
    %5154 = vrot.lane.b32.xlu0 %v5151, 96
    %v5155 = vpop.permute.xlu0 %5154
    %5158 = vst.msk [vmem:[#allocation4 + $0x1] sm:$0x1] %vm4996, %v5153
    %5159 = vst.msk [vmem:[#allocation4 + $0x3] sm:$0x1] %vm4996, %v5155
    %v5160 = vcombine.high %v5133, %v5133
    %v5161 = vcombine.high %v5141, %v5141
    %5162 = vrot.lane.b32.xlu0 %v5160, 112
    %v5163 = vpop.permute.xlu0 %5162
    %5164 = vrot.lane.b32.xlu0 %v5161, 112
    %v5165 = vpop.permute.xlu0 %5164
    %5168 = vst.msk [vmem:[#allocation4 + $0x1] sm:$0x1] %vm5009, %v5163
    %5169 = vst.msk [vmem:[#allocation4 + $0x3] sm:$0x1] %vm5009, %v5165
    %v5170 = vld [vmem:[#allocation5] sm:$0xff]
    %v5171 = vld [vmem:[#allocation5 + $0x8] sm:$0xff]
    %v5172 = vld [vmem:[#allocation5 + $0x10] sm:$0xff]
    %v5173 = vld [vmem:[#allocation5 + $0x18] sm:$0xff]
    %v5174 = vld [vmem:[#allocation5 + $0x20] sm:$0xff]
    %v5175 = vld [vmem:[#allocation5 + $0x28] sm:$0xff]
    %v5176 = vld [vmem:[#allocation5 + $0x30] sm:$0xff]
    %v5177 = vld [vmem:[#allocation5 + $0x38] sm:$0xff]
    %v5178 = vmul.f32 %v5170, %v345
    %v5179 = vmul.f32 %v5171, %v345
    %v5180 = vmul.f32 %v5172, %v350
    %v5181 = vmul.f32 %v5173, %v350
    %v5182 = vmul.f32 %v5174, %v355
    %v5183 = vmul.f32 %v5175, %v355
    %v5184 = vmul.f32 %v5176, %v360
    %v5185 = vmul.f32 %v5177, %v360
    %v5186 = vld [vmem:[#allocation4] sm:$0x3]
    %v5188 = vlaneseq
    %v5189 = vshrl.u32 %v5188, 7
    %v5190 = vsub.s32 0, %v5189
    %v5191 = vrot.slane %v5186, %v5190
    %v5192 = vlaneseq
    %v5193 = vshrl.u32 %v5192, 7
    %v5194 = vsub.s32 1, %v5193
    %v5195 = vrot.slane %v5186, %v5194
    %v5198 = vmul.f32 %v5178, %v5191
    %v5199 = vmul.f32 %v5179, %v5195
    %v5200 = vmul.f32 %v5180, %v5191
    %v5201 = vmul.f32 %v5181, %v5195
    %v5202 = vmul.f32 %v5182, %v5191
    %v5203 = vmul.f32 %v5183, %v5195
    %v5204 = vmul.f32 %v5184, %v5191
    %v5205 = vmul.f32 %v5185, %v5195
    %5206 = vst [vmem:[#allocation10] sm:$0xff] %v5198
    %5207 = vst [vmem:[#allocation10 + $0x8] sm:$0xff] %v5199
    %5208 = vst [vmem:[#allocation10 + $0x10] sm:$0xff] %v5200
    %5209 = vst [vmem:[#allocation10 + $0x18] sm:$0xff] %v5201
    %5210 = vst [vmem:[#allocation10 + $0x20] sm:$0xff] %v5202
    %5211 = vst [vmem:[#allocation10 + $0x28] sm:$0xff] %v5203
    %5212 = vst [vmem:[#allocation10 + $0x30] sm:$0xff] %v5204
    %5213 = vst [vmem:[#allocation10 + $0x38] sm:$0xff] %v5205
    %v5214 = vld [vmem:[%s76] sm:$0xff]
    %v5215 = vld [vmem:[%s76 + $0x8] sm:$0xff]
    %v5216 = vld [vmem:[%s76 + $0x10] sm:$0xff]
    %v5217 = vld [vmem:[%s76 + $0x18] sm:$0xff]
    %v5218 = vld [vmem:[%s76 + $0x20] sm:$0xff]
    %v5219 = vld [vmem:[%s76 + $0x28] sm:$0xff]
    %v5220 = vld [vmem:[%s76 + $0x30] sm:$0xff]
    %v5221 = vld [vmem:[%s76 + $0x38] sm:$0xff]
    %v5222 = vmul.f32 %v5214, %v462
    %v5223 = vmul.f32 %v5215, %v462
    %v5224 = vmul.f32 %v5216, %v466
    %v5225 = vmul.f32 %v5217, %v466
    %v5226 = vmul.f32 %v5218, %v470
    %v5227 = vmul.f32 %v5219, %v470
    %v5228 = vmul.f32 %v5220, %v474
    %v5229 = vmul.f32 %v5221, %v474
    %s5230 = scalar_lea.vmem [#allocation4], 2
    %v5231 = vld [vmem:[%s5230] sm:$0x3]
    %v5233 = vlaneseq
    %v5234 = vshrl.u32 %v5233, 7
    %v5235 = vsub.s32 0, %v5234
    %v5236 = vrot.slane %v5231, %v5235
    %v5237 = vlaneseq
    %v5238 = vshrl.u32 %v5237, 7
    %v5239 = vsub.s32 1, %v5238
    %v5240 = vrot.slane %v5231, %v5239
    %v5243 = vmul.f32 %v5222, %v5236
    %v5244 = vmul.f32 %v5223, %v5240
    %v5245 = vmul.f32 %v5224, %v5236
    %v5246 = vmul.f32 %v5225, %v5240
    %v5247 = vmul.f32 %v5226, %v5236
    %v5248 = vmul.f32 %v5227, %v5240
    %v5249 = vmul.f32 %v5228, %v5236
    %v5250 = vmul.f32 %v5229, %v5240
    %s5251 = scalar_lea.vmem [#allocation10], 64
    %5252 = vst [vmem:[%s5251] sm:$0xff] %v5243
    %5253 = vst [vmem:[%s5251 + $0x8] sm:$0xff] %v5244
    %5254 = vst [vmem:[%s5251 + $0x10] sm:$0xff] %v5245
    %5255 = vst [vmem:[%s5251 + $0x18] sm:$0xff] %v5246
    %5256 = vst [vmem:[%s5251 + $0x20] sm:$0xff] %v5247
    %5257 = vst [vmem:[%s5251 + $0x28] sm:$0xff] %v5248
    %5258 = vst [vmem:[%s5251 + $0x30] sm:$0xff] %v5249
    %5259 = vst [vmem:[%s5251 + $0x38] sm:$0xff] %v5250
    // Predicated region
    $region34: #{tpu_custom_call.1} parent=1 // pred_check
      _
    $region35: #{tpu_custom_call.1} parent=1 // pred_check_branch
      %5261 = sbr.rel (0) target = $region37
    $region36: #{tpu_custom_call.1} parent=1 // pred_region
      %s5263 = ssub.s32 2048, 2048
      %5264 = vsyncadd [#allocation7], %s5263
      %s5265 = sshll.u32 [#allocation10], 4
      %s5266 = int_to_ptr.vmem [resolvable:$true] %s5265
      %5271 = dma.vmem_to_hbm [thread:$0]  %s5266, 2048, %s6, [#allocation7], 256, 256, 16
    $region37: #{tpu_custom_call.1} parent=1 // pred_fallthru
      _
    // Predicated region
    $region38: #{tpu_custom_call.1} parent=1 // pred_check
      _
    $region39: #{tpu_custom_call.1} parent=1 // pred_check_branch
      %5273 = sbr.rel (0) target = $region41
    $region40: #{tpu_custom_call.1} parent=1 // pred_region
      %5274 = dma.done [#allocation7], 2048
    $region41: #{tpu_custom_call.1} parent=1 // pred_fallthru
      _
    %5275 = vsyncpa [#allocation6], 1
    %5276 = vsyncpa [#allocation7], 1
    %5277 = vsyncpa [#allocation8], 1

</llo_original>
